<compile_context>
chip_gen: v5e
topology: v5e:2x2
jax: 0.10.0
libtpu: 0.0.40
codegen_flags: <defaults>
</compile_context>

<pallas_src>
import jax
import jax.numpy as jnp
from jax.experimental import pallas as pl
from jax.experimental.pallas import tpu as pltpu


# ---------------------------------------------------------------------------
# Fused forward kernel: the whole network for B samples per grid step.
# All activations are 2-D: rows = (sample, padded-height), lanes = (width, ch).
# ---------------------------------------------------------------------------
def _netd_kernel(xc_ref, a1_ref, b1_ref, r1_ref, a2_ref, b2_ref, r2_ref,
                 a3_ref, b3_ref, wf1_ref, bf1_ref, wf2_ref, bf2_ref,
                 rs_ref, out_ref):
    f32 = jnp.float32
    md = a1_ref.dtype                     # MXU operand dtype (f32 or bf16)

    def band(p, a_ref, rows):
        # y[r, :] = sum_ki p[r + ki, :] @ A[ki]   (banded conv as matmuls)
        pm = p.astype(md)
        acc = jnp.dot(pm[0:rows, :], a_ref[0], preferred_element_type=f32)
        for ki in range(1, a_ref.shape[0]):
            acc = acc + jnp.dot(pm[ki:ki + rows, :], a_ref[ki],
                                preferred_element_type=f32)
        return acc

    def pool_max4(y, cgrp, wml):
        # 2x2 window max.  Width stride-2 pick is folded into the next conv's
        # weights; height stride-2 pick is the block-diag selector matmul next.
        t = y.shape[0]
        top = jnp.maximum(y[0:t - 1, 0:wml], y[0:t - 1, cgrp:cgrp + wml])
        bot = jnp.maximum(y[1:t,     0:wml], y[1:t,     cgrp:cgrp + wml])
        return jnp.maximum(top, bot)

    rows2 = r1_ref.shape[0] - 8           # B*16
    rows3 = r2_ref.shape[0] - 8           # B*8

    # conv1 (1->6, 5x5, pad 2) + ReLU : one deep-K matmul, M = B*32, K = 160.
    y1 = jnp.maximum(
        jnp.dot(xc_ref[...], a1_ref[...], preferred_element_type=f32)
        + b1_ref[...], 0.0)                                       # (B*32, 168)

    # pool1 (2x2 / 2): VPU max + block-diag row-select matmul.
    p1 = jnp.dot(r1_ref[...], pool_max4(y1, 6, 162),
                 preferred_element_type=f32)                      # (B*16+8,162)

    # conv2 (6->16, 5x5) + ReLU : banded, K = 162 per tap, M = B*16.
    y2 = jnp.maximum(band(p1, a2_ref, rows2) + b2_ref[...], 0.0)  # (B*16, 160)

    # pool2 (2x2 / 2)
    p2 = jnp.dot(r2_ref[...], pool_max4(y2, 16, 144),
                 preferred_element_type=f32)                      # (B*8+8, 144)

    # conv3 (16->120, 5x5) + ReLU : banded, K = 144 per tap, M = B*8.
    z = jnp.maximum(band(p2, a3_ref, rows3) + b3_ref[...], 0.0)   # (B*8, 120)

    # fc1 -> Dropout(p=0.8) (identity at inference) -> ReLU
    # TODO(synk): training-mode Dropout(p=0.8) (pltpu.prng_*) not implemented.
    h = jnp.maximum(
        jnp.dot(z.astype(md), wf1_ref[...], preferred_element_type=f32)
        + bf1_ref[...], 0.0)                                      # (B*8, 84)

    # fc2; pick the one valid row per sample; single lane store per block.
    logits = (jnp.dot(h.astype(md), wf2_ref[...], preferred_element_type=f32)
              + bf2_ref[...])                                     # (B*8, 10)
    out_ref[...] = jnp.dot(rs_ref[...], logits, preferred_element_type=f32)


# ---------------------------------------------------------------------------
# Wrapper-side weight / constant preparation (pure JAX on params, tiny)
# ---------------------------------------------------------------------------
def _conv_band_matrices(w, win, wout):
    """w: (Cout, Cin, KH, KW) -> A: (KH, win*Cin, wout*Cout) with
       A[ki, wi*Cin+ci, wo*Cout+co] = w[co, ci, ki, wi-wo] if 0<=wi-wo<KW."""
    cout, cin, kh, kw = w.shape
    wi = jnp.arange(win)[:, None]
    wo = jnp.arange(wout)[None, :]
    kj = wi - wo
    valid = (kj >= 0) & (kj < kw)
    kj_c = jnp.clip(kj, 0, kw - 1)
    g = w[:, :, :, kj_c]                              # (cout, cin, kh, win, wout)
    g = jnp.where(valid[None, None, None, :, :], g, 0.0)
    a = jnp.transpose(g, (2, 3, 1, 4, 0))             # (kh, win, cin, wout, cout)
    return a.reshape(kh, win * cin, wout * cout)


def _pool_col_selector(m, cgrp):
    """(m*cgrp, ((m+1)//2)*cgrp) 0/1 matrix: width stride-2 pick (lane axis)."""
    rows = jnp.arange(m * cgrp)
    cols = jnp.arange(((m + 1) // 2) * cgrp)
    return ((rows[:, None] // cgrp == 2 * (cols[None, :] // cgrp))
            & (rows[:, None] % cgrp == cols[None, :] % cgrp)).astype(jnp.float32)


def _row_select_block(nblk, r_in, r_out, h_valid, extra=8):
    """Block-diagonal 0/1 matrix (nblk*r_out+extra, nblk*r_in-1): output row
       b*r_out+h picks input row b*r_in+2h for h < h_valid; rest zero."""
    i = jnp.arange(nblk * r_out + extra)
    b = i // r_out
    h = i % r_out
    src = b * r_in + 2 * h
    valid = (h < h_valid) & (b < nblk)
    j = jnp.arange(nblk * r_in - 1)
    return ((j[None, :] == src[:, None]) & valid[:, None]).astype(jnp.float32)


def netd_forward(x_nchw, params, *, block_b=8, mxu_dtype=jnp.float32):
    assert block_b % 8 == 0 and block_b >= 8
    n = x_nchw.shape[0]
    nblk = pl.cdiv(n, block_b)
    n_pad = nblk * block_b
    bsz = block_b
    f32 = jnp.float32

    # Input prep: pad to 32x32 (+4 tap rows), height-tap concat -> K = 5*32.
    xp = jnp.pad(x_nchw[:, 0].astype(f32),
                 ((0, n_pad - n), (2, 6), (2, 2)))               # (n_pad, 36, 32)
    xcat = jnp.concatenate([xp[:, ki:ki + 32, :] for ki in range(5)], axis=-1)
    xcat = xcat.reshape(n_pad * 32, 160).astype(mxu_dtype)       # (n_pad*32, 160)

    # Weights: banded conv matrices, pool column selectors folded into them.
    a1 = _conv_band_matrices(params["w1"], 32, 28).reshape(160, 168)
    c1 = _pool_col_selector(27, 6)                               # (162, 84)
    a2 = jnp.einsum("rc,kcn->krn", c1,
                    _conv_band_matrices(params["w2"], 14, 10))   # (5, 162, 160)
    c2 = _pool_col_selector(9, 16)                               # (144, 80)
    a3 = jnp.einsum("rc,kcn->krn", c2,
                    _conv_band_matrices(params["w3"], 5, 1))     # (5, 144, 120)
    a1, a2, a3 = (a1.astype(mxu_dtype), a2.astype(mxu_dtype), a3.astype(mxu_dtype))
    b1t = jnp.tile(params["b1"], 28)[None, :].astype(f32)        # (1, 168)
    b2t = jnp.tile(params["b2"], 10)[None, :].astype(f32)        # (1, 160)
    b3 = params["b3"][None, :].astype(f32)                       # (1, 120)
    wf1 = params["wf1"].astype(mxu_dtype)
    wf2 = params["wf2"].astype(mxu_dtype)
    bf1 = params["bf1"][None, :].astype(f32)
    bf2 = params["bf2"][None, :].astype(f32)
    r1 = _row_select_block(bsz, 32, 16, 14)                      # (B*16+8, B*32-1)
    r2 = _row_select_block(bsz, 16, 8, 5)                        # (B*8+8,  B*16-1)
    rsel = (jnp.arange(bsz * 8)[None, :]
            == 8 * jnp.arange(bsz)[:, None]).astype(f32)         # (B, B*8)

    def _const(a):
        r = a.ndim
        return pl.BlockSpec(a.shape, lambda i, r=r: (0,) * r)

    operands = (xcat, a1, b1t, r1, a2, b2t, r2, a3, b3, wf1, bf1, wf2, bf2, rsel)
    in_specs = [pl.BlockSpec((bsz * 32, 160), lambda i: (i, 0))] + \
               [_const(a) for a in operands[1:]]

    flops = int(2 * 416_520 * n_pad)                             # useful MACs * 2
    bytes_accessed = int(sum(a.size * a.dtype.itemsize for a in operands)
                         + n_pad * 10 * 4)

    out = pl.pallas_call(
        _netd_kernel,
        out_shape=jax.ShapeDtypeStruct((n_pad, 10), jnp.float32),
        grid=(nblk,),
        in_specs=in_specs,
        out_specs=pl.BlockSpec((bsz, 10), lambda i: (i, 0)),
        compiler_params=pltpu.CompilerParams(
            dimension_semantics=("parallel",)),
        cost_estimate=pl.CostEstimate(flops=flops, transcendentals=0,
                                      bytes_accessed=bytes_accessed),
    )(*operands)
    return out[:n]


# ---------------------------------------------------------------------------
# Deterministic parameter init (PyTorch-style uniform(-1/sqrt(fan_in), ...))
# ---------------------------------------------------------------------------
def init_params(key):
    def u(k, shape, fan_in):
        bound = 1.0 / jnp.sqrt(float(fan_in))
        return jax.random.uniform(k, shape, jnp.float32, -bound, bound)

    ks = jax.random.split(key, 10)
    return {
        "w1": u(ks[0], (6, 1, 5, 5), 1 * 5 * 5),
        "b1": u(ks[1], (6,), 1 * 5 * 5),
        "w2": u(ks[2], (16, 6, 5, 5), 6 * 5 * 5),
        "b2": u(ks[3], (16,), 6 * 5 * 5),
        "w3": u(ks[4], (120, 16, 5, 5), 16 * 5 * 5),
        "b3": u(ks[5], (120,), 16 * 5 * 5),
        "wf1": u(ks[6], (120, 84), 120),   # stored (in, out); torch Linear is (out, in)
        "bf1": u(ks[7], (84,), 120),
        "wf2": u(ks[8], (84, 10), 84),
        "bf2": u(ks[9], (10,), 84),
    }


# ---------------------------------------------------------------------------
# Pure-JAX reference (sanity check)
# ---------------------------------------------------------------------------
def netd_reference(x_nchw, p):
    def conv(x, w, b, pad):
        y = jax.lax.conv_general_dilated(
            x, w, (1, 1), [(pad, pad), (pad, pad)],
            dimension_numbers=("NCHW", "OIHW", "NCHW"))
        return jax.nn.relu(y + b[None, :, None, None])

    def pool(x):
        n, c, h, w = x.shape
        return x.reshape(n, c, h // 2, 2, w // 2, 2).max(axis=(3, 5))

    x = conv(x_nchw, p["w1"], p["b1"], 2)
    x = pool(x)
    x = conv(x, p["w2"], p["b2"], 0)
    x = pool(x)
    x = conv(x, p["w3"], p["b3"], 0)
    x = x.reshape(x.shape[0], -1)
    x = jax.nn.relu(x @ p["wf1"] + p["bf1"])
    return x @ p["wf2"] + p["bf2"]


if __name__ == "__main__":
    key = jax.random.PRNGKey(0)
    k_param, k_x = jax.random.split(key)
    params = init_params(k_param)

    # MNIST-like input implied by the architecture: 28x28, single channel.
    # Batch 10 exercises both padding (-> 16) and a 2-step "parallel" grid.
    x = jax.random.normal(k_x, (10, 1, 28, 28), jnp.float32)

    fwd_f32 = jax.jit(lambda xv, p: netd_forward(xv, p, block_b=8))
    out = jax.block_until_ready(fwd_f32(x, params))
    assert out.shape == (10, 10), out.shape

    ref = netd_reference(x, params)
    err = float(jnp.max(jnp.abs(out - ref)))
    assert jnp.allclose(out, ref, rtol=1e-3, atol=2e-3), err

    # bf16 MXU-operand path (f32 accumulation) — v6e/v7x throughput option.
    fwd_bf16 = jax.jit(lambda xv, p: netd_forward(xv, p, block_b=8,
                                                  mxu_dtype=jnp.bfloat16))
    out_bf16 = jax.block_until_ready(fwd_bf16(x, params))
    err_bf16 = float(jnp.max(jnp.abs(out_bf16 - ref)))
    assert err_bf16 < 5e-2, err_bf16

    print("KERNEL_OK")
</pallas_src>

<mosaic_0001>
module attributes {stable_mosaic.version = 11 : i64} {
  func.func @_netd_kernel(%arg0: i32, %arg1: memref<256x160xf32, #tpu.memory_space<vmem>>, %arg2: memref<160x168xf32, #tpu.memory_space<vmem>>, %arg3: memref<1x168xf32, #tpu.memory_space<vmem>>, %arg4: memref<136x255xf32, #tpu.memory_space<vmem>>, %arg5: memref<5x162x160xf32, #tpu.memory_space<vmem>>, %arg6: memref<1x160xf32, #tpu.memory_space<vmem>>, %arg7: memref<72x127xf32, #tpu.memory_space<vmem>>, %arg8: memref<5x144x120xf32, #tpu.memory_space<vmem>>, %arg9: memref<1x120xf32, #tpu.memory_space<vmem>>, %arg10: memref<120x84xf32, #tpu.memory_space<vmem>>, %arg11: memref<1x84xf32, #tpu.memory_space<vmem>>, %arg12: memref<84x10xf32, #tpu.memory_space<vmem>>, %arg13: memref<1x10xf32, #tpu.memory_space<vmem>>, %arg14: memref<8x64xf32, #tpu.memory_space<vmem>>, %arg15: memref<8x10xf32, #tpu.memory_space<vmem>>) attributes {dimension_semantics = [#tpu.dimension_semantics<parallel>], iteration_bounds = array<i64: 2>, scalar_prefetch = 0 : i64, scratch_operands = 0 : i64, tpu.core_type = #tpu.core_type<tc>, window_params = [{transform_indices = @transform_0, window_bounds = array<i64: 256, 160>}, {pipeline_mode = #tpu.pipeline_mode<synchronous>, transform_indices = @transform_1, window_bounds = array<i64: 160, 168>}, {pipeline_mode = #tpu.pipeline_mode<synchronous>, transform_indices = @transform_2, window_bounds = array<i64: 1, 168>}, {pipeline_mode = #tpu.pipeline_mode<synchronous>, transform_indices = @transform_3, window_bounds = array<i64: 136, 255>}, {pipeline_mode = #tpu.pipeline_mode<synchronous>, transform_indices = @transform_4, window_bounds = array<i64: 5, 162, 160>}, {pipeline_mode = #tpu.pipeline_mode<synchronous>, transform_indices = @transform_5, window_bounds = array<i64: 1, 160>}, {pipeline_mode = #tpu.pipeline_mode<synchronous>, transform_indices = @transform_6, window_bounds = array<i64: 72, 127>}, {pipeline_mode = #tpu.pipeline_mode<synchronous>, transform_indices = @transform_7, window_bounds = array<i64: 5, 144, 120>}, {pipeline_mode = #tpu.pipeline_mode<synchronous>, transform_indices = @transform_8, window_bounds = array<i64: 1, 120>}, {pipeline_mode = #tpu.pipeline_mode<synchronous>, transform_indices = @transform_9, window_bounds = array<i64: 120, 84>}, {pipeline_mode = #tpu.pipeline_mode<synchronous>, transform_indices = @transform_10, window_bounds = array<i64: 1, 84>}, {pipeline_mode = #tpu.pipeline_mode<synchronous>, transform_indices = @transform_11, window_bounds = array<i64: 84, 10>}, {pipeline_mode = #tpu.pipeline_mode<synchronous>, transform_indices = @transform_12, window_bounds = array<i64: 1, 10>}, {pipeline_mode = #tpu.pipeline_mode<synchronous>, transform_indices = @transform_13, window_bounds = array<i64: 8, 64>}, {transform_indices = @transform_14, window_bounds = array<i64: 8, 10>}]} {
    %c0 = arith.constant 0 : index
    %c0_0 = arith.constant 0 : index
    %0 = vector.load %arg1[%c0, %c0_0] : memref<256x160xf32, #tpu.memory_space<vmem>>, vector<256x160xf32>
    %c0_1 = arith.constant 0 : index
    %c0_2 = arith.constant 0 : index
    %1 = vector.load %arg2[%c0_1, %c0_2] : memref<160x168xf32, #tpu.memory_space<vmem>>, vector<160x168xf32>
    %cst = arith.constant dense<0.000000e+00> : vector<256x168xf32>
    %2 = tpu.matmul %0, %1, %cst {dimension_numbers = #tpu.dot_dimension_numbers<[1], [0], [0], [1], [0, 0, 1, 1], [], []>} : vector<256x160xf32>, vector<160x168xf32>, vector<256x168xf32> -> vector<256x168xf32>
    %c0_3 = arith.constant 0 : index
    %c0_4 = arith.constant 0 : index
    %3 = vector.load %arg3[%c0_3, %c0_4] : memref<1x168xf32, #tpu.memory_space<vmem>>, vector<1x168xf32>
    %4 = vector.broadcast %3 : vector<1x168xf32> to vector<256x168xf32>
    %5 = arith.addf %2, %4 : vector<256x168xf32>
    %cst_5 = arith.constant 0.000000e+00 : f32
    %6 = vector.broadcast %cst_5 : f32 to vector<256x168xf32>
    %7 = arith.maximumf %5, %6 : vector<256x168xf32>
    %c0_6 = arith.constant 0 : index
    %c0_7 = arith.constant 0 : index
    %8 = vector.load %arg4[%c0_6, %c0_7] : memref<136x255xf32, #tpu.memory_space<vmem>>, vector<136x255xf32>
    %9 = vector.extract_strided_slice %7 {offsets = [0, 0], sizes = [255, 162], strides = [1, 1]} : vector<256x168xf32> to vector<255x162xf32>
    %10 = vector.extract_strided_slice %7 {offsets = [0, 6], sizes = [255, 162], strides = [1, 1]} : vector<256x168xf32> to vector<255x162xf32>
    %11 = arith.maximumf %9, %10 : vector<255x162xf32>
    %12 = vector.extract_strided_slice %7 {offsets = [1, 0], sizes = [255, 162], strides = [1, 1]} : vector<256x168xf32> to vector<255x162xf32>
    %13 = vector.extract_strided_slice %7 {offsets = [1, 6], sizes = [255, 162], strides = [1, 1]} : vector<256x168xf32> to vector<255x162xf32>
    %14 = arith.maximumf %12, %13 : vector<255x162xf32>
    %15 = arith.maximumf %11, %14 : vector<255x162xf32>
    %cst_8 = arith.constant dense<0.000000e+00> : vector<136x162xf32>
    %16 = tpu.matmul %8, %15, %cst_8 {dimension_numbers = #tpu.dot_dimension_numbers<[1], [0], [0], [1], [0, 0, 1, 1], [], []>} : vector<136x255xf32>, vector<255x162xf32>, vector<136x162xf32> -> vector<136x162xf32>
    %17 = vector.extract_strided_slice %16 {offsets = [0, 0], sizes = [128, 162], strides = [1, 1]} : vector<136x162xf32> to vector<128x162xf32>
    %c0_9 = arith.constant 0 : index
    %c0_10 = arith.constant 0 : index
    %c0_11 = arith.constant 0 : index
    %18 = vector.load %arg5[%c0_9, %c0_10, %c0_11] : memref<5x162x160xf32, #tpu.memory_space<vmem>>, vector<1x162x160xf32>
    %19 = vector.shape_cast %18 : vector<1x162x160xf32> to vector<162x160xf32>
    %cst_12 = arith.constant dense<0.000000e+00> : vector<128x160xf32>
    %20 = tpu.matmul %17, %19, %cst_12 {dimension_numbers = #tpu.dot_dimension_numbers<[1], [0], [0], [1], [0, 0, 1, 1], [], []>} : vector<128x162xf32>, vector<162x160xf32>, vector<128x160xf32> -> vector<128x160xf32>
    %21 = vector.extract_strided_slice %16 {offsets = [1, 0], sizes = [128, 162], strides = [1, 1]} : vector<136x162xf32> to vector<128x162xf32>
    %c1 = arith.constant 1 : index
    %c0_13 = arith.constant 0 : index
    %c0_14 = arith.constant 0 : index
    %22 = vector.load %arg5[%c1, %c0_13, %c0_14] : memref<5x162x160xf32, #tpu.memory_space<vmem>>, vector<1x162x160xf32>
    %23 = vector.shape_cast %22 : vector<1x162x160xf32> to vector<162x160xf32>
    %cst_15 = arith.constant dense<0.000000e+00> : vector<128x160xf32>
    %24 = tpu.matmul %21, %23, %cst_15 {dimension_numbers = #tpu.dot_dimension_numbers<[1], [0], [0], [1], [0, 0, 1, 1], [], []>} : vector<128x162xf32>, vector<162x160xf32>, vector<128x160xf32> -> vector<128x160xf32>
    %25 = arith.addf %20, %24 : vector<128x160xf32>
    %26 = vector.extract_strided_slice %16 {offsets = [2, 0], sizes = [128, 162], strides = [1, 1]} : vector<136x162xf32> to vector<128x162xf32>
    %c2 = arith.constant 2 : index
    %c0_16 = arith.constant 0 : index
    %c0_17 = arith.constant 0 : index
    %27 = vector.load %arg5[%c2, %c0_16, %c0_17] : memref<5x162x160xf32, #tpu.memory_space<vmem>>, vector<1x162x160xf32>
    %28 = vector.shape_cast %27 : vector<1x162x160xf32> to vector<162x160xf32>
    %cst_18 = arith.constant dense<0.000000e+00> : vector<128x160xf32>
    %29 = tpu.matmul %26, %28, %cst_18 {dimension_numbers = #tpu.dot_dimension_numbers<[1], [0], [0], [1], [0, 0, 1, 1], [], []>} : vector<128x162xf32>, vector<162x160xf32>, vector<128x160xf32> -> vector<128x160xf32>
    %30 = arith.addf %25, %29 : vector<128x160xf32>
    %31 = vector.extract_strided_slice %16 {offsets = [3, 0], sizes = [128, 162], strides = [1, 1]} : vector<136x162xf32> to vector<128x162xf32>
    %c3 = arith.constant 3 : index
    %c0_19 = arith.constant 0 : index
    %c0_20 = arith.constant 0 : index
    %32 = vector.load %arg5[%c3, %c0_19, %c0_20] : memref<5x162x160xf32, #tpu.memory_space<vmem>>, vector<1x162x160xf32>
    %33 = vector.shape_cast %32 : vector<1x162x160xf32> to vector<162x160xf32>
    %cst_21 = arith.constant dense<0.000000e+00> : vector<128x160xf32>
    %34 = tpu.matmul %31, %33, %cst_21 {dimension_numbers = #tpu.dot_dimension_numbers<[1], [0], [0], [1], [0, 0, 1, 1], [], []>} : vector<128x162xf32>, vector<162x160xf32>, vector<128x160xf32> -> vector<128x160xf32>
    %35 = arith.addf %30, %34 : vector<128x160xf32>
    %36 = vector.extract_strided_slice %16 {offsets = [4, 0], sizes = [128, 162], strides = [1, 1]} : vector<136x162xf32> to vector<128x162xf32>
    %c4 = arith.constant 4 : index
    %c0_22 = arith.constant 0 : index
    %c0_23 = arith.constant 0 : index
    %37 = vector.load %arg5[%c4, %c0_22, %c0_23] : memref<5x162x160xf32, #tpu.memory_space<vmem>>, vector<1x162x160xf32>
    %38 = vector.shape_cast %37 : vector<1x162x160xf32> to vector<162x160xf32>
    %cst_24 = arith.constant dense<0.000000e+00> : vector<128x160xf32>
    %39 = tpu.matmul %36, %38, %cst_24 {dimension_numbers = #tpu.dot_dimension_numbers<[1], [0], [0], [1], [0, 0, 1, 1], [], []>} : vector<128x162xf32>, vector<162x160xf32>, vector<128x160xf32> -> vector<128x160xf32>
    %40 = arith.addf %35, %39 : vector<128x160xf32>
    %c0_25 = arith.constant 0 : index
    %c0_26 = arith.constant 0 : index
    %41 = vector.load %arg6[%c0_25, %c0_26] : memref<1x160xf32, #tpu.memory_space<vmem>>, vector<1x160xf32>
    %42 = vector.broadcast %41 : vector<1x160xf32> to vector<128x160xf32>
    %43 = arith.addf %40, %42 : vector<128x160xf32>
    %cst_27 = arith.constant 0.000000e+00 : f32
    %44 = vector.broadcast %cst_27 : f32 to vector<128x160xf32>
    %45 = arith.maximumf %43, %44 : vector<128x160xf32>
    %c0_28 = arith.constant 0 : index
    %c0_29 = arith.constant 0 : index
    %46 = vector.load %arg7[%c0_28, %c0_29] : memref<72x127xf32, #tpu.memory_space<vmem>>, vector<72x127xf32>
    %47 = vector.extract_strided_slice %45 {offsets = [0, 0], sizes = [127, 144], strides = [1, 1]} : vector<128x160xf32> to vector<127x144xf32>
    %48 = vector.extract_strided_slice %45 {offsets = [0, 16], sizes = [127, 144], strides = [1, 1]} : vector<128x160xf32> to vector<127x144xf32>
    %49 = arith.maximumf %47, %48 : vector<127x144xf32>
    %50 = vector.extract_strided_slice %45 {offsets = [1, 0], sizes = [127, 144], strides = [1, 1]} : vector<128x160xf32> to vector<127x144xf32>
    %51 = vector.extract_strided_slice %45 {offsets = [1, 16], sizes = [127, 144], strides = [1, 1]} : vector<128x160xf32> to vector<127x144xf32>
    %52 = arith.maximumf %50, %51 : vector<127x144xf32>
    %53 = arith.maximumf %49, %52 : vector<127x144xf32>
    %cst_30 = arith.constant dense<0.000000e+00> : vector<72x144xf32>
    %54 = tpu.matmul %46, %53, %cst_30 {dimension_numbers = #tpu.dot_dimension_numbers<[1], [0], [0], [1], [0, 0, 1, 1], [], []>} : vector<72x127xf32>, vector<127x144xf32>, vector<72x144xf32> -> vector<72x144xf32>
    %55 = vector.extract_strided_slice %54 {offsets = [0, 0], sizes = [64, 144], strides = [1, 1]} : vector<72x144xf32> to vector<64x144xf32>
    %c0_31 = arith.constant 0 : index
    %c0_32 = arith.constant 0 : index
    %c0_33 = arith.constant 0 : index
    %56 = vector.load %arg8[%c0_31, %c0_32, %c0_33] : memref<5x144x120xf32, #tpu.memory_space<vmem>>, vector<1x144x120xf32>
    %57 = vector.shape_cast %56 : vector<1x144x120xf32> to vector<144x120xf32>
    %cst_34 = arith.constant dense<0.000000e+00> : vector<64x120xf32>
    %58 = tpu.matmul %55, %57, %cst_34 {dimension_numbers = #tpu.dot_dimension_numbers<[1], [0], [0], [1], [0, 0, 1, 1], [], []>} : vector<64x144xf32>, vector<144x120xf32>, vector<64x120xf32> -> vector<64x120xf32>
    %59 = vector.extract_strided_slice %54 {offsets = [1, 0], sizes = [64, 144], strides = [1, 1]} : vector<72x144xf32> to vector<64x144xf32>
    %c1_35 = arith.constant 1 : index
    %c0_36 = arith.constant 0 : index
    %c0_37 = arith.constant 0 : index
    %60 = vector.load %arg8[%c1_35, %c0_36, %c0_37] : memref<5x144x120xf32, #tpu.memory_space<vmem>>, vector<1x144x120xf32>
    %61 = vector.shape_cast %60 : vector<1x144x120xf32> to vector<144x120xf32>
    %cst_38 = arith.constant dense<0.000000e+00> : vector<64x120xf32>
    %62 = tpu.matmul %59, %61, %cst_38 {dimension_numbers = #tpu.dot_dimension_numbers<[1], [0], [0], [1], [0, 0, 1, 1], [], []>} : vector<64x144xf32>, vector<144x120xf32>, vector<64x120xf32> -> vector<64x120xf32>
    %63 = arith.addf %58, %62 : vector<64x120xf32>
    %64 = vector.extract_strided_slice %54 {offsets = [2, 0], sizes = [64, 144], strides = [1, 1]} : vector<72x144xf32> to vector<64x144xf32>
    %c2_39 = arith.constant 2 : index
    %c0_40 = arith.constant 0 : index
    %c0_41 = arith.constant 0 : index
    %65 = vector.load %arg8[%c2_39, %c0_40, %c0_41] : memref<5x144x120xf32, #tpu.memory_space<vmem>>, vector<1x144x120xf32>
    %66 = vector.shape_cast %65 : vector<1x144x120xf32> to vector<144x120xf32>
    %cst_42 = arith.constant dense<0.000000e+00> : vector<64x120xf32>
    %67 = tpu.matmul %64, %66, %cst_42 {dimension_numbers = #tpu.dot_dimension_numbers<[1], [0], [0], [1], [0, 0, 1, 1], [], []>} : vector<64x144xf32>, vector<144x120xf32>, vector<64x120xf32> -> vector<64x120xf32>
    %68 = arith.addf %63, %67 : vector<64x120xf32>
    %69 = vector.extract_strided_slice %54 {offsets = [3, 0], sizes = [64, 144], strides = [1, 1]} : vector<72x144xf32> to vector<64x144xf32>
    %c3_43 = arith.constant 3 : index
    %c0_44 = arith.constant 0 : index
    %c0_45 = arith.constant 0 : index
    %70 = vector.load %arg8[%c3_43, %c0_44, %c0_45] : memref<5x144x120xf32, #tpu.memory_space<vmem>>, vector<1x144x120xf32>
    %71 = vector.shape_cast %70 : vector<1x144x120xf32> to vector<144x120xf32>
    %cst_46 = arith.constant dense<0.000000e+00> : vector<64x120xf32>
    %72 = tpu.matmul %69, %71, %cst_46 {dimension_numbers = #tpu.dot_dimension_numbers<[1], [0], [0], [1], [0, 0, 1, 1], [], []>} : vector<64x144xf32>, vector<144x120xf32>, vector<64x120xf32> -> vector<64x120xf32>
    %73 = arith.addf %68, %72 : vector<64x120xf32>
    %74 = vector.extract_strided_slice %54 {offsets = [4, 0], sizes = [64, 144], strides = [1, 1]} : vector<72x144xf32> to vector<64x144xf32>
    %c4_47 = arith.constant 4 : index
    %c0_48 = arith.constant 0 : index
    %c0_49 = arith.constant 0 : index
    %75 = vector.load %arg8[%c4_47, %c0_48, %c0_49] : memref<5x144x120xf32, #tpu.memory_space<vmem>>, vector<1x144x120xf32>
    %76 = vector.shape_cast %75 : vector<1x144x120xf32> to vector<144x120xf32>
    %cst_50 = arith.constant dense<0.000000e+00> : vector<64x120xf32>
    %77 = tpu.matmul %74, %76, %cst_50 {dimension_numbers = #tpu.dot_dimension_numbers<[1], [0], [0], [1], [0, 0, 1, 1], [], []>} : vector<64x144xf32>, vector<144x120xf32>, vector<64x120xf32> -> vector<64x120xf32>
    %78 = arith.addf %73, %77 : vector<64x120xf32>
    %c0_51 = arith.constant 0 : index
    %c0_52 = arith.constant 0 : index
    %79 = vector.load %arg9[%c0_51, %c0_52] : memref<1x120xf32, #tpu.memory_space<vmem>>, vector<1x120xf32>
    %80 = vector.broadcast %79 : vector<1x120xf32> to vector<64x120xf32>
    %81 = arith.addf %78, %80 : vector<64x120xf32>
    %cst_53 = arith.constant 0.000000e+00 : f32
    %82 = vector.broadcast %cst_53 : f32 to vector<64x120xf32>
    %83 = arith.maximumf %81, %82 : vector<64x120xf32>
    %c0_54 = arith.constant 0 : index
    %c0_55 = arith.constant 0 : index
    %84 = vector.load %arg10[%c0_54, %c0_55] : memref<120x84xf32, #tpu.memory_space<vmem>>, vector<120x84xf32>
    %cst_56 = arith.constant dense<0.000000e+00> : vector<64x84xf32>
    %85 = tpu.matmul %83, %84, %cst_56 {dimension_numbers = #tpu.dot_dimension_numbers<[1], [0], [0], [1], [0, 0, 1, 1], [], []>} : vector<64x120xf32>, vector<120x84xf32>, vector<64x84xf32> -> vector<64x84xf32>
    %c0_57 = arith.constant 0 : index
    %c0_58 = arith.constant 0 : index
    %86 = vector.load %arg11[%c0_57, %c0_58] : memref<1x84xf32, #tpu.memory_space<vmem>>, vector<1x84xf32>
    %87 = vector.broadcast %86 : vector<1x84xf32> to vector<64x84xf32>
    %88 = arith.addf %85, %87 : vector<64x84xf32>
    %cst_59 = arith.constant 0.000000e+00 : f32
    %89 = vector.broadcast %cst_59 : f32 to vector<64x84xf32>
    %90 = arith.maximumf %88, %89 : vector<64x84xf32>
    %c0_60 = arith.constant 0 : index
    %c0_61 = arith.constant 0 : index
    %91 = vector.load %arg12[%c0_60, %c0_61] : memref<84x10xf32, #tpu.memory_space<vmem>>, vector<84x10xf32>
    %cst_62 = arith.constant dense<0.000000e+00> : vector<64x10xf32>
    %92 = tpu.matmul %90, %91, %cst_62 {dimension_numbers = #tpu.dot_dimension_numbers<[1], [0], [0], [1], [0, 0, 1, 1], [], []>} : vector<64x84xf32>, vector<84x10xf32>, vector<64x10xf32> -> vector<64x10xf32>
    %c0_63 = arith.constant 0 : index
    %c0_64 = arith.constant 0 : index
    %93 = vector.load %arg13[%c0_63, %c0_64] : memref<1x10xf32, #tpu.memory_space<vmem>>, vector<1x10xf32>
    %94 = vector.broadcast %93 : vector<1x10xf32> to vector<64x10xf32>
    %95 = arith.addf %92, %94 : vector<64x10xf32>
    %c0_65 = arith.constant 0 : index
    %c0_66 = arith.constant 0 : index
    %96 = vector.load %arg14[%c0_65, %c0_66] : memref<8x64xf32, #tpu.memory_space<vmem>>, vector<8x64xf32>
    %cst_67 = arith.constant dense<0.000000e+00> : vector<8x10xf32>
    %97 = tpu.matmul %96, %95, %cst_67 {dimension_numbers = #tpu.dot_dimension_numbers<[1], [0], [0], [1], [0, 0, 1, 1], [], []>} : vector<8x64xf32>, vector<64x10xf32>, vector<8x10xf32> -> vector<8x10xf32>
    %c0_68 = arith.constant 0 : index
    %c0_69 = arith.constant 0 : index
    %98 = vector.load %arg15[%c0_68, %c0_69] : memref<8x10xf32, #tpu.memory_space<vmem>>, vector<8x10xf32>
    tpu.vector_store %arg15[%c0_68, %c0_69], %97 {strides = array<i32>} : memref<8x10xf32, #tpu.memory_space<vmem>>, vector<8x10xf32>,
    return
  }
  func.func @transform_0(%arg0: i32) -> (i32, i32) {
    %c0_i32 = arith.constant 0 : i32
    %c0_i32_0 = arith.constant 0 : i32
    return %arg0, %c0_i32 : i32, i32
  }
  func.func @transform_1(%arg0: i32) -> (i32, i32) {
    %c0_i32 = arith.constant 0 : i32
    %c0_i32_0 = arith.constant 0 : i32
    %c0_i32_1 = arith.constant 0 : i32
    return %c0_i32, %c0_i32_0 : i32, i32
  }
  func.func @transform_2(%arg0: i32) -> (i32, i32) {
    %c0_i32 = arith.constant 0 : i32
    %c0_i32_0 = arith.constant 0 : i32
    %c0_i32_1 = arith.constant 0 : i32
    return %c0_i32, %c0_i32_0 : i32, i32
  }
  func.func @transform_3(%arg0: i32) -> (i32, i32) {
    %c0_i32 = arith.constant 0 : i32
    %c0_i32_0 = arith.constant 0 : i32
    %c0_i32_1 = arith.constant 0 : i32
    return %c0_i32, %c0_i32_0 : i32, i32
  }
  func.func @transform_4(%arg0: i32) -> (i32, i32, i32) {
    %c0_i32 = arith.constant 0 : i32
    %c0_i32_0 = arith.constant 0 : i32
    %c0_i32_1 = arith.constant 0 : i32
    %c0_i32_2 = arith.constant 0 : i32
    return %c0_i32, %c0_i32_0, %c0_i32_1 : i32, i32, i32
  }
  func.func @transform_5(%arg0: i32) -> (i32, i32) {
    %c0_i32 = arith.constant 0 : i32
    %c0_i32_0 = arith.constant 0 : i32
    %c0_i32_1 = arith.constant 0 : i32
    return %c0_i32, %c0_i32_0 : i32, i32
  }
  func.func @transform_6(%arg0: i32) -> (i32, i32) {
    %c0_i32 = arith.constant 0 : i32
    %c0_i32_0 = arith.constant 0 : i32
    %c0_i32_1 = arith.constant 0 : i32
    return %c0_i32, %c0_i32_0 : i32, i32
  }
  func.func @transform_7(%arg0: i32) -> (i32, i32, i32) {
    %c0_i32 = arith.constant 0 : i32
    %c0_i32_0 = arith.constant 0 : i32
    %c0_i32_1 = arith.constant 0 : i32
    %c0_i32_2 = arith.constant 0 : i32
    return %c0_i32, %c0_i32_0, %c0_i32_1 : i32, i32, i32
  }
  func.func @transform_8(%arg0: i32) -> (i32, i32) {
    %c0_i32 = arith.constant 0 : i32
    %c0_i32_0 = arith.constant 0 : i32
    %c0_i32_1 = arith.constant 0 : i32
    return %c0_i32, %c0_i32_0 : i32, i32
  }
  func.func @transform_9(%arg0: i32) -> (i32, i32) {
    %c0_i32 = arith.constant 0 : i32
    %c0_i32_0 = arith.constant 0 : i32
    %c0_i32_1 = arith.constant 0 : i32
    return %c0_i32, %c0_i32_0 : i32, i32
  }
  func.func @transform_10(%arg0: i32) -> (i32, i32) {
    %c0_i32 = arith.constant 0 : i32
    %c0_i32_0 = arith.constant 0 : i32
    %c0_i32_1 = arith.constant 0 : i32
    return %c0_i32, %c0_i32_0 : i32, i32
  }
  func.func @transform_11(%arg0: i32) -> (i32, i32) {
    %c0_i32 = arith.constant 0 : i32
    %c0_i32_0 = arith.constant 0 : i32
    %c0_i32_1 = arith.constant 0 : i32
    return %c0_i32, %c0_i32_0 : i32, i32
  }
  func.func @transform_12(%arg0: i32) -> (i32, i32) {
    %c0_i32 = arith.constant 0 : i32
    %c0_i32_0 = arith.constant 0 : i32
    %c0_i32_1 = arith.constant 0 : i32
    return %c0_i32, %c0_i32_0 : i32, i32
  }
  func.func @transform_13(%arg0: i32) -> (i32, i32) {
    %c0_i32 = arith.constant 0 : i32
    %c0_i32_0 = arith.constant 0 : i32
    %c0_i32_1 = arith.constant 0 : i32
    return %c0_i32, %c0_i32_0 : i32, i32
  }
  func.func @transform_14(%arg0: i32) -> (i32, i32) {
    %c0_i32 = arith.constant 0 : i32
    %c0_i32_0 = arith.constant 0 : i32
    return %arg0, %c0_i32 : i32, i32
  }
}

</mosaic_0001>

<llo_original>
// kernel: tile.13
$region0: #{tile.13}
  #allocation0 [shape = 's32[1]{0}', space=sflag, size = 0x4, scoped, tag = 'scoped memory for tile.13']
  %s0 = inlined_call_operand.vmem [shape: f32[6], index: 0, kind: input, shape index: {}]
  %s1 = inlined_call_operand.vmem [shape: f32[28,6], index: 1, kind: output, shape index: {}]
  // Predicated region
  $region2: #{tile.13} parent=0 // pred_check
    _
  $region3: #{tile.13} parent=0 // pred_check_branch
    %3 = sbr.rel (0) target = $region5
  $region4: #{tile.13} parent=0 // pred_region
    _
  $region5: #{tile.13} parent=0 // pred_fallthru
    _
  %v4 = vld [vmem:[%s0] ss:$0 sm:$0xff]
  %5 = vst [vmem:[%s1] sm:$0xff] %v4
  %s6 = scalar_lea.vmem %s1, 8
  %7 = vst [vmem:[%s6] sm:$0xff] %v4
  %s8 = scalar_lea.vmem %s1, 16
  %9 = vst [vmem:[%s8] sm:$0xff] %v4
  %s10 = scalar_lea.vmem %s1, 24
  %11 = vst [vmem:[%s10] sm:$0xff] %v4

// kernel: tile.14
$region0: #{tile.14}
  %s0 = inlined_call_operand.vmem [shape: f32[28,6], index: 0, kind: input, shape index: {}]
  %s1 = inlined_call_operand.vmem [shape: f32[1,168], index: 1, kind: output, shape index: {}]
  $region1: #{tile.14} parent=0
    #allocation0 [shape = 'u8[8192]{0}', space=vmem, size = 0x2000, scoped, tag = 'scoped mem for output reshape']
    %v2 = vld [vmem:[%s0] sm:$0x1]
    %vm3 = vcmask 48128
    %4 = vst.msk [vmem:[#allocation0] sm:$0x1] %vm3, %v2
    %s5 = scalar_lea.vmem %s0, 21
    %v6 = vld [vmem:[%s5] sm:$0x1]
    %s7 = scalar_lea.vmem %s0, 21
    %v8 = vld [vmem:[%s7] sm:$0x1]
    %vm9 = vcmask 15360
    %v10 = vsel %vm9, %v8, %v6
    %11 = vrot.lane.b32.xlu0 %v10, 126
    %v12 = vpop.permute.xlu0 %11
    %vm13 = vcmask 31744
    %s14 = scalar_lea.vmem [#allocation0], 8
    %15 = vst.msk [vmem:[%s14] sm:$0x1] %vm13, %v12
    %vm16 = vcmask 1048560
    %17 = vst.msk [vmem:[#allocation0] sm:$0x1] %vm16, %v12
    %s18 = scalar_lea.vmem %s0, 20
    %v19 = vld [vmem:[%s18] sm:$0x1]
    %20 = vrot.lane.b32.xlu0 %v19, 120
    %v21 = vpop.permute.xlu0 %20
    %vm22 = vcmask 1032128
    %23 = vst.msk [vmem:[#allocation0] sm:$0x1] %vm22, %v21
    %s24 = scalar_lea.vmem %s0, 19
    %v25 = vld [vmem:[%s24] sm:$0x1]
    %26 = vrot.lane.b32.xlu0 %v25, 114
    %v27 = vpop.permute.xlu0 %26
    %vm28 = vcmask 982928
    %29 = vst.msk [vmem:[#allocation0] sm:$0x1] %vm28, %v27
    %s30 = scalar_lea.vmem %s0, 18
    %v31 = vld [vmem:[%s30] sm:$0x1]
    %32 = vrot.lane.b32.xlu0 %v31, 108
    %v33 = vpop.permute.xlu0 %32
    %vm34 = vcmask 933728
    %35 = vst.msk [vmem:[#allocation0] sm:$0x1] %vm34, %v33
    %s36 = scalar_lea.vmem %s0, 17
    %v37 = vld [vmem:[%s36] sm:$0x1]
    %38 = vrot.lane.b32.xlu0 %v37, 102
    %v39 = vpop.permute.xlu0 %38
    %vm40 = vcmask 884528
    %41 = vst.msk [vmem:[#allocation0] sm:$0x1] %vm40, %v39
    %s42 = scalar_lea.vmem %s0, 16
    %v43 = vld [vmem:[%s42] sm:$0x1]
    %44 = vrot.lane.b32.xlu0 %v43, 96
    %v45 = vpop.permute.xlu0 %44
    %vm46 = vcmask 835328
    %47 = vst.msk [vmem:[#allocation0] sm:$0x1] %vm46, %v45
    %s48 = scalar_lea.vmem %s0, 15
    %v49 = vld [vmem:[%s48] sm:$0x1]
    %50 = vrot.lane.b32.xlu0 %v49, 90
    %v51 = vpop.permute.xlu0 %50
    %vm52 = vcmask 786128
    %53 = vst.msk [vmem:[#allocation0] sm:$0x1] %vm52, %v51
    %s54 = scalar_lea.vmem %s0, 14
    %v55 = vld [vmem:[%s54] sm:$0x1]
    %56 = vrot.lane.b32.xlu0 %v55, 84
    %v57 = vpop.permute.xlu0 %56
    %vm58 = vcmask 736928
    %59 = vst.msk [vmem:[#allocation0] sm:$0x1] %vm58, %v57
    %s60 = scalar_lea.vmem %s0, 13
    %v61 = vld [vmem:[%s60] sm:$0x1]
    %62 = vrot.lane.b32.xlu0 %v61, 78
    %v63 = vpop.permute.xlu0 %62
    %vm64 = vcmask 687728
    %65 = vst.msk [vmem:[#allocation0] sm:$0x1] %vm64, %v63
    %s66 = scalar_lea.vmem %s0, 12
    %v67 = vld [vmem:[%s66] sm:$0x1]
    %68 = vrot.lane.b32.xlu0 %v67, 72
    %v69 = vpop.permute.xlu0 %68
    %vm70 = vcmask 638528
    %71 = vst.msk [vmem:[#allocation0] sm:$0x1] %vm70, %v69
    %s72 = scalar_lea.vmem %s0, 11
    %v73 = vld [vmem:[%s72] sm:$0x1]
    %74 = vrot.lane.b32.xlu0 %v73, 66
    %v75 = vpop.permute.xlu0 %74
    %vm76 = vcmask 589328
    %77 = vst.msk [vmem:[#allocation0] sm:$0x1] %vm76, %v75
    %s78 = scalar_lea.vmem %s0, 10
    %v79 = vld [vmem:[%s78] sm:$0x1]
    %80 = vrot.lane.b32.xlu0 %v79, 60
    %v81 = vpop.permute.xlu0 %80
    %vm82 = vcmask 540128
    %83 = vst.msk [vmem:[#allocation0] sm:$0x1] %vm82, %v81
    %s84 = scalar_lea.vmem %s0, 9
    %v85 = vld [vmem:[%s84] sm:$0x1]
    %86 = vrot.lane.b32.xlu0 %v85, 54
    %v87 = vpop.permute.xlu0 %86
    %vm88 = vcmask 490928
    %89 = vst.msk [vmem:[#allocation0] sm:$0x1] %vm88, %v87
    %s90 = scalar_lea.vmem %s0, 8
    %v91 = vld [vmem:[%s90] sm:$0x1]
    %92 = vrot.lane.b32.xlu0 %v91, 48
    %v93 = vpop.permute.xlu0 %92
    %vm94 = vcmask 441728
    %95 = vst.msk [vmem:[#allocation0] sm:$0x1] %vm94, %v93
    %s96 = scalar_lea.vmem %s0, 7
    %v97 = vld [vmem:[%s96] sm:$0x1]
    %98 = vrot.lane.b32.xlu0 %v97, 42
    %v99 = vpop.permute.xlu0 %98
    %vm100 = vcmask 392528
    %101 = vst.msk [vmem:[#allocation0] sm:$0x1] %vm100, %v99
    %s102 = scalar_lea.vmem %s0, 6
    %v103 = vld [vmem:[%s102] sm:$0x1]
    %104 = vrot.lane.b32.xlu0 %v103, 36
    %v105 = vpop.permute.xlu0 %104
    %vm106 = vcmask 343328
    %107 = vst.msk [vmem:[#allocation0] sm:$0x1] %vm106, %v105
    %s108 = scalar_lea.vmem %s0, 27
    %v109 = vld [vmem:[%s108] sm:$0x1]
    %110 = vrot.lane.b32.xlu0 %v109, 34
    %v111 = vpop.permute.xlu0 %110
    %vm112 = vcmask 326928
    %s113 = scalar_lea.vmem [#allocation0], 8
    %114 = vst.msk [vmem:[%s113] sm:$0x1] %vm112, %v111
    %s115 = scalar_lea.vmem %s0, 5
    %v116 = vld [vmem:[%s115] sm:$0x1]
    %117 = vrot.lane.b32.xlu0 %v116, 30
    %v118 = vpop.permute.xlu0 %117
    %vm119 = vcmask 294128
    %120 = vst.msk [vmem:[#allocation0] sm:$0x1] %vm119, %v118
    %s121 = scalar_lea.vmem %s0, 26
    %v122 = vld [vmem:[%s121] sm:$0x1]
    %123 = vrot.lane.b32.xlu0 %v122, 28
    %v124 = vpop.permute.xlu0 %123
    %vm125 = vcmask 277728
    %s126 = scalar_lea.vmem [#allocation0], 8
    %127 = vst.msk [vmem:[%s126] sm:$0x1] %vm125, %v124
    %s128 = scalar_lea.vmem %s0, 4
    %v129 = vld [vmem:[%s128] sm:$0x1]
    %130 = vrot.lane.b32.xlu0 %v129, 24
    %v131 = vpop.permute.xlu0 %130
    %vm132 = vcmask 244928
    %133 = vst.msk [vmem:[#allocation0] sm:$0x1] %vm132, %v131
    %s134 = scalar_lea.vmem %s0, 25
    %v135 = vld [vmem:[%s134] sm:$0x1]
    %136 = vrot.lane.b32.xlu0 %v135, 22
    %v137 = vpop.permute.xlu0 %136
    %vm138 = vcmask 228528
    %s139 = scalar_lea.vmem [#allocation0], 8
    %140 = vst.msk [vmem:[%s139] sm:$0x1] %vm138, %v137
    %s141 = scalar_lea.vmem %s0, 3
    %v142 = vld [vmem:[%s141] sm:$0x1]
    %143 = vrot.lane.b32.xlu0 %v142, 18
    %v144 = vpop.permute.xlu0 %143
    %vm145 = vcmask 195728
    %146 = vst.msk [vmem:[#allocation0] sm:$0x1] %vm145, %v144
    %s147 = scalar_lea.vmem %s0, 24
    %v148 = vld [vmem:[%s147] sm:$0x1]
    %149 = vrot.lane.b32.xlu0 %v148, 16
    %v150 = vpop.permute.xlu0 %149
    %vm151 = vcmask 179328
    %s152 = scalar_lea.vmem [#allocation0], 8
    %153 = vst.msk [vmem:[%s152] sm:$0x1] %vm151, %v150
    %s154 = scalar_lea.vmem %s0, 2
    %v155 = vld [vmem:[%s154] sm:$0x1]
    %156 = vrot.lane.b32.xlu0 %v155, 12
    %v157 = vpop.permute.xlu0 %156
    %vm158 = vcmask 146528
    %159 = vst.msk [vmem:[#allocation0] sm:$0x1] %vm158, %v157
    %s160 = scalar_lea.vmem %s0, 23
    %v161 = vld [vmem:[%s160] sm:$0x1]
    %162 = vrot.lane.b32.xlu0 %v161, 10
    %v163 = vpop.permute.xlu0 %162
    %vm164 = vcmask 130128
    %s165 = scalar_lea.vmem [#allocation0], 8
    %166 = vst.msk [vmem:[%s165] sm:$0x1] %vm164, %v163
    %s167 = scalar_lea.vmem %s0, 1
    %v168 = vld [vmem:[%s167] sm:$0x1]
    %169 = vrot.lane.b32.xlu0 %v168, 6
    %v170 = vpop.permute.xlu0 %169
    %vm171 = vcmask 97328
    %172 = vst.msk [vmem:[#allocation0] sm:$0x1] %vm171, %v170
    %s173 = scalar_lea.vmem %s0, 22
    %v174 = vld [vmem:[%s173] sm:$0x1]
    %175 = vrot.lane.b32.xlu0 %v174, 4
    %v176 = vpop.permute.xlu0 %175
    %vm177 = vcmask 80928
    %s178 = scalar_lea.vmem [#allocation0], 8
    %179 = vst.msk [vmem:[%s178] sm:$0x1] %vm177, %v176
    %s181 = ssub.s32 2, 1
    %v182 = vld [vmem:[#allocation0] sm:%s181]
    %s184 = ssub.s32 2, 1
    %185 = vst [vmem:[%s1] sm:%s184] %v182
    %s186 = scalar_lea.vmem [#allocation0], 8
    %v187 = vld [vmem:[%s186] sm:%s181]
    %s189 = ssub.s32 2, 1
    %s190 = scalar_lea.vmem %s1, 1
    %191 = vst [vmem:[%s190] sm:%s189] %v187

// kernel: tile.18
$region0: #{tile.18}
  #allocation0 [shape = 's32[1]{0}', space=sflag, size = 0x4, scoped, tag = 'scoped memory for tile.18']
  %s0 = inlined_call_operand.vmem [shape: f32[16], index: 0, kind: input, shape index: {}]
  %s1 = inlined_call_operand.vmem [shape: f32[10,16], index: 1, kind: output, shape index: {}]
  // Predicated region
  $region2: #{tile.18} parent=0 // pred_check
    _
  $region3: #{tile.18} parent=0 // pred_check_branch
    %3 = sbr.rel (0) target = $region5
  $region4: #{tile.18} parent=0 // pred_region
    _
  $region5: #{tile.18} parent=0 // pred_fallthru
    _
  %v4 = vld [vmem:[%s0] ss:$0 sm:$0xff]
  %5 = vst [vmem:[%s1] sm:$0xff] %v4
  %s6 = scalar_lea.vmem %s1, 8
  %7 = vst [vmem:[%s6] sm:$0xff] %v4

// kernel: tile.19
$region0: #{tile.19}
  %s0 = inlined_call_operand.vmem [shape: f32[10,16], index: 0, kind: input, shape index: {}]
  %s1 = inlined_call_operand.vmem [shape: f32[1,160], index: 1, kind: output, shape index: {}]
  $region1: #{tile.19} parent=0
    #allocation0 [shape = 'u8[8192]{0}', space=vmem, size = 0x2000, scoped, tag = 'scoped mem for output reshape']
    %s2 = smov 3
    %v3 = vld [vmem:[%s0] ss:$8 sm:%s2]
    %vm4 = vcmask 130048
    %5 = vst.msk [vmem:[#allocation0] ss:$8 sm:$0x3] %vm4, %v3
    %s6 = scalar_lea.vmem %s0, 7
    %v7 = vld [vmem:[%s6] sm:$0x1]
    %8 = vrot.lane.b32.xlu0 %v7, 112
    %v9 = vpop.permute.xlu0 %8
    %vm10 = vcmask 1048448
    %11 = vst.msk [vmem:[#allocation0] sm:$0x1] %vm10, %v9
    %s12 = scalar_lea.vmem %s0, 6
    %v13 = vld [vmem:[%s12] sm:$0x1]
    %14 = vrot.lane.b32.xlu0 %v13, 96
    %v15 = vpop.permute.xlu0 %14
    %vm16 = vcmask 917248
    %17 = vst.msk [vmem:[#allocation0] sm:$0x1] %vm16, %v15
    %s18 = scalar_lea.vmem %s0, 5
    %v19 = vld [vmem:[%s18] sm:$0x1]
    %20 = vrot.lane.b32.xlu0 %v19, 80
    %v21 = vpop.permute.xlu0 %20
    %vm22 = vcmask 786048
    %23 = vst.msk [vmem:[#allocation0] sm:$0x1] %vm22, %v21
    %s24 = scalar_lea.vmem %s0, 4
    %v25 = vld [vmem:[%s24] sm:$0x1]
    %26 = vrot.lane.b32.xlu0 %v25, 64
    %v27 = vpop.permute.xlu0 %26
    %vm28 = vcmask 654848
    %29 = vst.msk [vmem:[#allocation0] sm:$0x1] %vm28, %v27
    %s30 = scalar_lea.vmem %s0, 3
    %v31 = vld [vmem:[%s30] sm:$0x1]
    %32 = vrot.lane.b32.xlu0 %v31, 48
    %v33 = vpop.permute.xlu0 %32
    %vm34 = vcmask 523648
    %35 = vst.msk [vmem:[#allocation0] sm:$0x1] %vm34, %v33
    %s36 = scalar_lea.vmem %s0, 2
    %v37 = vld [vmem:[%s36] sm:$0x1]
    %38 = vrot.lane.b32.xlu0 %v37, 32
    %v39 = vpop.permute.xlu0 %38
    %vm40 = vcmask 392448
    %41 = vst.msk [vmem:[#allocation0] sm:$0x1] %vm40, %v39
    %s42 = scalar_lea.vmem %s0, 1
    %s43 = smov 3
    %v44 = vld [vmem:[%s42] ss:$8 sm:%s43]
    %45 = vrot.lane.b32.xlu0 %v44, 16
    %v46 = vpop.permute.xlu0 %45
    %vm47 = vcmask 261248
    %48 = vst.msk [vmem:[#allocation0] ss:$8 sm:$0x3] %vm47, %v46
    %s50 = ssub.s32 2, 1
    %v51 = vld [vmem:[#allocation0] sm:%s50]
    %s53 = ssub.s32 2, 1
    %54 = vst [vmem:[%s1] sm:%s53] %v51
    %s55 = scalar_lea.vmem [#allocation0], 8
    %v56 = vld [vmem:[%s55] sm:%s50]
    %s58 = ssub.s32 2, 1
    %s59 = scalar_lea.vmem %s1, 1
    %60 = vst [vmem:[%s59] sm:%s58] %v56

// kernel: _lambda_.1
$region0: #{_lambda_.1}
  #allocation0 [shape = 'u32[]', space=smem, size = 0x4, offset = 0x4, fixed_abs, tag = 'smem constant byte address 0x4 - core index']
  #allocation1 [shape = 'u32[72,128]{1,0:T(1,128)}', space=vmem, size = 0x9000, scoped, tag = 'internal scratch']
  %s0 = inlined_call_operand.vmem [shape: f32[512,160], index: 0, kind: input, shape index: {}]
  %s1 = inlined_call_operand.vmem [shape: f32[160,168], index: 1, kind: input, shape index: {}]
  %s2 = inlined_call_operand.vmem [shape: f32[1,168], index: 2, kind: input, shape index: {}]
  %s3 = inlined_call_operand.vmem [shape: f32[136,255], index: 3, kind: input, shape index: {}]
  %s4 = inlined_call_operand.vmem [shape: f32[5,162,160], index: 4, kind: input, shape index: {}]
  %s5 = inlined_call_operand.vmem [shape: f32[1,160], index: 5, kind: input, shape index: {}]
  %s6 = inlined_call_operand.vmem [shape: f32[72,127], index: 6, kind: input, shape index: {}]
  %s7 = inlined_call_operand.vmem [shape: f32[5,144,120], index: 7, kind: input, shape index: {}]
  %s8 = inlined_call_operand.vmem [shape: f32[1,120], index: 8, kind: input, shape index: {}]
  %s9 = inlined_call_operand.vmem [shape: f32[120,84], index: 9, kind: input, shape index: {}]
  %s10 = inlined_call_operand.vmem [shape: f32[1,84], index: 10, kind: input, shape index: {}]
  %s11 = inlined_call_operand.vmem [shape: f32[84,10], index: 11, kind: input, shape index: {}]
  %s12 = inlined_call_operand.vmem [shape: f32[1,10], index: 12, kind: input, shape index: {}]
  %s13 = inlined_call_operand.vmem [shape: f32[8,64], index: 13, kind: input, shape index: {}]
  %s14 = inlined_call_operand.hbm [shape: f32[16,10], index: 14, kind: output, shape index: {}]
  %s15 = sld [smem:[#allocation0]]
  $region89: #{_lambda_.1} parent=0
    _
  %s17 = ssub.s32 1, %s15
  %s18 = scalar_select 0, %s17, %s15
  $region1: #{_lambda_.1} parent=0
    #allocation2 [shape = 'u8[8192]{0}', space=vmem, size = 0x2000, scoped, tag = 'output window, operand 0']
    #allocation3 [shape = 's32[2]{0}', space=sflag, size = 0x8, scoped, tag = 'scoped memory for _lambda_.1']
    %19 = vsyncpa [#allocation3], 0
    %s20 = scalar_lea.sflag [#allocation3], 1
    %21 = vsyncpa %s20, 0
    loop: start=0, step=1, limit=4
    $region2: #{_lambda_.1} parent=1 // loop_pre_header
      _
    $region3: #{_lambda_.1} parent=1 // loop_header
      %s23 = sphi 0, %s27
      %p24 = scmp.ge.s32.totalorder %s23, 4
      %s33 = sphi 0, %s35
      %s36 = sphi 0, %s33
      %s37 = sphi 0, %s36
      %s53 = sphi 0, %s37
      %s57 = sphi 0, %s57
      %s59 = sphi 0, %s57
      %s60 = sphi 0, %s59
      %s74 = sphi 0, %s60
      %s78 = sphi 0, %s78
      %s80 = sphi 0, %s78
      %s81 = sphi 0, %s80
      %s95 = sphi 0, %s81
      %s99 = sphi 0, %s99
      %s101 = sphi 0, %s99
      %s102 = sphi 0, %s101
      %s116 = sphi 0, %s102
      %s120 = sphi 0, %s120
      %s122 = sphi 0, %s120
      %s123 = sphi 0, %s122
      %s137 = sphi 0, %s123
      %s141 = sphi 0, %s141
      %s143 = sphi 0, %s141
      %s144 = sphi 0, %s143
      %s158 = sphi 0, %s144
      %s162 = sphi 0, %s162
      %s164 = sphi 0, %s162
      %s165 = sphi 0, %s164
      %s179 = sphi 0, %s165
      %s183 = sphi 0, %s183
      %s185 = sphi 0, %s183
      %s186 = sphi 0, %s185
      %s200 = sphi 0, %s186
      %s204 = sphi 0, %s204
      %s206 = sphi 0, %s204
      %s207 = sphi 0, %s206
      %s221 = sphi 0, %s207
      %s225 = sphi 0, %s225
      %s227 = sphi 0, %s225
      %s228 = sphi 0, %s227
      %s242 = sphi 0, %s228
      %s246 = sphi 0, %s246
      %s248 = sphi 0, %s246
      %s249 = sphi 0, %s248
      %s263 = sphi 0, %s249
      %s267 = sphi 0, %s267
      %s269 = sphi 0, %s267
      %s270 = sphi 0, %s269
      %s284 = sphi 0, %s270
      %s288 = sphi 0, %s288
      %s290 = sphi 0, %s288
      %s291 = sphi 0, %s290
      %s305 = sphi 0, %s291
      %s309 = sphi 0, %s309
      %s311 = sphi 0, %s309
      %s312 = sphi 0, %s311
      %s326 = sphi 0, %s312
      %s332 = sphi 0, %s334
      %s335 = sphi 0, %s332
      %s336 = sphi 0, %s335
      %s352 = sphi 0, %s336
    $region4: #{_lambda_.1} parent=1 // loop_header_branch
      %26 = sbr.rel (%p24) target = $region8
    $region5: #{_lambda_.1} parent=1 // loop_body
      %s28 = ssub.s32 %s23, 1
      %s29 = ssub.s32 %s23, 2
      %s30 = sadd.s32 %s23, 1
      %s31 = ssub.s32 %s23, %s30
      %p32 = scmp.eq.s32.totalorder %s31, 0
      %s34 = sadd.s32 %s33, 1
      %s35 = scalar_select %p32, %s33, %s34
      %p38 = pneg %p32
      %p39 = scmp.eq.s32.totalorder %s23, 1
      %p40 = por %p38, %p39
      %p41 = scmp.ne.s32.totalorder %s33, %s36
      %p42 = scmp.eq.s32.totalorder %s23, 0
      %p43 = por %p41, %p42
      %p44 = scmp.ne.s32.totalorder %s33, %s36
      %p45 = scmp.eq.s32.totalorder %s28, 1
      %p46 = por %p44, %p45
      %p47 = scmp.ne.s32.totalorder %s36, %s37
      %p48 = scmp.eq.s32.totalorder %s28, 0
      %p49 = por %p47, %p48
      %p50 = scmp.ne.s32.totalorder %s36, %s37
      %p51 = scmp.eq.s32.totalorder %s29, 1
      %p52 = por %p50, %p51
      %p54 = scmp.ne.s32.totalorder %s37, %s53
      %p55 = scmp.eq.s32.totalorder %s29, 0
      %p56 = por %p54, %p55
      %s58 = sadd.s32 %s57, 1
      %p61 = scmp.eq.s32.totalorder %s23, 1
      %p62 = scmp.ne.s32.totalorder %s57, %s59
      %p63 = scmp.eq.s32.totalorder %s23, 0
      %p64 = por %p62, %p63
      %p65 = scmp.ne.s32.totalorder %s57, %s59
      %p66 = scmp.eq.s32.totalorder %s28, 1
      %p67 = por %p65, %p66
      %p68 = scmp.ne.s32.totalorder %s59, %s60
      %p69 = scmp.eq.s32.totalorder %s28, 0
      %p70 = por %p68, %p69
      %p71 = scmp.ne.s32.totalorder %s59, %s60
      %p72 = scmp.eq.s32.totalorder %s29, 1
      %p73 = por %p71, %p72
      %p75 = scmp.ne.s32.totalorder %s60, %s74
      %p76 = scmp.eq.s32.totalorder %s29, 0
      %p77 = por %p75, %p76
      %s79 = sadd.s32 %s78, 1
      %p82 = scmp.eq.s32.totalorder %s23, 1
      %p83 = scmp.ne.s32.totalorder %s78, %s80
      %p84 = scmp.eq.s32.totalorder %s23, 0
      %p85 = por %p83, %p84
      %p86 = scmp.ne.s32.totalorder %s78, %s80
      %p87 = scmp.eq.s32.totalorder %s28, 1
      %p88 = por %p86, %p87
      %p89 = scmp.ne.s32.totalorder %s80, %s81
      %p90 = scmp.eq.s32.totalorder %s28, 0
      %p91 = por %p89, %p90
      %p92 = scmp.ne.s32.totalorder %s80, %s81
      %p93 = scmp.eq.s32.totalorder %s29, 1
      %p94 = por %p92, %p93
      %p96 = scmp.ne.s32.totalorder %s81, %s95
      %p97 = scmp.eq.s32.totalorder %s29, 0
      %p98 = por %p96, %p97
      %s100 = sadd.s32 %s99, 1
      %p103 = scmp.eq.s32.totalorder %s23, 1
      %p104 = scmp.ne.s32.totalorder %s99, %s101
      %p105 = scmp.eq.s32.totalorder %s23, 0
      %p106 = por %p104, %p105
      %p107 = scmp.ne.s32.totalorder %s99, %s101
      %p108 = scmp.eq.s32.totalorder %s28, 1
      %p109 = por %p107, %p108
      %p110 = scmp.ne.s32.totalorder %s101, %s102
      %p111 = scmp.eq.s32.totalorder %s28, 0
      %p112 = por %p110, %p111
      %p113 = scmp.ne.s32.totalorder %s101, %s102
      %p114 = scmp.eq.s32.totalorder %s29, 1
      %p115 = por %p113, %p114
      %p117 = scmp.ne.s32.totalorder %s102, %s116
      %p118 = scmp.eq.s32.totalorder %s29, 0
      %p119 = por %p117, %p118
      %s121 = sadd.s32 %s120, 1
      %p124 = scmp.eq.s32.totalorder %s23, 1
      %p125 = scmp.ne.s32.totalorder %s120, %s122
      %p126 = scmp.eq.s32.totalorder %s23, 0
      %p127 = por %p125, %p126
      %p128 = scmp.ne.s32.totalorder %s120, %s122
      %p129 = scmp.eq.s32.totalorder %s28, 1
      %p130 = por %p128, %p129
      %p131 = scmp.ne.s32.totalorder %s122, %s123
      %p132 = scmp.eq.s32.totalorder %s28, 0
      %p133 = por %p131, %p132
      %p134 = scmp.ne.s32.totalorder %s122, %s123
      %p135 = scmp.eq.s32.totalorder %s29, 1
      %p136 = por %p134, %p135
      %p138 = scmp.ne.s32.totalorder %s123, %s137
      %p139 = scmp.eq.s32.totalorder %s29, 0
      %p140 = por %p138, %p139
      %s142 = sadd.s32 %s141, 1
      %p145 = scmp.eq.s32.totalorder %s23, 1
      %p146 = scmp.ne.s32.totalorder %s141, %s143
      %p147 = scmp.eq.s32.totalorder %s23, 0
      %p148 = por %p146, %p147
      %p149 = scmp.ne.s32.totalorder %s141, %s143
      %p150 = scmp.eq.s32.totalorder %s28, 1
      %p151 = por %p149, %p150
      %p152 = scmp.ne.s32.totalorder %s143, %s144
      %p153 = scmp.eq.s32.totalorder %s28, 0
      %p154 = por %p152, %p153
      %p155 = scmp.ne.s32.totalorder %s143, %s144
      %p156 = scmp.eq.s32.totalorder %s29, 1
      %p157 = por %p155, %p156
      %p159 = scmp.ne.s32.totalorder %s144, %s158
      %p160 = scmp.eq.s32.totalorder %s29, 0
      %p161 = por %p159, %p160
      %s163 = sadd.s32 %s162, 1
      %p166 = scmp.eq.s32.totalorder %s23, 1
      %p167 = scmp.ne.s32.totalorder %s162, %s164
      %p168 = scmp.eq.s32.totalorder %s23, 0
      %p169 = por %p167, %p168
      %p170 = scmp.ne.s32.totalorder %s162, %s164
      %p171 = scmp.eq.s32.totalorder %s28, 1
      %p172 = por %p170, %p171
      %p173 = scmp.ne.s32.totalorder %s164, %s165
      %p174 = scmp.eq.s32.totalorder %s28, 0
      %p175 = por %p173, %p174
      %p176 = scmp.ne.s32.totalorder %s164, %s165
      %p177 = scmp.eq.s32.totalorder %s29, 1
      %p178 = por %p176, %p177
      %p180 = scmp.ne.s32.totalorder %s165, %s179
      %p181 = scmp.eq.s32.totalorder %s29, 0
      %p182 = por %p180, %p181
      %s184 = sadd.s32 %s183, 1
      %p187 = scmp.eq.s32.totalorder %s23, 1
      %p188 = scmp.ne.s32.totalorder %s183, %s185
      %p189 = scmp.eq.s32.totalorder %s23, 0
      %p190 = por %p188, %p189
      %p191 = scmp.ne.s32.totalorder %s183, %s185
      %p192 = scmp.eq.s32.totalorder %s28, 1
      %p193 = por %p191, %p192
      %p194 = scmp.ne.s32.totalorder %s185, %s186
      %p195 = scmp.eq.s32.totalorder %s28, 0
      %p196 = por %p194, %p195
      %p197 = scmp.ne.s32.totalorder %s185, %s186
      %p198 = scmp.eq.s32.totalorder %s29, 1
      %p199 = por %p197, %p198
      %p201 = scmp.ne.s32.totalorder %s186, %s200
      %p202 = scmp.eq.s32.totalorder %s29, 0
      %p203 = por %p201, %p202
      %s205 = sadd.s32 %s204, 1
      %p208 = scmp.eq.s32.totalorder %s23, 1
      %p209 = scmp.ne.s32.totalorder %s204, %s206
      %p210 = scmp.eq.s32.totalorder %s23, 0
      %p211 = por %p209, %p210
      %p212 = scmp.ne.s32.totalorder %s204, %s206
      %p213 = scmp.eq.s32.totalorder %s28, 1
      %p214 = por %p212, %p213
      %p215 = scmp.ne.s32.totalorder %s206, %s207
      %p216 = scmp.eq.s32.totalorder %s28, 0
      %p217 = por %p215, %p216
      %p218 = scmp.ne.s32.totalorder %s206, %s207
      %p219 = scmp.eq.s32.totalorder %s29, 1
      %p220 = por %p218, %p219
      %p222 = scmp.ne.s32.totalorder %s207, %s221
      %p223 = scmp.eq.s32.totalorder %s29, 0
      %p224 = por %p222, %p223
      %s226 = sadd.s32 %s225, 1
      %p229 = scmp.eq.s32.totalorder %s23, 1
      %p230 = scmp.ne.s32.totalorder %s225, %s227
      %p231 = scmp.eq.s32.totalorder %s23, 0
      %p232 = por %p230, %p231
      %p233 = scmp.ne.s32.totalorder %s225, %s227
      %p234 = scmp.eq.s32.totalorder %s28, 1
      %p235 = por %p233, %p234
      %p236 = scmp.ne.s32.totalorder %s227, %s228
      %p237 = scmp.eq.s32.totalorder %s28, 0
      %p238 = por %p236, %p237
      %p239 = scmp.ne.s32.totalorder %s227, %s228
      %p240 = scmp.eq.s32.totalorder %s29, 1
      %p241 = por %p239, %p240
      %p243 = scmp.ne.s32.totalorder %s228, %s242
      %p244 = scmp.eq.s32.totalorder %s29, 0
      %p245 = por %p243, %p244
      %s247 = sadd.s32 %s246, 1
      %p250 = scmp.eq.s32.totalorder %s23, 1
      %p251 = scmp.ne.s32.totalorder %s246, %s248
      %p252 = scmp.eq.s32.totalorder %s23, 0
      %p253 = por %p251, %p252
      %p254 = scmp.ne.s32.totalorder %s246, %s248
      %p255 = scmp.eq.s32.totalorder %s28, 1
      %p256 = por %p254, %p255
      %p257 = scmp.ne.s32.totalorder %s248, %s249
      %p258 = scmp.eq.s32.totalorder %s28, 0
      %p259 = por %p257, %p258
      %p260 = scmp.ne.s32.totalorder %s248, %s249
      %p261 = scmp.eq.s32.totalorder %s29, 1
      %p262 = por %p260, %p261
      %p264 = scmp.ne.s32.totalorder %s249, %s263
      %p265 = scmp.eq.s32.totalorder %s29, 0
      %p266 = por %p264, %p265
      %s268 = sadd.s32 %s267, 1
      %p271 = scmp.eq.s32.totalorder %s23, 1
      %p272 = scmp.ne.s32.totalorder %s267, %s269
      %p273 = scmp.eq.s32.totalorder %s23, 0
      %p274 = por %p272, %p273
      %p275 = scmp.ne.s32.totalorder %s267, %s269
      %p276 = scmp.eq.s32.totalorder %s28, 1
      %p277 = por %p275, %p276
      %p278 = scmp.ne.s32.totalorder %s269, %s270
      %p279 = scmp.eq.s32.totalorder %s28, 0
      %p280 = por %p278, %p279
      %p281 = scmp.ne.s32.totalorder %s269, %s270
      %p282 = scmp.eq.s32.totalorder %s29, 1
      %p283 = por %p281, %p282
      %p285 = scmp.ne.s32.totalorder %s270, %s284
      %p286 = scmp.eq.s32.totalorder %s29, 0
      %p287 = por %p285, %p286
      %s289 = sadd.s32 %s288, 1
      %p292 = scmp.eq.s32.totalorder %s23, 1
      %p293 = scmp.ne.s32.totalorder %s288, %s290
      %p294 = scmp.eq.s32.totalorder %s23, 0
      %p295 = por %p293, %p294
      %p296 = scmp.ne.s32.totalorder %s288, %s290
      %p297 = scmp.eq.s32.totalorder %s28, 1
      %p298 = por %p296, %p297
      %p299 = scmp.ne.s32.totalorder %s290, %s291
      %p300 = scmp.eq.s32.totalorder %s28, 0
      %p301 = por %p299, %p300
      %p302 = scmp.ne.s32.totalorder %s290, %s291
      %p303 = scmp.eq.s32.totalorder %s29, 1
      %p304 = por %p302, %p303
      %p306 = scmp.ne.s32.totalorder %s291, %s305
      %p307 = scmp.eq.s32.totalorder %s29, 0
      %p308 = por %p306, %p307
      %s310 = sadd.s32 %s309, 1
      %p313 = scmp.eq.s32.totalorder %s23, 1
      %p314 = scmp.ne.s32.totalorder %s309, %s311
      %p315 = scmp.eq.s32.totalorder %s23, 0
      %p316 = por %p314, %p315
      %p317 = scmp.ne.s32.totalorder %s309, %s311
      %p318 = scmp.eq.s32.totalorder %s28, 1
      %p319 = por %p317, %p318
      %p320 = scmp.ne.s32.totalorder %s311, %s312
      %p321 = scmp.eq.s32.totalorder %s28, 0
      %p322 = por %p320, %p321
      %p323 = scmp.ne.s32.totalorder %s311, %s312
      %p324 = scmp.eq.s32.totalorder %s29, 1
      %p325 = por %p323, %p324
      %p327 = scmp.ne.s32.totalorder %s312, %s326
      %p328 = scmp.eq.s32.totalorder %s29, 0
      %p329 = por %p327, %p328
      %s330 = ssub.s32 %s23, %s30
      %p331 = scmp.eq.s32.totalorder %s330, 0
      %s333 = sadd.s32 %s332, 1
      %s334 = scalar_select %p331, %s332, %s333
      %p337 = pneg %p331
      %p338 = scmp.eq.s32.totalorder %s23, 1
      %p339 = por %p337, %p338
      %p340 = scmp.ne.s32.totalorder %s332, %s335
      %p341 = scmp.eq.s32.totalorder %s23, 0
      %p342 = por %p340, %p341
      %p343 = scmp.ne.s32.totalorder %s332, %s335
      %p344 = scmp.eq.s32.totalorder %s28, 1
      %p345 = por %p343, %p344
      %p346 = scmp.ne.s32.totalorder %s335, %s336
      %p347 = scmp.eq.s32.totalorder %s28, 0
      %p348 = por %p346, %p347
      %p349 = scmp.ne.s32.totalorder %s335, %s336
      %p350 = scmp.eq.s32.totalorder %s29, 1
      %p351 = por %p349, %p350
      %p353 = scmp.ne.s32.totalorder %s336, %s352
      %p354 = scmp.eq.s32.totalorder %s29, 0
      %p355 = por %p353, %p354
      %p356 = scmp.le.s32.totalorder 1, %s23
      %p357 = scmp.lt.s32.totalorder %s23, 3
      %p358 = pnand %p356, %p357
      %p359 = pneg %p358
      // Predicated region
      $region9: #{_lambda_.1} parent=5 // pred_check
        _
      $region10: #{_lambda_.1} parent=5 // pred_check_branch
        %361 = sbr.rel (%p358) target = $region12
      $region11: #{_lambda_.1} parent=5 // pred_region
        %s362 = ssub.s32 %s23, 1
        // Predicated region
        $region13: #{_lambda_.1} parent=11 // pred_check
          %p363 = pneg %p70
        $region14: #{_lambda_.1} parent=11 // pred_check_branch
          %365 = sbr.rel (%p363) target = $region16
        $region15: #{_lambda_.1} parent=11 // pred_region
          _
        $region16: #{_lambda_.1} parent=11 // pred_fallthru
          _
        // Predicated region
        $region17: #{_lambda_.1} parent=11 // pred_check
          %p366 = pneg %p91
        $region18: #{_lambda_.1} parent=11 // pred_check_branch
          %368 = sbr.rel (%p366) target = $region20
        $region19: #{_lambda_.1} parent=11 // pred_region
          _
        $region20: #{_lambda_.1} parent=11 // pred_fallthru
          _
        // Predicated region
        $region21: #{_lambda_.1} parent=11 // pred_check
          %p369 = pneg %p112
        $region22: #{_lambda_.1} parent=11 // pred_check_branch
          %371 = sbr.rel (%p369) target = $region24
        $region23: #{_lambda_.1} parent=11 // pred_region
          _
        $region24: #{_lambda_.1} parent=11 // pred_fallthru
          _
        // Predicated region
        $region25: #{_lambda_.1} parent=11 // pred_check
          %p372 = pneg %p133
        $region26: #{_lambda_.1} parent=11 // pred_check_branch
          %374 = sbr.rel (%p372) target = $region28
        $region27: #{_lambda_.1} parent=11 // pred_region
          _
        $region28: #{_lambda_.1} parent=11 // pred_fallthru
          _
        // Predicated region
        $region29: #{_lambda_.1} parent=11 // pred_check
          %p375 = pneg %p154
        $region30: #{_lambda_.1} parent=11 // pred_check_branch
          %377 = sbr.rel (%p375) target = $region32
        $region31: #{_lambda_.1} parent=11 // pred_region
          _
        $region32: #{_lambda_.1} parent=11 // pred_fallthru
          _
        // Predicated region
        $region33: #{_lambda_.1} parent=11 // pred_check
          %p378 = pneg %p175
        $region34: #{_lambda_.1} parent=11 // pred_check_branch
          %380 = sbr.rel (%p378) target = $region36
        $region35: #{_lambda_.1} parent=11 // pred_region
          _
        $region36: #{_lambda_.1} parent=11 // pred_fallthru
          _
        // Predicated region
        $region37: #{_lambda_.1} parent=11 // pred_check
          %p381 = pneg %p196
        $region38: #{_lambda_.1} parent=11 // pred_check_branch
          %383 = sbr.rel (%p381) target = $region40
        $region39: #{_lambda_.1} parent=11 // pred_region
          _
        $region40: #{_lambda_.1} parent=11 // pred_fallthru
          _
        // Predicated region
        $region41: #{_lambda_.1} parent=11 // pred_check
          %p384 = pneg %p217
        $region42: #{_lambda_.1} parent=11 // pred_check_branch
          %386 = sbr.rel (%p384) target = $region44
        $region43: #{_lambda_.1} parent=11 // pred_region
          _
        $region44: #{_lambda_.1} parent=11 // pred_fallthru
          _
        // Predicated region
        $region45: #{_lambda_.1} parent=11 // pred_check
          %p387 = pneg %p238
        $region46: #{_lambda_.1} parent=11 // pred_check_branch
          %389 = sbr.rel (%p387) target = $region48
        $region47: #{_lambda_.1} parent=11 // pred_region
          _
        $region48: #{_lambda_.1} parent=11 // pred_fallthru
          _
        // Predicated region
        $region49: #{_lambda_.1} parent=11 // pred_check
          %p390 = pneg %p259
        $region50: #{_lambda_.1} parent=11 // pred_check_branch
          %392 = sbr.rel (%p390) target = $region52
        $region51: #{_lambda_.1} parent=11 // pred_region
          _
        $region52: #{_lambda_.1} parent=11 // pred_fallthru
          _
        // Predicated region
        $region53: #{_lambda_.1} parent=11 // pred_check
          %p393 = pneg %p280
        $region54: #{_lambda_.1} parent=11 // pred_check_branch
          %395 = sbr.rel (%p393) target = $region56
        $region55: #{_lambda_.1} parent=11 // pred_region
          _
        $region56: #{_lambda_.1} parent=11 // pred_fallthru
          _
        // Predicated region
        $region57: #{_lambda_.1} parent=11 // pred_check
          %p396 = pneg %p301
        $region58: #{_lambda_.1} parent=11 // pred_check_branch
          %398 = sbr.rel (%p396) target = $region60
        $region59: #{_lambda_.1} parent=11 // pred_region
          _
        $region60: #{_lambda_.1} parent=11 // pred_fallthru
          _
        // Predicated region
        $region61: #{_lambda_.1} parent=11 // pred_check
          %p399 = pneg %p322
        $region62: #{_lambda_.1} parent=11 // pred_check_branch
          %401 = sbr.rel (%p399) target = $region64
        $region63: #{_lambda_.1} parent=11 // pred_region
          _
        $region64: #{_lambda_.1} parent=11 // pred_fallthru
          _
      $region12: #{_lambda_.1} parent=5 // pred_fallthru
        _
      %p402 = scmp.lt.s32.totalorder %s23, 2
      // Predicated region
      $region65: #{_lambda_.1} parent=5 // pred_check
        %p403 = pneg %p402
      $region66: #{_lambda_.1} parent=5 // pred_check_branch
        %405 = sbr.rel (%p403) target = $region68
      $region67: #{_lambda_.1} parent=5 // pred_region
        // Predicated region
        $region69: #{_lambda_.1} parent=67 // pred_check
          %p406 = pneg %p43
        $region70: #{_lambda_.1} parent=67 // pred_check_branch
          %408 = sbr.rel (%p406) target = $region72
        $region71: #{_lambda_.1} parent=67 // pred_region
          %s409 = smul.u32 32, %s23
          %p410 = scmp.lt.s32.totalorder %s409, 63
          %s411 = scalar_select %p410, %s409, 63
          %s412 = smul.addr %s411, 2
          %s413 = smul.addr %s412, 8
          %s414 = scalar_lea.vmem %s0, %s413
          %s415 = smul.u32 32, %s23
        $region72: #{_lambda_.1} parent=67 // pred_fallthru
          _
      $region68: #{_lambda_.1} parent=5 // pred_fallthru
        _
      %p416 = scmp.le.s32.totalorder 1, %s23
      %p417 = scmp.lt.s32.totalorder %s23, 3
      %p418 = pnand %p416, %p417
      %p419 = pneg %p418
      // Predicated region
      $region73: #{_lambda_.1} parent=5 // pred_check
        _
      $region74: #{_lambda_.1} parent=5 // pred_check_branch
        %421 = sbr.rel (%p418) target = $region76
      $region75: #{_lambda_.1} parent=5 // pred_region
        %s422 = ssub.s32 %s23, 1
        %s423 = smul.u32 32, %s28
        %p424 = scmp.lt.s32.totalorder %s423, 63
        %s425 = scalar_select %p424, %s423, 63
        %s426 = smul.addr %s425, 2
        %s427 = smul.addr %s426, 8
        %s428 = scalar_lea.vmem %s0, %s427
        %p429 = pneg %p49
        %p430 = pneg %p46
        %p431 = pneg %p70
        %p432 = pneg %p67
        %p433 = pneg %p91
        %p434 = pneg %p88
        %p435 = pneg %p112
        %p436 = pneg %p109
        %p437 = pneg %p133
        %p438 = pneg %p130
        %p439 = pneg %p154
        %p440 = pneg %p151
        %p441 = pneg %p175
        %p442 = pneg %p172
        %p443 = pneg %p196
        %p444 = pneg %p193
        %p445 = pneg %p217
        %p446 = pneg %p214
        %p447 = pneg %p238
        %p448 = pneg %p235
        %p449 = pneg %p259
        %p450 = pneg %p256
        %p451 = pneg %p280
        %p452 = pneg %p277
        %p453 = pneg %p301
        %p454 = pneg %p298
        %p455 = pneg %p322
        %p456 = pneg %p319
        %p457 = pneg %p348
        %p458 = pneg %p345
        %s459 = sand.u32 %s335, 1
        %s460 = scalar_lea.sflag [#allocation3], %s459
        %s461 = sand.u32 %s335, 1
        %s462 = smul.addr %s461, 8
        %s463 = scalar_lea.vmem [#allocation2], %s462
        %s464 = smul.u32 32, %s28
        %p465 = scmp.lt.s32.totalorder %s464, 63
        %s466 = scalar_select %p465, %s464, 63
        %s467 = smul.addr %s466, 2
        %s468 = smul.addr %s467, 8
        %s469 = scalar_lea.vmem %s0, %s468
        %s470 = smul.u32 32, %s28
        %v471 = vld [vmem:[%s469] sm:$0xff]
        %v472 = vld [vmem:[%s469 + $0x8] sm:$0xff]
        %v473 = vld [vmem:[%s469 + $0x10] sm:$0xff]
        %v474 = vld [vmem:[%s469 + $0x18] sm:$0xff]
        %v475 = vld [vmem:[%s469 + $0x20] sm:$0xff]
        %v476 = vld [vmem:[%s469 + $0x28] sm:$0xff]
        %v477 = vld [vmem:[%s469 + $0x30] sm:$0xff]
        %v478 = vld [vmem:[%s469 + $0x38] sm:$0xff]
        %v479 = vld [vmem:[%s469 + $0x40] sm:$0xff]
        %v480 = vld [vmem:[%s469 + $0x48] sm:$0xff]
        %v481 = vld [vmem:[%s469 + $0x50] sm:$0xff]
        %v482 = vld [vmem:[%s469 + $0x58] sm:$0xff]
        %v483 = vld [vmem:[%s469 + $0x60] sm:$0xff]
        %v484 = vld [vmem:[%s469 + $0x68] sm:$0xff]
        %v485 = vld [vmem:[%s469 + $0x70] sm:$0xff]
        %v486 = vld [vmem:[%s469 + $0x78] sm:$0xff]
        %v487 = vld [vmem:[%s469 + $0x80] sm:$0xff]
        %v488 = vld [vmem:[%s469 + $0x88] sm:$0xff]
        %v489 = vld [vmem:[%s469 + $0x90] sm:$0xff]
        %v490 = vld [vmem:[%s469 + $0x98] sm:$0xff]
        %v491 = vld [vmem:[%s469 + $0xa0] sm:$0xff]
        %v492 = vld [vmem:[%s469 + $0xa8] sm:$0xff]
        %v493 = vld [vmem:[%s469 + $0xb0] sm:$0xff]
        %v494 = vld [vmem:[%s469 + $0xb8] sm:$0xff]
        %v495 = vld [vmem:[%s469 + $0xc0] sm:$0xff]
        %v496 = vld [vmem:[%s469 + $0xc8] sm:$0xff]
        %v497 = vld [vmem:[%s469 + $0xd0] sm:$0xff]
        %v498 = vld [vmem:[%s469 + $0xd8] sm:$0xff]
        %v499 = vld [vmem:[%s469 + $0xe0] sm:$0xff]
        %v500 = vld [vmem:[%s469 + $0xe8] sm:$0xff]
        %v501 = vld [vmem:[%s469 + $0xf0] sm:$0xff]
        %v502 = vld [vmem:[%s469 + $0xf8] sm:$0xff]
        %v503 = vld [vmem:[%s469 + $0x100] sm:$0xff]
        %v504 = vld [vmem:[%s469 + $0x108] sm:$0xff]
        %v505 = vld [vmem:[%s469 + $0x110] sm:$0xff]
        %v506 = vld [vmem:[%s469 + $0x118] sm:$0xff]
        %v507 = vld [vmem:[%s469 + $0x120] sm:$0xff]
        %v508 = vld [vmem:[%s469 + $0x128] sm:$0xff]
        %v509 = vld [vmem:[%s469 + $0x130] sm:$0xff]
        %v510 = vld [vmem:[%s469 + $0x138] sm:$0xff]
        %v511 = vld [vmem:[%s469 + $0x140] sm:$0xff]
        %v512 = vld [vmem:[%s469 + $0x148] sm:$0xff]
        %v513 = vld [vmem:[%s469 + $0x150] sm:$0xff]
        %v514 = vld [vmem:[%s469 + $0x158] sm:$0xff]
        %v515 = vld [vmem:[%s469 + $0x160] sm:$0xff]
        %v516 = vld [vmem:[%s469 + $0x168] sm:$0xff]
        %v517 = vld [vmem:[%s469 + $0x170] sm:$0xff]
        %v518 = vld [vmem:[%s469 + $0x178] sm:$0xff]
        %v519 = vld [vmem:[%s469 + $0x180] sm:$0xff]
        %v520 = vld [vmem:[%s469 + $0x188] sm:$0xff]
        %v521 = vld [vmem:[%s469 + $0x190] sm:$0xff]
        %v522 = vld [vmem:[%s469 + $0x198] sm:$0xff]
        %v523 = vld [vmem:[%s469 + $0x1a0] sm:$0xff]
        %v524 = vld [vmem:[%s469 + $0x1a8] sm:$0xff]
        %v525 = vld [vmem:[%s469 + $0x1b0] sm:$0xff]
        %v526 = vld [vmem:[%s469 + $0x1b8] sm:$0xff]
        %v527 = vld [vmem:[%s469 + $0x1c0] sm:$0xff]
        %v528 = vld [vmem:[%s469 + $0x1c8] sm:$0xff]
        %v529 = vld [vmem:[%s469 + $0x1d0] sm:$0xff]
        %v530 = vld [vmem:[%s469 + $0x1d8] sm:$0xff]
        %v531 = vld [vmem:[%s469 + $0x1e0] sm:$0xff]
        %v532 = vld [vmem:[%s469 + $0x1e8] sm:$0xff]
        %v533 = vld [vmem:[%s469 + $0x1f0] sm:$0xff]
        %v534 = vld [vmem:[%s469 + $0x1f8] sm:$0xff]
        %v535 = vld [vmem:[%s1] sm:$0xff]
        %v536 = vld [vmem:[%s1 + $0x8] sm:$0xff]
        %v537 = vld [vmem:[%s1 + $0x10] sm:$0xff]
        %v538 = vld [vmem:[%s1 + $0x18] sm:$0xff]
        %v539 = vld [vmem:[%s1 + $0x20] sm:$0xff]
        %v540 = vld [vmem:[%s1 + $0x28] sm:$0xff]
        %v541 = vld [vmem:[%s1 + $0x30] sm:$0xff]
        %v542 = vld [vmem:[%s1 + $0x38] sm:$0xff]
        %v543 = vld [vmem:[%s1 + $0x40] sm:$0xff]
        %v544 = vld [vmem:[%s1 + $0x48] sm:$0xff]
        %v545 = vld [vmem:[%s1 + $0x50] sm:$0xff]
        %v546 = vld [vmem:[%s1 + $0x58] sm:$0xff]
        %v547 = vld [vmem:[%s1 + $0x60] sm:$0xff]
        %v548 = vld [vmem:[%s1 + $0x68] sm:$0xff]
        %v549 = vld [vmem:[%s1 + $0x70] sm:$0xff]
        %v550 = vld [vmem:[%s1 + $0x78] sm:$0xff]
        %v551 = vld [vmem:[%s1 + $0x80] sm:$0xff]
        %v552 = vld [vmem:[%s1 + $0x88] sm:$0xff]
        %v553 = vld [vmem:[%s1 + $0x90] sm:$0xff]
        %v554 = vld [vmem:[%s1 + $0x98] sm:$0xff]
        %v555 = vld [vmem:[%s1 + $0xa0] sm:$0xff]
        %v556 = vld [vmem:[%s1 + $0xa8] sm:$0xff]
        %v557 = vld [vmem:[%s1 + $0xb0] sm:$0xff]
        %v558 = vld [vmem:[%s1 + $0xb8] sm:$0xff]
        %v559 = vld [vmem:[%s1 + $0xc0] sm:$0xff]
        %v560 = vld [vmem:[%s1 + $0xc8] sm:$0xff]
        %v561 = vld [vmem:[%s1 + $0xd0] sm:$0xff]
        %v562 = vld [vmem:[%s1 + $0xd8] sm:$0xff]
        %v563 = vld [vmem:[%s1 + $0xe0] sm:$0xff]
        %v564 = vld [vmem:[%s1 + $0xe8] sm:$0xff]
        %v565 = vld [vmem:[%s1 + $0xf0] sm:$0xff]
        %v566 = vld [vmem:[%s1 + $0xf8] sm:$0xff]
        %v567 = vld [vmem:[%s1 + $0x100] sm:$0xff]
        %v568 = vld [vmem:[%s1 + $0x108] sm:$0xff]
        %v569 = vld [vmem:[%s1 + $0x110] sm:$0xff]
        %v570 = vld [vmem:[%s1 + $0x118] sm:$0xff]
        %v571 = vld [vmem:[%s1 + $0x120] sm:$0xff]
        %v572 = vld [vmem:[%s1 + $0x128] sm:$0xff]
        %v573 = vld [vmem:[%s1 + $0x130] sm:$0xff]
        %v574 = vld [vmem:[%s1 + $0x138] sm:$0xff]
        %v575 = vld [vmem:[%s2] sm:$0x3]
        %v577 = vperm.slane %v575, 0
        %v578 = vperm.slane %v575, 1
        %vm581 = vcmask 261120
        %v583 = vsel %vm581, %v472, 0
        %v586 = vsel %vm581, %v474, 0
        %v589 = vsel %vm581, %v476, 0
        %v592 = vsel %vm581, %v478, 0
        %v595 = vsel %vm581, %v480, 0
        %v598 = vsel %vm581, %v482, 0
        %v601 = vsel %vm581, %v484, 0
        %v604 = vsel %vm581, %v486, 0
        %v607 = vsel %vm581, %v488, 0
        %v610 = vsel %vm581, %v490, 0
        %v613 = vsel %vm581, %v492, 0
        %v616 = vsel %vm581, %v494, 0
        %v619 = vsel %vm581, %v496, 0
        %v622 = vsel %vm581, %v498, 0
        %v625 = vsel %vm581, %v500, 0
        %v628 = vsel %vm581, %v502, 0
        %v631 = vsel %vm581, %v504, 0
        %v634 = vsel %vm581, %v506, 0
        %v637 = vsel %vm581, %v508, 0
        %v640 = vsel %vm581, %v510, 0
        %v643 = vsel %vm581, %v512, 0
        %v646 = vsel %vm581, %v514, 0
        %v649 = vsel %vm581, %v516, 0
        %v652 = vsel %vm581, %v518, 0
        %v655 = vsel %vm581, %v520, 0
        %v658 = vsel %vm581, %v522, 0
        %v661 = vsel %vm581, %v524, 0
        %v664 = vsel %vm581, %v526, 0
        %v667 = vsel %vm581, %v528, 0
        %v670 = vsel %vm581, %v530, 0
        %v673 = vsel %vm581, %v532, 0
        %v676 = vsel %vm581, %v534, 0
        %678 = vmatpush.msra.mxu0 %v565
        %679 = vmatpush.msra.mxu0 %v563
        %680 = vmatpush.msra.mxu0 %v561
        %681 = vmatpush.msra.mxu0 %v559
        %682 = vmatpush.msra.mxu0 %v557
        %683 = vmatpush.msra.mxu0 %v555
        %684 = vmatpush.msra.mxu0 %v553
        %685 = vmatpush.msra.mxu0 %v551
        %686 = vmatpush.msra.mxu0 %v549
        %687 = vmatpush.msra.mxu0 %v547
        %688 = vmatpush.msra.mxu0 %v545
        %689 = vmatpush.msra.mxu0 %v543
        %690 = vmatpush.msra.mxu0 %v541
        %691 = vmatpush.msra.mxu0 %v539
        %692 = vmatpush.msra.mxu0 %v537
        %693 = vmatpush.msra.mxu0 %v535
        %694 = vmatmul.f32.gmra.mxu0 %v471
        %v695 = vpop.f32.mrf.mxu0
        %v696 = vadd.f32 %v577, %v695
        %697 = vmatmul.f32.gmra.mxu0 %v473
        %v698 = vpop.f32.mrf.mxu0
        %v699 = vadd.f32 %v577, %v698
        %700 = vmatmul.f32.gmra.mxu0 %v475
        %v701 = vpop.f32.mrf.mxu0
        %v702 = vadd.f32 %v577, %v701
        %703 = vmatmul.f32.gmra.mxu0 %v477
        %v704 = vpop.f32.mrf.mxu0
        %v705 = vadd.f32 %v577, %v704
        %706 = vmatmul.f32.gmra.mxu0 %v479
        %v707 = vpop.f32.mrf.mxu0
        %v708 = vadd.f32 %v577, %v707
        %709 = vmatmul.f32.gmra.mxu0 %v481
        %v710 = vpop.f32.mrf.mxu0
        %v711 = vadd.f32 %v577, %v710
        %712 = vmatmul.f32.gmra.mxu0 %v483
        %v713 = vpop.f32.mrf.mxu0
        %v714 = vadd.f32 %v577, %v713
        %715 = vmatmul.f32.gmra.mxu0 %v485
        %v716 = vpop.f32.mrf.mxu0
        %v717 = vadd.f32 %v577, %v716
        %718 = vmatmul.f32.gmra.mxu0 %v487
        %v719 = vpop.f32.mrf.mxu0
        %v720 = vadd.f32 %v577, %v719
        %721 = vmatmul.f32.gmra.mxu0 %v489
        %v722 = vpop.f32.mrf.mxu0
        %v723 = vadd.f32 %v577, %v722
        %724 = vmatmul.f32.gmra.mxu0 %v491
        %v725 = vpop.f32.mrf.mxu0
        %v726 = vadd.f32 %v577, %v725
        %727 = vmatmul.f32.gmra.mxu0 %v493
        %v728 = vpop.f32.mrf.mxu0
        %v729 = vadd.f32 %v577, %v728
        %730 = vmatmul.f32.gmra.mxu0 %v495
        %v731 = vpop.f32.mrf.mxu0
        %v732 = vadd.f32 %v577, %v731
        %733 = vmatmul.f32.gmra.mxu0 %v497
        %v734 = vpop.f32.mrf.mxu0
        %v735 = vadd.f32 %v577, %v734
        %736 = vmatmul.f32.gmra.mxu0 %v499
        %v737 = vpop.f32.mrf.mxu0
        %v738 = vadd.f32 %v577, %v737
        %739 = vmatmul.f32.gmra.mxu0 %v501
        %v740 = vpop.f32.mrf.mxu0
        %v741 = vadd.f32 %v577, %v740
        %742 = vmatmul.f32.gmra.mxu0 %v503
        %v743 = vpop.f32.mrf.mxu0
        %v744 = vadd.f32 %v577, %v743
        %745 = vmatmul.f32.gmra.mxu0 %v505
        %v746 = vpop.f32.mrf.mxu0
        %v747 = vadd.f32 %v577, %v746
        %748 = vmatmul.f32.gmra.mxu0 %v507
        %v749 = vpop.f32.mrf.mxu0
        %v750 = vadd.f32 %v577, %v749
        %751 = vmatmul.f32.gmra.mxu0 %v509
        %v752 = vpop.f32.mrf.mxu0
        %v753 = vadd.f32 %v577, %v752
        %754 = vmatmul.f32.gmra.mxu0 %v511
        %v755 = vpop.f32.mrf.mxu0
        %v756 = vadd.f32 %v577, %v755
        %757 = vmatmul.f32.gmra.mxu0 %v513
        %v758 = vpop.f32.mrf.mxu0
        %v759 = vadd.f32 %v577, %v758
        %760 = vmatmul.f32.gmra.mxu0 %v515
        %v761 = vpop.f32.mrf.mxu0
        %v762 = vadd.f32 %v577, %v761
        %763 = vmatmul.f32.gmra.mxu0 %v517
        %v764 = vpop.f32.mrf.mxu0
        %v765 = vadd.f32 %v577, %v764
        %766 = vmatmul.f32.gmra.mxu0 %v519
        %v767 = vpop.f32.mrf.mxu0
        %v768 = vadd.f32 %v577, %v767
        %769 = vmatmul.f32.gmra.mxu0 %v521
        %v770 = vpop.f32.mrf.mxu0
        %v771 = vadd.f32 %v577, %v770
        %772 = vmatmul.f32.gmra.mxu0 %v523
        %v773 = vpop.f32.mrf.mxu0
        %v774 = vadd.f32 %v577, %v773
        %775 = vmatmul.f32.gmra.mxu0 %v525
        %v776 = vpop.f32.mrf.mxu0
        %v777 = vadd.f32 %v577, %v776
        %778 = vmatmul.f32.gmra.mxu0 %v527
        %v779 = vpop.f32.mrf.mxu0
        %v780 = vadd.f32 %v577, %v779
        %781 = vmatmul.f32.gmra.mxu0 %v529
        %v782 = vpop.f32.mrf.mxu0
        %v783 = vadd.f32 %v577, %v782
        %784 = vmatmul.f32.gmra.mxu0 %v531
        %v785 = vpop.f32.mrf.mxu0
        %v786 = vadd.f32 %v577, %v785
        %787 = vmatmul.f32.gmra.mxu0 %v533
        %v788 = vpop.f32.mrf.mxu0
        %v789 = vadd.f32 %v577, %v788
        %790 = vdwg.mxu0
        %791 = vmatpush.msra.mxu0 0.0
        %792 = vmatpush.msra.mxu0 0.0
        %793 = vmatpush.msra.mxu0 0.0
        %794 = vmatpush.msra.mxu0 0.0
        %795 = vmatpush.msra.mxu0 0.0
        %796 = vmatpush.msra.mxu0 0.0
        %797 = vmatpush.msra.mxu0 0.0
        %798 = vmatpush.msra.mxu0 0.0
        %799 = vmatpush.msra.mxu0 0.0
        %800 = vmatpush.msra.mxu0 0.0
        %801 = vmatpush.msra.mxu0 0.0
        %802 = vmatpush.msra.mxu0 0.0
        %803 = vmatpush.msra.mxu0 %v573
        %804 = vmatpush.msra.mxu0 %v571
        %805 = vmatpush.msra.mxu0 %v569
        %806 = vmatpush.msra.mxu0 %v567
        %807 = vmatmul.f32.gmra.mxu0 %v583
        %v808 = vpop.f32.mrf.mxu0
        %v809 = vadd.f32 %v696, %v808
        %810 = vmatmul.f32.gmra.mxu0 %v586
        %v811 = vpop.f32.mrf.mxu0
        %v812 = vadd.f32 %v699, %v811
        %813 = vmatmul.f32.gmra.mxu0 %v589
        %v814 = vpop.f32.mrf.mxu0
        %v815 = vadd.f32 %v702, %v814
        %816 = vmatmul.f32.gmra.mxu0 %v592
        %v817 = vpop.f32.mrf.mxu0
        %v818 = vadd.f32 %v705, %v817
        %819 = vmatmul.f32.gmra.mxu0 %v595
        %v820 = vpop.f32.mrf.mxu0
        %v821 = vadd.f32 %v708, %v820
        %822 = vmatmul.f32.gmra.mxu0 %v598
        %v823 = vpop.f32.mrf.mxu0
        %v824 = vadd.f32 %v711, %v823
        %825 = vmatmul.f32.gmra.mxu0 %v601
        %v826 = vpop.f32.mrf.mxu0
        %v827 = vadd.f32 %v714, %v826
        %828 = vmatmul.f32.gmra.mxu0 %v604
        %v829 = vpop.f32.mrf.mxu0
        %v830 = vadd.f32 %v717, %v829
        %831 = vmatmul.f32.gmra.mxu0 %v607
        %v832 = vpop.f32.mrf.mxu0
        %v833 = vadd.f32 %v720, %v832
        %834 = vmatmul.f32.gmra.mxu0 %v610
        %v835 = vpop.f32.mrf.mxu0
        %v836 = vadd.f32 %v723, %v835
        %837 = vmatmul.f32.gmra.mxu0 %v613
        %v838 = vpop.f32.mrf.mxu0
        %v839 = vadd.f32 %v726, %v838
        %840 = vmatmul.f32.gmra.mxu0 %v616
        %v841 = vpop.f32.mrf.mxu0
        %v842 = vadd.f32 %v729, %v841
        %843 = vmatmul.f32.gmra.mxu0 %v619
        %v844 = vpop.f32.mrf.mxu0
        %v845 = vadd.f32 %v732, %v844
        %846 = vmatmul.f32.gmra.mxu0 %v622
        %v847 = vpop.f32.mrf.mxu0
        %v848 = vadd.f32 %v735, %v847
        %849 = vmatmul.f32.gmra.mxu0 %v625
        %v850 = vpop.f32.mrf.mxu0
        %v851 = vadd.f32 %v738, %v850
        %852 = vmatmul.f32.gmra.mxu0 %v628
        %v853 = vpop.f32.mrf.mxu0
        %v854 = vadd.f32 %v741, %v853
        %855 = vmatmul.f32.gmra.mxu0 %v631
        %v856 = vpop.f32.mrf.mxu0
        %v857 = vadd.f32 %v744, %v856
        %858 = vmatmul.f32.gmra.mxu0 %v634
        %v859 = vpop.f32.mrf.mxu0
        %v860 = vadd.f32 %v747, %v859
        %861 = vmatmul.f32.gmra.mxu0 %v637
        %v862 = vpop.f32.mrf.mxu0
        %v863 = vadd.f32 %v750, %v862
        %864 = vmatmul.f32.gmra.mxu0 %v640
        %v865 = vpop.f32.mrf.mxu0
        %v866 = vadd.f32 %v753, %v865
        %867 = vmatmul.f32.gmra.mxu0 %v643
        %v868 = vpop.f32.mrf.mxu0
        %v869 = vadd.f32 %v756, %v868
        %870 = vmatmul.f32.gmra.mxu0 %v646
        %v871 = vpop.f32.mrf.mxu0
        %v872 = vadd.f32 %v759, %v871
        %873 = vmatmul.f32.gmra.mxu0 %v649
        %v874 = vpop.f32.mrf.mxu0
        %v875 = vadd.f32 %v762, %v874
        %876 = vmatmul.f32.gmra.mxu0 %v652
        %v877 = vpop.f32.mrf.mxu0
        %v878 = vadd.f32 %v765, %v877
        %879 = vmatmul.f32.gmra.mxu0 %v655
        %v880 = vpop.f32.mrf.mxu0
        %v881 = vadd.f32 %v768, %v880
        %882 = vmatmul.f32.gmra.mxu0 %v658
        %v883 = vpop.f32.mrf.mxu0
        %v884 = vadd.f32 %v771, %v883
        %885 = vmatmul.f32.gmra.mxu0 %v661
        %v886 = vpop.f32.mrf.mxu0
        %v887 = vadd.f32 %v774, %v886
        %888 = vmatmul.f32.gmra.mxu0 %v664
        %v889 = vpop.f32.mrf.mxu0
        %v890 = vadd.f32 %v777, %v889
        %891 = vmatmul.f32.gmra.mxu0 %v667
        %v892 = vpop.f32.mrf.mxu0
        %v893 = vadd.f32 %v780, %v892
        %894 = vmatmul.f32.gmra.mxu0 %v670
        %v895 = vpop.f32.mrf.mxu0
        %v896 = vadd.f32 %v783, %v895
        %897 = vmatmul.f32.gmra.mxu0 %v673
        %v898 = vpop.f32.mrf.mxu0
        %v899 = vadd.f32 %v786, %v898
        %900 = vmatmul.f32.gmra.mxu0 %v676
        %v901 = vpop.f32.mrf.mxu0
        %v902 = vadd.f32 %v789, %v901
        %903 = vdwg.mxu0
        %904 = vmatpush.msra.mxu0 %v566
        %905 = vmatpush.msra.mxu0 %v564
        %906 = vmatpush.msra.mxu0 %v562
        %907 = vmatpush.msra.mxu0 %v560
        %908 = vmatpush.msra.mxu0 %v558
        %909 = vmatpush.msra.mxu0 %v556
        %910 = vmatpush.msra.mxu0 %v554
        %911 = vmatpush.msra.mxu0 %v552
        %912 = vmatpush.msra.mxu0 %v550
        %913 = vmatpush.msra.mxu0 %v548
        %914 = vmatpush.msra.mxu0 %v546
        %915 = vmatpush.msra.mxu0 %v544
        %916 = vmatpush.msra.mxu0 %v542
        %917 = vmatpush.msra.mxu0 %v540
        %918 = vmatpush.msra.mxu0 %v538
        %919 = vmatpush.msra.mxu0 %v536
        %920 = vmatmul.f32.gmra.mxu0 %v471
        %v921 = vpop.f32.mrf.mxu0
        %v922 = vadd.f32 %v578, %v921
        %923 = vmatmul.f32.gmra.mxu0 %v473
        %v924 = vpop.f32.mrf.mxu0
        %v925 = vadd.f32 %v578, %v924
        %926 = vmatmul.f32.gmra.mxu0 %v475
        %v927 = vpop.f32.mrf.mxu0
        %v928 = vadd.f32 %v578, %v927
        %929 = vmatmul.f32.gmra.mxu0 %v477
        %v930 = vpop.f32.mrf.mxu0
        %v931 = vadd.f32 %v578, %v930
        %932 = vmatmul.f32.gmra.mxu0 %v479
        %v933 = vpop.f32.mrf.mxu0
        %v934 = vadd.f32 %v578, %v933
        %935 = vmatmul.f32.gmra.mxu0 %v481
        %v936 = vpop.f32.mrf.mxu0
        %v937 = vadd.f32 %v578, %v936
        %938 = vmatmul.f32.gmra.mxu0 %v483
        %v939 = vpop.f32.mrf.mxu0
        %v940 = vadd.f32 %v578, %v939
        %941 = vmatmul.f32.gmra.mxu0 %v485
        %v942 = vpop.f32.mrf.mxu0
        %v943 = vadd.f32 %v578, %v942
        %944 = vmatmul.f32.gmra.mxu0 %v487
        %v945 = vpop.f32.mrf.mxu0
        %v946 = vadd.f32 %v578, %v945
        %947 = vmatmul.f32.gmra.mxu0 %v489
        %v948 = vpop.f32.mrf.mxu0
        %v949 = vadd.f32 %v578, %v948
        %950 = vmatmul.f32.gmra.mxu0 %v491
        %v951 = vpop.f32.mrf.mxu0
        %v952 = vadd.f32 %v578, %v951
        %953 = vmatmul.f32.gmra.mxu0 %v493
        %v954 = vpop.f32.mrf.mxu0
        %v955 = vadd.f32 %v578, %v954
        %956 = vmatmul.f32.gmra.mxu0 %v495
        %v957 = vpop.f32.mrf.mxu0
        %v958 = vadd.f32 %v578, %v957
        %959 = vmatmul.f32.gmra.mxu0 %v497
        %v960 = vpop.f32.mrf.mxu0
        %v961 = vadd.f32 %v578, %v960
        %962 = vmatmul.f32.gmra.mxu0 %v499
        %v963 = vpop.f32.mrf.mxu0
        %v964 = vadd.f32 %v578, %v963
        %965 = vmatmul.f32.gmra.mxu0 %v501
        %v966 = vpop.f32.mrf.mxu0
        %v967 = vadd.f32 %v578, %v966
        %968 = vmatmul.f32.gmra.mxu0 %v503
        %v969 = vpop.f32.mrf.mxu0
        %v970 = vadd.f32 %v578, %v969
        %971 = vmatmul.f32.gmra.mxu0 %v505
        %v972 = vpop.f32.mrf.mxu0
        %v973 = vadd.f32 %v578, %v972
        %974 = vmatmul.f32.gmra.mxu0 %v507
        %v975 = vpop.f32.mrf.mxu0
        %v976 = vadd.f32 %v578, %v975
        %977 = vmatmul.f32.gmra.mxu0 %v509
        %v978 = vpop.f32.mrf.mxu0
        %v979 = vadd.f32 %v578, %v978
        %980 = vmatmul.f32.gmra.mxu0 %v511
        %v981 = vpop.f32.mrf.mxu0
        %v982 = vadd.f32 %v578, %v981
        %983 = vmatmul.f32.gmra.mxu0 %v513
        %v984 = vpop.f32.mrf.mxu0
        %v985 = vadd.f32 %v578, %v984
        %986 = vmatmul.f32.gmra.mxu0 %v515
        %v987 = vpop.f32.mrf.mxu0
        %v988 = vadd.f32 %v578, %v987
        %989 = vmatmul.f32.gmra.mxu0 %v517
        %v990 = vpop.f32.mrf.mxu0
        %v991 = vadd.f32 %v578, %v990
        %992 = vmatmul.f32.gmra.mxu0 %v519
        %v993 = vpop.f32.mrf.mxu0
        %v994 = vadd.f32 %v578, %v993
        %995 = vmatmul.f32.gmra.mxu0 %v521
        %v996 = vpop.f32.mrf.mxu0
        %v997 = vadd.f32 %v578, %v996
        %998 = vmatmul.f32.gmra.mxu0 %v523
        %v999 = vpop.f32.mrf.mxu0
        %v1000 = vadd.f32 %v578, %v999
        %1001 = vmatmul.f32.gmra.mxu0 %v525
        %v1002 = vpop.f32.mrf.mxu0
        %v1003 = vadd.f32 %v578, %v1002
        %1004 = vmatmul.f32.gmra.mxu0 %v527
        %v1005 = vpop.f32.mrf.mxu0
        %v1006 = vadd.f32 %v578, %v1005
        %1007 = vmatmul.f32.gmra.mxu0 %v529
        %v1008 = vpop.f32.mrf.mxu0
        %v1009 = vadd.f32 %v578, %v1008
        %1010 = vmatmul.f32.gmra.mxu0 %v531
        %v1011 = vpop.f32.mrf.mxu0
        %v1012 = vadd.f32 %v578, %v1011
        %1013 = vmatmul.f32.gmra.mxu0 %v533
        %v1014 = vpop.f32.mrf.mxu0
        %v1015 = vadd.f32 %v578, %v1014
        %1016 = vdwg.mxu0
        %1017 = vmatpush.msra.mxu0 0.0
        %1018 = vmatpush.msra.mxu0 0.0
        %1019 = vmatpush.msra.mxu0 0.0
        %1020 = vmatpush.msra.mxu0 0.0
        %1021 = vmatpush.msra.mxu0 0.0
        %1022 = vmatpush.msra.mxu0 0.0
        %1023 = vmatpush.msra.mxu0 0.0
        %1024 = vmatpush.msra.mxu0 0.0
        %1025 = vmatpush.msra.mxu0 0.0
        %1026 = vmatpush.msra.mxu0 0.0
        %1027 = vmatpush.msra.mxu0 0.0
        %1028 = vmatpush.msra.mxu0 0.0
        %1029 = vmatpush.msra.mxu0 %v574
        %1030 = vmatpush.msra.mxu0 %v572
        %1031 = vmatpush.msra.mxu0 %v570
        %1032 = vmatpush.msra.mxu0 %v568
        %1033 = vmatmul.f32.gmra.mxu0 %v583
        %v1034 = vpop.f32.mrf.mxu0
        %v1035 = vadd.f32 %v922, %v1034
        %1036 = vmatmul.f32.gmra.mxu0 %v586
        %v1037 = vpop.f32.mrf.mxu0
        %v1038 = vadd.f32 %v925, %v1037
        %1039 = vmatmul.f32.gmra.mxu0 %v589
        %v1040 = vpop.f32.mrf.mxu0
        %v1041 = vadd.f32 %v928, %v1040
        %1042 = vmatmul.f32.gmra.mxu0 %v592
        %v1043 = vpop.f32.mrf.mxu0
        %v1044 = vadd.f32 %v931, %v1043
        %1045 = vmatmul.f32.gmra.mxu0 %v595
        %v1046 = vpop.f32.mrf.mxu0
        %v1047 = vadd.f32 %v934, %v1046
        %1048 = vmatmul.f32.gmra.mxu0 %v598
        %v1049 = vpop.f32.mrf.mxu0
        %v1050 = vadd.f32 %v937, %v1049
        %1051 = vmatmul.f32.gmra.mxu0 %v601
        %v1052 = vpop.f32.mrf.mxu0
        %v1053 = vadd.f32 %v940, %v1052
        %1054 = vmatmul.f32.gmra.mxu0 %v604
        %v1055 = vpop.f32.mrf.mxu0
        %v1056 = vadd.f32 %v943, %v1055
        %1057 = vmatmul.f32.gmra.mxu0 %v607
        %v1058 = vpop.f32.mrf.mxu0
        %v1059 = vadd.f32 %v946, %v1058
        %1060 = vmatmul.f32.gmra.mxu0 %v610
        %v1061 = vpop.f32.mrf.mxu0
        %v1062 = vadd.f32 %v949, %v1061
        %1063 = vmatmul.f32.gmra.mxu0 %v613
        %v1064 = vpop.f32.mrf.mxu0
        %v1065 = vadd.f32 %v952, %v1064
        %1066 = vmatmul.f32.gmra.mxu0 %v616
        %v1067 = vpop.f32.mrf.mxu0
        %v1068 = vadd.f32 %v955, %v1067
        %1069 = vmatmul.f32.gmra.mxu0 %v619
        %v1070 = vpop.f32.mrf.mxu0
        %v1071 = vadd.f32 %v958, %v1070
        %1072 = vmatmul.f32.gmra.mxu0 %v622
        %v1073 = vpop.f32.mrf.mxu0
        %v1074 = vadd.f32 %v961, %v1073
        %1075 = vmatmul.f32.gmra.mxu0 %v625
        %v1076 = vpop.f32.mrf.mxu0
        %v1077 = vadd.f32 %v964, %v1076
        %1078 = vmatmul.f32.gmra.mxu0 %v628
        %v1079 = vpop.f32.mrf.mxu0
        %v1080 = vadd.f32 %v967, %v1079
        %1081 = vmatmul.f32.gmra.mxu0 %v631
        %v1082 = vpop.f32.mrf.mxu0
        %v1083 = vadd.f32 %v970, %v1082
        %1084 = vmatmul.f32.gmra.mxu0 %v634
        %v1085 = vpop.f32.mrf.mxu0
        %v1086 = vadd.f32 %v973, %v1085
        %1087 = vmatmul.f32.gmra.mxu0 %v637
        %v1088 = vpop.f32.mrf.mxu0
        %v1089 = vadd.f32 %v976, %v1088
        %1090 = vmatmul.f32.gmra.mxu0 %v640
        %v1091 = vpop.f32.mrf.mxu0
        %v1092 = vadd.f32 %v979, %v1091
        %1093 = vmatmul.f32.gmra.mxu0 %v643
        %v1094 = vpop.f32.mrf.mxu0
        %v1095 = vadd.f32 %v982, %v1094
        %1096 = vmatmul.f32.gmra.mxu0 %v646
        %v1097 = vpop.f32.mrf.mxu0
        %v1098 = vadd.f32 %v985, %v1097
        %1099 = vmatmul.f32.gmra.mxu0 %v649
        %v1100 = vpop.f32.mrf.mxu0
        %v1101 = vadd.f32 %v988, %v1100
        %1102 = vmatmul.f32.gmra.mxu0 %v652
        %v1103 = vpop.f32.mrf.mxu0
        %v1104 = vadd.f32 %v991, %v1103
        %1105 = vmatmul.f32.gmra.mxu0 %v655
        %v1106 = vpop.f32.mrf.mxu0
        %v1107 = vadd.f32 %v994, %v1106
        %1108 = vmatmul.f32.gmra.mxu0 %v658
        %v1109 = vpop.f32.mrf.mxu0
        %v1110 = vadd.f32 %v997, %v1109
        %1111 = vmatmul.f32.gmra.mxu0 %v661
        %v1112 = vpop.f32.mrf.mxu0
        %v1113 = vadd.f32 %v1000, %v1112
        %1114 = vmatmul.f32.gmra.mxu0 %v664
        %v1115 = vpop.f32.mrf.mxu0
        %v1116 = vadd.f32 %v1003, %v1115
        %1117 = vmatmul.f32.gmra.mxu0 %v667
        %v1118 = vpop.f32.mrf.mxu0
        %v1119 = vadd.f32 %v1006, %v1118
        %1120 = vmatmul.f32.gmra.mxu0 %v670
        %v1121 = vpop.f32.mrf.mxu0
        %v1122 = vadd.f32 %v1009, %v1121
        %1123 = vmatmul.f32.gmra.mxu0 %v673
        %v1124 = vpop.f32.mrf.mxu0
        %v1125 = vadd.f32 %v1012, %v1124
        %1126 = vmatmul.f32.gmra.mxu0 %v676
        %v1127 = vpop.f32.mrf.mxu0
        %v1128 = vadd.f32 %v1015, %v1127
        %1129 = vdwg.mxu0
        %v1130 = vmax.f32 %v809, 0.0
        %v1131 = vmax.f32 %v1035, 0.0
        %v1132 = vmax.f32 %v812, 0.0
        %v1133 = vmax.f32 %v1038, 0.0
        %v1134 = vmax.f32 %v815, 0.0
        %v1135 = vmax.f32 %v1041, 0.0
        %v1136 = vmax.f32 %v818, 0.0
        %v1137 = vmax.f32 %v1044, 0.0
        %v1138 = vmax.f32 %v821, 0.0
        %v1139 = vmax.f32 %v1047, 0.0
        %v1140 = vmax.f32 %v824, 0.0
        %v1141 = vmax.f32 %v1050, 0.0
        %v1142 = vmax.f32 %v827, 0.0
        %v1143 = vmax.f32 %v1053, 0.0
        %v1144 = vmax.f32 %v830, 0.0
        %v1145 = vmax.f32 %v1056, 0.0
        %v1146 = vmax.f32 %v833, 0.0
        %v1147 = vmax.f32 %v1059, 0.0
        %v1148 = vmax.f32 %v836, 0.0
        %v1149 = vmax.f32 %v1062, 0.0
        %v1150 = vmax.f32 %v839, 0.0
        %v1151 = vmax.f32 %v1065, 0.0
        %v1152 = vmax.f32 %v842, 0.0
        %v1153 = vmax.f32 %v1068, 0.0
        %v1154 = vmax.f32 %v845, 0.0
        %v1155 = vmax.f32 %v1071, 0.0
        %v1156 = vmax.f32 %v848, 0.0
        %v1157 = vmax.f32 %v1074, 0.0
        %v1158 = vmax.f32 %v851, 0.0
        %v1159 = vmax.f32 %v1077, 0.0
        %v1160 = vmax.f32 %v854, 0.0
        %v1161 = vmax.f32 %v1080, 0.0
        %v1162 = vmax.f32 %v857, 0.0
        %v1163 = vmax.f32 %v1083, 0.0
        %v1164 = vmax.f32 %v860, 0.0
        %v1165 = vmax.f32 %v1086, 0.0
        %v1166 = vmax.f32 %v863, 0.0
        %v1167 = vmax.f32 %v1089, 0.0
        %v1168 = vmax.f32 %v866, 0.0
        %v1169 = vmax.f32 %v1092, 0.0
        %v1170 = vmax.f32 %v869, 0.0
        %v1171 = vmax.f32 %v1095, 0.0
        %v1172 = vmax.f32 %v872, 0.0
        %v1173 = vmax.f32 %v1098, 0.0
        %v1174 = vmax.f32 %v875, 0.0
        %v1175 = vmax.f32 %v1101, 0.0
        %v1176 = vmax.f32 %v878, 0.0
        %v1177 = vmax.f32 %v1104, 0.0
        %v1178 = vmax.f32 %v881, 0.0
        %v1179 = vmax.f32 %v1107, 0.0
        %v1180 = vmax.f32 %v884, 0.0
        %v1181 = vmax.f32 %v1110, 0.0
        %v1182 = vmax.f32 %v887, 0.0
        %v1183 = vmax.f32 %v1113, 0.0
        %v1184 = vmax.f32 %v890, 0.0
        %v1185 = vmax.f32 %v1116, 0.0
        %v1186 = vmax.f32 %v893, 0.0
        %v1187 = vmax.f32 %v1119, 0.0
        %v1188 = vmax.f32 %v896, 0.0
        %v1189 = vmax.f32 %v1122, 0.0
        %v1190 = vmax.f32 %v899, 0.0
        %v1191 = vmax.f32 %v1125, 0.0
        %v1192 = vmax.f32 %v902, 0.0
        %v1193 = vmax.f32 %v1128, 0.0
        %v1194 = vld [vmem:[%s3] sm:$0xff]
        %v1195 = vld [vmem:[%s3 + $0x8] sm:$0xff]
        %v1196 = vld [vmem:[%s3 + $0x10] sm:$0xff]
        %v1197 = vld [vmem:[%s3 + $0x18] sm:$0xff]
        %v1198 = vld [vmem:[%s3 + $0x20] sm:$0xff]
        %v1199 = vld [vmem:[%s3 + $0x28] sm:$0xff]
        %v1200 = vld [vmem:[%s3 + $0x30] sm:$0xff]
        %v1201 = vld [vmem:[%s3 + $0x38] sm:$0xff]
        %v1202 = vld [vmem:[%s3 + $0x40] sm:$0xff]
        %v1203 = vld [vmem:[%s3 + $0x48] sm:$0xff]
        %v1204 = vld [vmem:[%s3 + $0x50] sm:$0xff]
        %v1205 = vld [vmem:[%s3 + $0x58] sm:$0xff]
        %v1206 = vld [vmem:[%s3 + $0x60] sm:$0xff]
        %v1207 = vld [vmem:[%s3 + $0x68] sm:$0xff]
        %v1208 = vld [vmem:[%s3 + $0x70] sm:$0xff]
        %v1209 = vld [vmem:[%s3 + $0x78] sm:$0xff]
        %v1210 = vld [vmem:[%s3 + $0x80] sm:$0xff]
        %v1211 = vld [vmem:[%s3 + $0x88] sm:$0xff]
        %v1212 = vld [vmem:[%s3 + $0x90] sm:$0xff]
        %v1213 = vld [vmem:[%s3 + $0x98] sm:$0xff]
        %v1214 = vld [vmem:[%s3 + $0xa0] sm:$0xff]
        %v1215 = vld [vmem:[%s3 + $0xa8] sm:$0xff]
        %v1216 = vld [vmem:[%s3 + $0xb0] sm:$0xff]
        %v1217 = vld [vmem:[%s3 + $0xb8] sm:$0xff]
        %v1218 = vld [vmem:[%s3 + $0xc0] sm:$0xff]
        %v1219 = vld [vmem:[%s3 + $0xc8] sm:$0xff]
        %v1220 = vld [vmem:[%s3 + $0xd0] sm:$0xff]
        %v1221 = vld [vmem:[%s3 + $0xd8] sm:$0xff]
        %v1222 = vld [vmem:[%s3 + $0xe0] sm:$0xff]
        %v1223 = vld [vmem:[%s3 + $0xe8] sm:$0xff]
        %v1224 = vld [vmem:[%s3 + $0xf0] sm:$0xff]
        %v1225 = vld [vmem:[%s3 + $0xf8] sm:$0xff]
        %v1226 = vld [vmem:[%s3 + $0x100] sm:$0xff]
        %v1227 = vld [vmem:[%s3 + $0x108] sm:$0xff]
        %1292 = vrot.lane.b32.xlu0 %v1130, 122
        %v1293 = vpop.permute.xlu0 %1292
        %1294 = vrot.lane.b32.xlu0 %v1131, 122
        %v1295 = vpop.permute.xlu0 %1294
        %1296 = vrot.lane.b32.xlu0 %v1132, 122
        %v1297 = vpop.permute.xlu0 %1296
        %1298 = vrot.lane.b32.xlu0 %v1133, 122
        %v1299 = vpop.permute.xlu0 %1298
        %1300 = vrot.lane.b32.xlu0 %v1134, 122
        %v1301 = vpop.permute.xlu0 %1300
        %1302 = vrot.lane.b32.xlu0 %v1135, 122
        %v1303 = vpop.permute.xlu0 %1302
        %1304 = vrot.lane.b32.xlu0 %v1136, 122
        %v1305 = vpop.permute.xlu0 %1304
        %1306 = vrot.lane.b32.xlu0 %v1137, 122
        %v1307 = vpop.permute.xlu0 %1306
        %1308 = vrot.lane.b32.xlu0 %v1138, 122
        %v1309 = vpop.permute.xlu0 %1308
        %1310 = vrot.lane.b32.xlu0 %v1139, 122
        %v1311 = vpop.permute.xlu0 %1310
        %1312 = vrot.lane.b32.xlu0 %v1140, 122
        %v1313 = vpop.permute.xlu0 %1312
        %1314 = vrot.lane.b32.xlu0 %v1141, 122
        %v1315 = vpop.permute.xlu0 %1314
        %1316 = vrot.lane.b32.xlu0 %v1142, 122
        %v1317 = vpop.permute.xlu0 %1316
        %1318 = vrot.lane.b32.xlu0 %v1143, 122
        %v1319 = vpop.permute.xlu0 %1318
        %1320 = vrot.lane.b32.xlu0 %v1144, 122
        %v1321 = vpop.permute.xlu0 %1320
        %1322 = vrot.lane.b32.xlu0 %v1145, 122
        %v1323 = vpop.permute.xlu0 %1322
        %1324 = vrot.lane.b32.xlu0 %v1146, 122
        %v1325 = vpop.permute.xlu0 %1324
        %1326 = vrot.lane.b32.xlu0 %v1147, 122
        %v1327 = vpop.permute.xlu0 %1326
        %1328 = vrot.lane.b32.xlu0 %v1148, 122
        %v1329 = vpop.permute.xlu0 %1328
        %1330 = vrot.lane.b32.xlu0 %v1149, 122
        %v1331 = vpop.permute.xlu0 %1330
        %1332 = vrot.lane.b32.xlu0 %v1150, 122
        %v1333 = vpop.permute.xlu0 %1332
        %1334 = vrot.lane.b32.xlu0 %v1151, 122
        %v1335 = vpop.permute.xlu0 %1334
        %1336 = vrot.lane.b32.xlu0 %v1152, 122
        %v1337 = vpop.permute.xlu0 %1336
        %1338 = vrot.lane.b32.xlu0 %v1153, 122
        %v1339 = vpop.permute.xlu0 %1338
        %1340 = vrot.lane.b32.xlu0 %v1154, 122
        %v1341 = vpop.permute.xlu0 %1340
        %1342 = vrot.lane.b32.xlu0 %v1155, 122
        %v1343 = vpop.permute.xlu0 %1342
        %1344 = vrot.lane.b32.xlu0 %v1156, 122
        %v1345 = vpop.permute.xlu0 %1344
        %1346 = vrot.lane.b32.xlu0 %v1157, 122
        %v1347 = vpop.permute.xlu0 %1346
        %1348 = vrot.lane.b32.xlu0 %v1158, 122
        %v1349 = vpop.permute.xlu0 %1348
        %1350 = vrot.lane.b32.xlu0 %v1159, 122
        %v1351 = vpop.permute.xlu0 %1350
        %1352 = vrot.lane.b32.xlu0 %v1160, 122
        %v1353 = vpop.permute.xlu0 %1352
        %1354 = vrot.lane.b32.xlu0 %v1161, 122
        %v1355 = vpop.permute.xlu0 %1354
        %1356 = vrot.lane.b32.xlu0 %v1162, 122
        %v1357 = vpop.permute.xlu0 %1356
        %1358 = vrot.lane.b32.xlu0 %v1163, 122
        %v1359 = vpop.permute.xlu0 %1358
        %1360 = vrot.lane.b32.xlu0 %v1164, 122
        %v1361 = vpop.permute.xlu0 %1360
        %1362 = vrot.lane.b32.xlu0 %v1165, 122
        %v1363 = vpop.permute.xlu0 %1362
        %1364 = vrot.lane.b32.xlu0 %v1166, 122
        %v1365 = vpop.permute.xlu0 %1364
        %1366 = vrot.lane.b32.xlu0 %v1167, 122
        %v1367 = vpop.permute.xlu0 %1366
        %1368 = vrot.lane.b32.xlu0 %v1168, 122
        %v1369 = vpop.permute.xlu0 %1368
        %1370 = vrot.lane.b32.xlu0 %v1169, 122
        %v1371 = vpop.permute.xlu0 %1370
        %1372 = vrot.lane.b32.xlu0 %v1170, 122
        %v1373 = vpop.permute.xlu0 %1372
        %1374 = vrot.lane.b32.xlu0 %v1171, 122
        %v1375 = vpop.permute.xlu0 %1374
        %1376 = vrot.lane.b32.xlu0 %v1172, 122
        %v1377 = vpop.permute.xlu0 %1376
        %1378 = vrot.lane.b32.xlu0 %v1173, 122
        %v1379 = vpop.permute.xlu0 %1378
        %1380 = vrot.lane.b32.xlu0 %v1174, 122
        %v1381 = vpop.permute.xlu0 %1380
        %1382 = vrot.lane.b32.xlu0 %v1175, 122
        %v1383 = vpop.permute.xlu0 %1382
        %1384 = vrot.lane.b32.xlu0 %v1176, 122
        %v1385 = vpop.permute.xlu0 %1384
        %1386 = vrot.lane.b32.xlu0 %v1177, 122
        %v1387 = vpop.permute.xlu0 %1386
        %1388 = vrot.lane.b32.xlu0 %v1178, 122
        %v1389 = vpop.permute.xlu0 %1388
        %1390 = vrot.lane.b32.xlu0 %v1179, 122
        %v1391 = vpop.permute.xlu0 %1390
        %1392 = vrot.lane.b32.xlu0 %v1180, 122
        %v1393 = vpop.permute.xlu0 %1392
        %1394 = vrot.lane.b32.xlu0 %v1181, 122
        %v1395 = vpop.permute.xlu0 %1394
        %1396 = vrot.lane.b32.xlu0 %v1182, 122
        %v1397 = vpop.permute.xlu0 %1396
        %1398 = vrot.lane.b32.xlu0 %v1183, 122
        %v1399 = vpop.permute.xlu0 %1398
        %1400 = vrot.lane.b32.xlu0 %v1184, 122
        %v1401 = vpop.permute.xlu0 %1400
        %1402 = vrot.lane.b32.xlu0 %v1185, 122
        %v1403 = vpop.permute.xlu0 %1402
        %1404 = vrot.lane.b32.xlu0 %v1186, 122
        %v1405 = vpop.permute.xlu0 %1404
        %1406 = vrot.lane.b32.xlu0 %v1187, 122
        %v1407 = vpop.permute.xlu0 %1406
        %1408 = vrot.lane.b32.xlu0 %v1188, 122
        %v1409 = vpop.permute.xlu0 %1408
        %1410 = vrot.lane.b32.xlu0 %v1189, 122
        %v1411 = vpop.permute.xlu0 %1410
        %1412 = vrot.lane.b32.xlu0 %v1190, 122
        %v1413 = vpop.permute.xlu0 %1412
        %1414 = vrot.lane.b32.xlu0 %v1191, 122
        %v1415 = vpop.permute.xlu0 %1414
        %1416 = vrot.lane.b32.xlu0 %v1192, 122
        %v1417 = vpop.permute.xlu0 %1416
        %1418 = vrot.lane.b32.xlu0 %v1193, 122
        %v1419 = vpop.permute.xlu0 %1418
        %vm1420 = vcmask 998400
        %v1421 = vsel %vm1420, %v1293, %v1295
        %v1422 = vsel %vm1420, %v1297, %v1299
        %v1423 = vsel %vm1420, %v1301, %v1303
        %v1424 = vsel %vm1420, %v1305, %v1307
        %v1425 = vsel %vm1420, %v1309, %v1311
        %v1426 = vsel %vm1420, %v1313, %v1315
        %v1427 = vsel %vm1420, %v1317, %v1319
        %v1428 = vsel %vm1420, %v1321, %v1323
        %v1429 = vsel %vm1420, %v1325, %v1327
        %v1430 = vsel %vm1420, %v1329, %v1331
        %v1431 = vsel %vm1420, %v1333, %v1335
        %v1432 = vsel %vm1420, %v1337, %v1339
        %v1433 = vsel %vm1420, %v1341, %v1343
        %v1434 = vsel %vm1420, %v1345, %v1347
        %v1435 = vsel %vm1420, %v1349, %v1351
        %v1436 = vsel %vm1420, %v1353, %v1355
        %v1437 = vsel %vm1420, %v1357, %v1359
        %v1438 = vsel %vm1420, %v1361, %v1363
        %v1439 = vsel %vm1420, %v1365, %v1367
        %v1440 = vsel %vm1420, %v1369, %v1371
        %v1441 = vsel %vm1420, %v1373, %v1375
        %v1442 = vsel %vm1420, %v1377, %v1379
        %v1443 = vsel %vm1420, %v1381, %v1383
        %v1444 = vsel %vm1420, %v1385, %v1387
        %v1445 = vsel %vm1420, %v1389, %v1391
        %v1446 = vsel %vm1420, %v1393, %v1395
        %v1447 = vsel %vm1420, %v1397, %v1399
        %v1448 = vsel %vm1420, %v1401, %v1403
        %v1449 = vsel %vm1420, %v1405, %v1407
        %v1450 = vsel %vm1420, %v1409, %v1411
        %v1451 = vsel %vm1420, %v1413, %v1415
        %v1452 = vsel %vm1420, %v1417, %v1419
        %v1517 = vmax.f32 %v1130, %v1421
        %v1518 = vmax.f32 %v1131, %v1295
        %v1519 = vmax.f32 %v1132, %v1422
        %v1520 = vmax.f32 %v1133, %v1299
        %v1521 = vmax.f32 %v1134, %v1423
        %v1522 = vmax.f32 %v1135, %v1303
        %v1523 = vmax.f32 %v1136, %v1424
        %v1524 = vmax.f32 %v1137, %v1307
        %v1525 = vmax.f32 %v1138, %v1425
        %v1526 = vmax.f32 %v1139, %v1311
        %v1527 = vmax.f32 %v1140, %v1426
        %v1528 = vmax.f32 %v1141, %v1315
        %v1529 = vmax.f32 %v1142, %v1427
        %v1530 = vmax.f32 %v1143, %v1319
        %v1531 = vmax.f32 %v1144, %v1428
        %v1532 = vmax.f32 %v1145, %v1323
        %v1533 = vmax.f32 %v1146, %v1429
        %v1534 = vmax.f32 %v1147, %v1327
        %v1535 = vmax.f32 %v1148, %v1430
        %v1536 = vmax.f32 %v1149, %v1331
        %v1537 = vmax.f32 %v1150, %v1431
        %v1538 = vmax.f32 %v1151, %v1335
        %v1539 = vmax.f32 %v1152, %v1432
        %v1540 = vmax.f32 %v1153, %v1339
        %v1541 = vmax.f32 %v1154, %v1433
        %v1542 = vmax.f32 %v1155, %v1343
        %v1543 = vmax.f32 %v1156, %v1434
        %v1544 = vmax.f32 %v1157, %v1347
        %v1545 = vmax.f32 %v1158, %v1435
        %v1546 = vmax.f32 %v1159, %v1351
        %v1547 = vmax.f32 %v1160, %v1436
        %v1548 = vmax.f32 %v1161, %v1355
        %v1549 = vmax.f32 %v1162, %v1437
        %v1550 = vmax.f32 %v1163, %v1359
        %v1551 = vmax.f32 %v1164, %v1438
        %v1552 = vmax.f32 %v1165, %v1363
        %v1553 = vmax.f32 %v1166, %v1439
        %v1554 = vmax.f32 %v1167, %v1367
        %v1555 = vmax.f32 %v1168, %v1440
        %v1556 = vmax.f32 %v1169, %v1371
        %v1557 = vmax.f32 %v1170, %v1441
        %v1558 = vmax.f32 %v1171, %v1375
        %v1559 = vmax.f32 %v1172, %v1442
        %v1560 = vmax.f32 %v1173, %v1379
        %v1561 = vmax.f32 %v1174, %v1443
        %v1562 = vmax.f32 %v1175, %v1383
        %v1563 = vmax.f32 %v1176, %v1444
        %v1564 = vmax.f32 %v1177, %v1387
        %v1565 = vmax.f32 %v1178, %v1445
        %v1566 = vmax.f32 %v1179, %v1391
        %v1567 = vmax.f32 %v1180, %v1446
        %v1568 = vmax.f32 %v1181, %v1395
        %v1569 = vmax.f32 %v1182, %v1447
        %v1570 = vmax.f32 %v1183, %v1399
        %v1571 = vmax.f32 %v1184, %v1448
        %v1572 = vmax.f32 %v1185, %v1403
        %v1573 = vmax.f32 %v1186, %v1449
        %v1574 = vmax.f32 %v1187, %v1407
        %v1575 = vmax.f32 %v1188, %v1450
        %v1576 = vmax.f32 %v1189, %v1411
        %v1577 = vmax.f32 %v1190, %v1451
        %v1578 = vmax.f32 %v1191, %v1415
        %v1579 = vmax.f32 %v1192, %v1452
        %v1580 = vmax.f32 %v1193, %v1419
        %vm1645 = vcmask 1046528
        %v1646 = vrot.slane %v1517, 1
        %v1647 = vrot.slane %v1519, 1
        %v1648 = vsel %vm1645, %v1646, %v1647
        %v1649 = vrot.slane %v1518, 1
        %v1650 = vrot.slane %v1520, 1
        %v1651 = vsel %vm1645, %v1649, %v1650
        %v1652 = vrot.slane %v1521, 1
        %v1653 = vsel %vm1645, %v1647, %v1652
        %v1654 = vrot.slane %v1522, 1
        %v1655 = vsel %vm1645, %v1650, %v1654
        %v1656 = vrot.slane %v1523, 1
        %v1657 = vsel %vm1645, %v1652, %v1656
        %v1658 = vrot.slane %v1524, 1
        %v1659 = vsel %vm1645, %v1654, %v1658
        %v1660 = vrot.slane %v1525, 1
        %v1661 = vsel %vm1645, %v1656, %v1660
        %v1662 = vrot.slane %v1526, 1
        %v1663 = vsel %vm1645, %v1658, %v1662
        %v1664 = vrot.slane %v1527, 1
        %v1665 = vsel %vm1645, %v1660, %v1664
        %v1666 = vrot.slane %v1528, 1
        %v1667 = vsel %vm1645, %v1662, %v1666
        %v1668 = vrot.slane %v1529, 1
        %v1669 = vsel %vm1645, %v1664, %v1668
        %v1670 = vrot.slane %v1530, 1
        %v1671 = vsel %vm1645, %v1666, %v1670
        %v1672 = vrot.slane %v1531, 1
        %v1673 = vsel %vm1645, %v1668, %v1672
        %v1674 = vrot.slane %v1532, 1
        %v1675 = vsel %vm1645, %v1670, %v1674
        %v1676 = vrot.slane %v1533, 1
        %v1677 = vsel %vm1645, %v1672, %v1676
        %v1678 = vrot.slane %v1534, 1
        %v1679 = vsel %vm1645, %v1674, %v1678
        %v1680 = vrot.slane %v1535, 1
        %v1681 = vsel %vm1645, %v1676, %v1680
        %v1682 = vrot.slane %v1536, 1
        %v1683 = vsel %vm1645, %v1678, %v1682
        %v1684 = vrot.slane %v1537, 1
        %v1685 = vsel %vm1645, %v1680, %v1684
        %v1686 = vrot.slane %v1538, 1
        %v1687 = vsel %vm1645, %v1682, %v1686
        %v1688 = vrot.slane %v1539, 1
        %v1689 = vsel %vm1645, %v1684, %v1688
        %v1690 = vrot.slane %v1540, 1
        %v1691 = vsel %vm1645, %v1686, %v1690
        %v1692 = vrot.slane %v1541, 1
        %v1693 = vsel %vm1645, %v1688, %v1692
        %v1694 = vrot.slane %v1542, 1
        %v1695 = vsel %vm1645, %v1690, %v1694
        %v1696 = vrot.slane %v1543, 1
        %v1697 = vsel %vm1645, %v1692, %v1696
        %v1698 = vrot.slane %v1544, 1
        %v1699 = vsel %vm1645, %v1694, %v1698
        %v1700 = vrot.slane %v1545, 1
        %v1701 = vsel %vm1645, %v1696, %v1700
        %v1702 = vrot.slane %v1546, 1
        %v1703 = vsel %vm1645, %v1698, %v1702
        %v1704 = vrot.slane %v1547, 1
        %v1705 = vsel %vm1645, %v1700, %v1704
        %v1706 = vrot.slane %v1548, 1
        %v1707 = vsel %vm1645, %v1702, %v1706
        %v1708 = vrot.slane %v1549, 1
        %v1709 = vsel %vm1645, %v1704, %v1708
        %v1710 = vrot.slane %v1550, 1
        %v1711 = vsel %vm1645, %v1706, %v1710
        %v1712 = vrot.slane %v1551, 1
        %v1713 = vsel %vm1645, %v1708, %v1712
        %v1714 = vrot.slane %v1552, 1
        %v1715 = vsel %vm1645, %v1710, %v1714
        %v1716 = vrot.slane %v1553, 1
        %v1717 = vsel %vm1645, %v1712, %v1716
        %v1718 = vrot.slane %v1554, 1
        %v1719 = vsel %vm1645, %v1714, %v1718
        %v1720 = vrot.slane %v1555, 1
        %v1721 = vsel %vm1645, %v1716, %v1720
        %v1722 = vrot.slane %v1556, 1
        %v1723 = vsel %vm1645, %v1718, %v1722
        %v1724 = vrot.slane %v1557, 1
        %v1725 = vsel %vm1645, %v1720, %v1724
        %v1726 = vrot.slane %v1558, 1
        %v1727 = vsel %vm1645, %v1722, %v1726
        %v1728 = vrot.slane %v1559, 1
        %v1729 = vsel %vm1645, %v1724, %v1728
        %v1730 = vrot.slane %v1560, 1
        %v1731 = vsel %vm1645, %v1726, %v1730
        %v1732 = vrot.slane %v1561, 1
        %v1733 = vsel %vm1645, %v1728, %v1732
        %v1734 = vrot.slane %v1562, 1
        %v1735 = vsel %vm1645, %v1730, %v1734
        %v1736 = vrot.slane %v1563, 1
        %v1737 = vsel %vm1645, %v1732, %v1736
        %v1738 = vrot.slane %v1564, 1
        %v1739 = vsel %vm1645, %v1734, %v1738
        %v1740 = vrot.slane %v1565, 1
        %v1741 = vsel %vm1645, %v1736, %v1740
        %v1742 = vrot.slane %v1566, 1
        %v1743 = vsel %vm1645, %v1738, %v1742
        %v1744 = vrot.slane %v1567, 1
        %v1745 = vsel %vm1645, %v1740, %v1744
        %v1746 = vrot.slane %v1568, 1
        %v1747 = vsel %vm1645, %v1742, %v1746
        %v1748 = vrot.slane %v1569, 1
        %v1749 = vsel %vm1645, %v1744, %v1748
        %v1750 = vrot.slane %v1570, 1
        %v1751 = vsel %vm1645, %v1746, %v1750
        %v1752 = vrot.slane %v1571, 1
        %v1753 = vsel %vm1645, %v1748, %v1752
        %v1754 = vrot.slane %v1572, 1
        %v1755 = vsel %vm1645, %v1750, %v1754
        %v1756 = vrot.slane %v1573, 1
        %v1757 = vsel %vm1645, %v1752, %v1756
        %v1758 = vrot.slane %v1574, 1
        %v1759 = vsel %vm1645, %v1754, %v1758
        %v1760 = vrot.slane %v1575, 1
        %v1761 = vsel %vm1645, %v1756, %v1760
        %v1762 = vrot.slane %v1576, 1
        %v1763 = vsel %vm1645, %v1758, %v1762
        %v1764 = vrot.slane %v1577, 1
        %v1765 = vsel %vm1645, %v1760, %v1764
        %v1766 = vrot.slane %v1578, 1
        %v1767 = vsel %vm1645, %v1762, %v1766
        %v1768 = vrot.slane %v1579, 1
        %v1769 = vsel %vm1645, %v1764, %v1768
        %v1770 = vrot.slane %v1580, 1
        %v1771 = vsel %vm1645, %v1766, %v1770
        %v1836 = vmax.f32 %v1517, %v1648
        %v1837 = vmax.f32 %v1518, %v1651
        %v1838 = vmax.f32 %v1519, %v1653
        %v1839 = vmax.f32 %v1520, %v1655
        %v1840 = vmax.f32 %v1521, %v1657
        %v1841 = vmax.f32 %v1522, %v1659
        %v1842 = vmax.f32 %v1523, %v1661
        %v1843 = vmax.f32 %v1524, %v1663
        %v1844 = vmax.f32 %v1525, %v1665
        %v1845 = vmax.f32 %v1526, %v1667
        %v1846 = vmax.f32 %v1527, %v1669
        %v1847 = vmax.f32 %v1528, %v1671
        %v1848 = vmax.f32 %v1529, %v1673
        %v1849 = vmax.f32 %v1530, %v1675
        %v1850 = vmax.f32 %v1531, %v1677
        %v1851 = vmax.f32 %v1532, %v1679
        %v1852 = vmax.f32 %v1533, %v1681
        %v1853 = vmax.f32 %v1534, %v1683
        %v1854 = vmax.f32 %v1535, %v1685
        %v1855 = vmax.f32 %v1536, %v1687
        %v1856 = vmax.f32 %v1537, %v1689
        %v1857 = vmax.f32 %v1538, %v1691
        %v1858 = vmax.f32 %v1539, %v1693
        %v1859 = vmax.f32 %v1540, %v1695
        %v1860 = vmax.f32 %v1541, %v1697
        %v1861 = vmax.f32 %v1542, %v1699
        %v1862 = vmax.f32 %v1543, %v1701
        %v1863 = vmax.f32 %v1544, %v1703
        %v1864 = vmax.f32 %v1545, %v1705
        %v1865 = vmax.f32 %v1546, %v1707
        %v1866 = vmax.f32 %v1547, %v1709
        %v1867 = vmax.f32 %v1548, %v1711
        %v1868 = vmax.f32 %v1549, %v1713
        %v1869 = vmax.f32 %v1550, %v1715
        %v1870 = vmax.f32 %v1551, %v1717
        %v1871 = vmax.f32 %v1552, %v1719
        %v1872 = vmax.f32 %v1553, %v1721
        %v1873 = vmax.f32 %v1554, %v1723
        %v1874 = vmax.f32 %v1555, %v1725
        %v1875 = vmax.f32 %v1556, %v1727
        %v1876 = vmax.f32 %v1557, %v1729
        %v1877 = vmax.f32 %v1558, %v1731
        %v1878 = vmax.f32 %v1559, %v1733
        %v1879 = vmax.f32 %v1560, %v1735
        %v1880 = vmax.f32 %v1561, %v1737
        %v1881 = vmax.f32 %v1562, %v1739
        %v1882 = vmax.f32 %v1563, %v1741
        %v1883 = vmax.f32 %v1564, %v1743
        %v1884 = vmax.f32 %v1565, %v1745
        %v1885 = vmax.f32 %v1566, %v1747
        %v1886 = vmax.f32 %v1567, %v1749
        %v1887 = vmax.f32 %v1568, %v1751
        %v1888 = vmax.f32 %v1569, %v1753
        %v1889 = vmax.f32 %v1570, %v1755
        %v1890 = vmax.f32 %v1571, %v1757
        %v1891 = vmax.f32 %v1572, %v1759
        %v1892 = vmax.f32 %v1573, %v1761
        %v1893 = vmax.f32 %v1574, %v1763
        %v1894 = vmax.f32 %v1575, %v1765
        %v1895 = vmax.f32 %v1576, %v1767
        %v1896 = vmax.f32 %v1577, %v1769
        %v1897 = vmax.f32 %v1578, %v1771
        %v1898 = vmax.f32 %v1579, %v1768
        %v1899 = vmax.f32 %v1580, %v1770
        %vm1900 = vcmask 1039360
        %v1902 = vsel %vm1900, %v1195, 0
        %v1905 = vsel %vm1900, %v1197, 0
        %v1908 = vsel %vm1900, %v1199, 0
        %v1911 = vsel %vm1900, %v1201, 0
        %v1914 = vsel %vm1900, %v1203, 0
        %v1917 = vsel %vm1900, %v1205, 0
        %v1920 = vsel %vm1900, %v1207, 0
        %v1923 = vsel %vm1900, %v1209, 0
        %v1926 = vsel %vm1900, %v1211, 0
        %v1929 = vsel %vm1900, %v1213, 0
        %v1932 = vsel %vm1900, %v1215, 0
        %v1935 = vsel %vm1900, %v1217, 0
        %v1938 = vsel %vm1900, %v1219, 0
        %v1941 = vsel %vm1900, %v1221, 0
        %v1944 = vsel %vm1900, %v1223, 0
        %v1947 = vsel %vm1900, %v1225, 0
        %v1950 = vsel %vm1900, %v1227, 0
        %v1953 = vsel %vm1645, %v1898, 0
        %v1956 = vsel %vm1645, %v1899, 0
        %1958 = vmatpush.msra.mxu0 %v1866
        %1959 = vmatpush.msra.mxu0 %v1864
        %1960 = vmatpush.msra.mxu0 %v1862
        %1961 = vmatpush.msra.mxu0 %v1860
        %1962 = vmatpush.msra.mxu0 %v1858
        %1963 = vmatpush.msra.mxu0 %v1856
        %1964 = vmatpush.msra.mxu0 %v1854
        %1965 = vmatpush.msra.mxu0 %v1852
        %1966 = vmatpush.msra.mxu0 %v1850
        %1967 = vmatpush.msra.mxu0 %v1848
        %1968 = vmatpush.msra.mxu0 %v1846
        %1969 = vmatpush.msra.mxu0 %v1844
        %1970 = vmatpush.msra.mxu0 %v1842
        %1971 = vmatpush.msra.mxu0 %v1840
        %1972 = vmatpush.msra.mxu0 %v1838
        %1973 = vmatpush.msra.mxu0 %v1836
        %1974 = vmatmul.f32.gmra.mxu0 %v1194
        %v1975 = vpop.f32.mrf.mxu0
        %v1976 = vadd.f32 0.0, %v1975
        %1977 = vmatmul.f32.gmra.mxu0 %v1196
        %v1978 = vpop.f32.mrf.mxu0
        %v1979 = vadd.f32 0.0, %v1978
        %1980 = vmatmul.f32.gmra.mxu0 %v1198
        %v1981 = vpop.f32.mrf.mxu0
        %v1982 = vadd.f32 0.0, %v1981
        %1983 = vmatmul.f32.gmra.mxu0 %v1200
        %v1984 = vpop.f32.mrf.mxu0
        %v1985 = vadd.f32 0.0, %v1984
        %1986 = vmatmul.f32.gmra.mxu0 %v1202
        %v1987 = vpop.f32.mrf.mxu0
        %v1988 = vadd.f32 0.0, %v1987
        %1989 = vmatmul.f32.gmra.mxu0 %v1204
        %v1990 = vpop.f32.mrf.mxu0
        %v1991 = vadd.f32 0.0, %v1990
        %1992 = vmatmul.f32.gmra.mxu0 %v1206
        %v1993 = vpop.f32.mrf.mxu0
        %v1994 = vadd.f32 0.0, %v1993
        %1995 = vmatmul.f32.gmra.mxu0 %v1208
        %v1996 = vpop.f32.mrf.mxu0
        %v1997 = vadd.f32 0.0, %v1996
        %1998 = vmatmul.f32.gmra.mxu0 %v1210
        %v1999 = vpop.f32.mrf.mxu0
        %v2000 = vadd.f32 0.0, %v1999
        %2001 = vmatmul.f32.gmra.mxu0 %v1212
        %v2002 = vpop.f32.mrf.mxu0
        %v2003 = vadd.f32 0.0, %v2002
        %2004 = vmatmul.f32.gmra.mxu0 %v1214
        %v2005 = vpop.f32.mrf.mxu0
        %v2006 = vadd.f32 0.0, %v2005
        %2007 = vmatmul.f32.gmra.mxu0 %v1216
        %v2008 = vpop.f32.mrf.mxu0
        %v2009 = vadd.f32 0.0, %v2008
        %2010 = vmatmul.f32.gmra.mxu0 %v1218
        %v2011 = vpop.f32.mrf.mxu0
        %v2012 = vadd.f32 0.0, %v2011
        %2013 = vmatmul.f32.gmra.mxu0 %v1220
        %v2014 = vpop.f32.mrf.mxu0
        %v2015 = vadd.f32 0.0, %v2014
        %2016 = vmatmul.f32.gmra.mxu0 %v1222
        %v2017 = vpop.f32.mrf.mxu0
        %v2018 = vadd.f32 0.0, %v2017
        %2019 = vmatmul.f32.gmra.mxu0 %v1224
        %v2020 = vpop.f32.mrf.mxu0
        %v2021 = vadd.f32 0.0, %v2020
        %2022 = vmatmul.f32.gmra.mxu0 %v1226
        %v2023 = vpop.f32.mrf.mxu0
        %v2024 = vadd.f32 0.0, %v2023
        %2025 = vdwg.mxu0
        %2026 = vmatpush.msra.mxu0 %v1953
        %2027 = vmatpush.msra.mxu0 %v1896
        %2028 = vmatpush.msra.mxu0 %v1894
        %2029 = vmatpush.msra.mxu0 %v1892
        %2030 = vmatpush.msra.mxu0 %v1890
        %2031 = vmatpush.msra.mxu0 %v1888
        %2032 = vmatpush.msra.mxu0 %v1886
        %2033 = vmatpush.msra.mxu0 %v1884
        %2034 = vmatpush.msra.mxu0 %v1882
        %2035 = vmatpush.msra.mxu0 %v1880
        %2036 = vmatpush.msra.mxu0 %v1878
        %2037 = vmatpush.msra.mxu0 %v1876
        %2038 = vmatpush.msra.mxu0 %v1874
        %2039 = vmatpush.msra.mxu0 %v1872
        %2040 = vmatpush.msra.mxu0 %v1870
        %2041 = vmatpush.msra.mxu0 %v1868
        %2042 = vmatmul.f32.gmra.mxu0 %v1902
        %v2043 = vpop.f32.mrf.mxu0
        %v2044 = vadd.f32 %v1976, %v2043
        %2045 = vmatmul.f32.gmra.mxu0 %v1905
        %v2046 = vpop.f32.mrf.mxu0
        %v2047 = vadd.f32 %v1979, %v2046
        %2048 = vmatmul.f32.gmra.mxu0 %v1908
        %v2049 = vpop.f32.mrf.mxu0
        %v2050 = vadd.f32 %v1982, %v2049
        %2051 = vmatmul.f32.gmra.mxu0 %v1911
        %v2052 = vpop.f32.mrf.mxu0
        %v2053 = vadd.f32 %v1985, %v2052
        %2054 = vmatmul.f32.gmra.mxu0 %v1914
        %v2055 = vpop.f32.mrf.mxu0
        %v2056 = vadd.f32 %v1988, %v2055
        %2057 = vmatmul.f32.gmra.mxu0 %v1917
        %v2058 = vpop.f32.mrf.mxu0
        %v2059 = vadd.f32 %v1991, %v2058
        %2060 = vmatmul.f32.gmra.mxu0 %v1920
        %v2061 = vpop.f32.mrf.mxu0
        %v2062 = vadd.f32 %v1994, %v2061
        %2063 = vmatmul.f32.gmra.mxu0 %v1923
        %v2064 = vpop.f32.mrf.mxu0
        %v2065 = vadd.f32 %v1997, %v2064
        %2066 = vmatmul.f32.gmra.mxu0 %v1926
        %v2067 = vpop.f32.mrf.mxu0
        %v2068 = vadd.f32 %v2000, %v2067
        %2069 = vmatmul.f32.gmra.mxu0 %v1929
        %v2070 = vpop.f32.mrf.mxu0
        %v2071 = vadd.f32 %v2003, %v2070
        %2072 = vmatmul.f32.gmra.mxu0 %v1932
        %v2073 = vpop.f32.mrf.mxu0
        %v2074 = vadd.f32 %v2006, %v2073
        %2075 = vmatmul.f32.gmra.mxu0 %v1935
        %v2076 = vpop.f32.mrf.mxu0
        %v2077 = vadd.f32 %v2009, %v2076
        %2078 = vmatmul.f32.gmra.mxu0 %v1938
        %v2079 = vpop.f32.mrf.mxu0
        %v2080 = vadd.f32 %v2012, %v2079
        %2081 = vmatmul.f32.gmra.mxu0 %v1941
        %v2082 = vpop.f32.mrf.mxu0
        %v2083 = vadd.f32 %v2015, %v2082
        %2084 = vmatmul.f32.gmra.mxu0 %v1944
        %v2085 = vpop.f32.mrf.mxu0
        %v2086 = vadd.f32 %v2018, %v2085
        %2087 = vmatmul.f32.gmra.mxu0 %v1947
        %v2088 = vpop.f32.mrf.mxu0
        %v2089 = vadd.f32 %v2021, %v2088
        %2090 = vmatmul.f32.gmra.mxu0 %v1950
        %v2091 = vpop.f32.mrf.mxu0
        %v2092 = vadd.f32 %v2024, %v2091
        %2093 = vdwg.mxu0
        %2094 = vmatpush.msra.mxu0 %v1867
        %2095 = vmatpush.msra.mxu0 %v1865
        %2096 = vmatpush.msra.mxu0 %v1863
        %2097 = vmatpush.msra.mxu0 %v1861
        %2098 = vmatpush.msra.mxu0 %v1859
        %2099 = vmatpush.msra.mxu0 %v1857
        %2100 = vmatpush.msra.mxu0 %v1855
        %2101 = vmatpush.msra.mxu0 %v1853
        %2102 = vmatpush.msra.mxu0 %v1851
        %2103 = vmatpush.msra.mxu0 %v1849
        %2104 = vmatpush.msra.mxu0 %v1847
        %2105 = vmatpush.msra.mxu0 %v1845
        %2106 = vmatpush.msra.mxu0 %v1843
        %2107 = vmatpush.msra.mxu0 %v1841
        %2108 = vmatpush.msra.mxu0 %v1839
        %2109 = vmatpush.msra.mxu0 %v1837
        %2110 = vmatmul.f32.gmra.mxu0 %v1194
        %v2111 = vpop.f32.mrf.mxu0
        %v2112 = vadd.f32 0.0, %v2111
        %2113 = vmatmul.f32.gmra.mxu0 %v1196
        %v2114 = vpop.f32.mrf.mxu0
        %v2115 = vadd.f32 0.0, %v2114
        %2116 = vmatmul.f32.gmra.mxu0 %v1198
        %v2117 = vpop.f32.mrf.mxu0
        %v2118 = vadd.f32 0.0, %v2117
        %2119 = vmatmul.f32.gmra.mxu0 %v1200
        %v2120 = vpop.f32.mrf.mxu0
        %v2121 = vadd.f32 0.0, %v2120
        %2122 = vmatmul.f32.gmra.mxu0 %v1202
        %v2123 = vpop.f32.mrf.mxu0
        %v2124 = vadd.f32 0.0, %v2123
        %2125 = vmatmul.f32.gmra.mxu0 %v1204
        %v2126 = vpop.f32.mrf.mxu0
        %v2127 = vadd.f32 0.0, %v2126
        %2128 = vmatmul.f32.gmra.mxu0 %v1206
        %v2129 = vpop.f32.mrf.mxu0
        %v2130 = vadd.f32 0.0, %v2129
        %2131 = vmatmul.f32.gmra.mxu0 %v1208
        %v2132 = vpop.f32.mrf.mxu0
        %v2133 = vadd.f32 0.0, %v2132
        %2134 = vmatmul.f32.gmra.mxu0 %v1210
        %v2135 = vpop.f32.mrf.mxu0
        %v2136 = vadd.f32 0.0, %v2135
        %2137 = vmatmul.f32.gmra.mxu0 %v1212
        %v2138 = vpop.f32.mrf.mxu0
        %v2139 = vadd.f32 0.0, %v2138
        %2140 = vmatmul.f32.gmra.mxu0 %v1214
        %v2141 = vpop.f32.mrf.mxu0
        %v2142 = vadd.f32 0.0, %v2141
        %2143 = vmatmul.f32.gmra.mxu0 %v1216
        %v2144 = vpop.f32.mrf.mxu0
        %v2145 = vadd.f32 0.0, %v2144
        %2146 = vmatmul.f32.gmra.mxu0 %v1218
        %v2147 = vpop.f32.mrf.mxu0
        %v2148 = vadd.f32 0.0, %v2147
        %2149 = vmatmul.f32.gmra.mxu0 %v1220
        %v2150 = vpop.f32.mrf.mxu0
        %v2151 = vadd.f32 0.0, %v2150
        %2152 = vmatmul.f32.gmra.mxu0 %v1222
        %v2153 = vpop.f32.mrf.mxu0
        %v2154 = vadd.f32 0.0, %v2153
        %2155 = vmatmul.f32.gmra.mxu0 %v1224
        %v2156 = vpop.f32.mrf.mxu0
        %v2157 = vadd.f32 0.0, %v2156
        %2158 = vmatmul.f32.gmra.mxu0 %v1226
        %v2159 = vpop.f32.mrf.mxu0
        %v2160 = vadd.f32 0.0, %v2159
        %2161 = vdwg.mxu0
        %2162 = vmatpush.msra.mxu0 %v1956
        %2163 = vmatpush.msra.mxu0 %v1897
        %2164 = vmatpush.msra.mxu0 %v1895
        %2165 = vmatpush.msra.mxu0 %v1893
        %2166 = vmatpush.msra.mxu0 %v1891
        %2167 = vmatpush.msra.mxu0 %v1889
        %2168 = vmatpush.msra.mxu0 %v1887
        %2169 = vmatpush.msra.mxu0 %v1885
        %2170 = vmatpush.msra.mxu0 %v1883
        %2171 = vmatpush.msra.mxu0 %v1881
        %2172 = vmatpush.msra.mxu0 %v1879
        %2173 = vmatpush.msra.mxu0 %v1877
        %2174 = vmatpush.msra.mxu0 %v1875
        %2175 = vmatpush.msra.mxu0 %v1873
        %2176 = vmatpush.msra.mxu0 %v1871
        %2177 = vmatpush.msra.mxu0 %v1869
        %2178 = vmatmul.f32.gmra.mxu0 %v1902
        %v2179 = vpop.f32.mrf.mxu0
        %v2180 = vadd.f32 %v2112, %v2179
        %2181 = vmatmul.f32.gmra.mxu0 %v1905
        %v2182 = vpop.f32.mrf.mxu0
        %v2183 = vadd.f32 %v2115, %v2182
        %2184 = vmatmul.f32.gmra.mxu0 %v1908
        %v2185 = vpop.f32.mrf.mxu0
        %v2186 = vadd.f32 %v2118, %v2185
        %2187 = vmatmul.f32.gmra.mxu0 %v1911
        %v2188 = vpop.f32.mrf.mxu0
        %v2189 = vadd.f32 %v2121, %v2188
        %2190 = vmatmul.f32.gmra.mxu0 %v1914
        %v2191 = vpop.f32.mrf.mxu0
        %v2192 = vadd.f32 %v2124, %v2191
        %2193 = vmatmul.f32.gmra.mxu0 %v1917
        %v2194 = vpop.f32.mrf.mxu0
        %v2195 = vadd.f32 %v2127, %v2194
        %2196 = vmatmul.f32.gmra.mxu0 %v1920
        %v2197 = vpop.f32.mrf.mxu0
        %v2198 = vadd.f32 %v2130, %v2197
        %2199 = vmatmul.f32.gmra.mxu0 %v1923
        %v2200 = vpop.f32.mrf.mxu0
        %v2201 = vadd.f32 %v2133, %v2200
        %2202 = vmatmul.f32.gmra.mxu0 %v1926
        %v2203 = vpop.f32.mrf.mxu0
        %v2204 = vadd.f32 %v2136, %v2203
        %2205 = vmatmul.f32.gmra.mxu0 %v1929
        %v2206 = vpop.f32.mrf.mxu0
        %v2207 = vadd.f32 %v2139, %v2206
        %2208 = vmatmul.f32.gmra.mxu0 %v1932
        %v2209 = vpop.f32.mrf.mxu0
        %v2210 = vadd.f32 %v2142, %v2209
        %2211 = vmatmul.f32.gmra.mxu0 %v1935
        %v2212 = vpop.f32.mrf.mxu0
        %v2213 = vadd.f32 %v2145, %v2212
        %2214 = vmatmul.f32.gmra.mxu0 %v1938
        %v2215 = vpop.f32.mrf.mxu0
        %v2216 = vadd.f32 %v2148, %v2215
        %2217 = vmatmul.f32.gmra.mxu0 %v1941
        %v2218 = vpop.f32.mrf.mxu0
        %v2219 = vadd.f32 %v2151, %v2218
        %2220 = vmatmul.f32.gmra.mxu0 %v1944
        %v2221 = vpop.f32.mrf.mxu0
        %v2222 = vadd.f32 %v2154, %v2221
        %2223 = vmatmul.f32.gmra.mxu0 %v1947
        %v2224 = vpop.f32.mrf.mxu0
        %v2225 = vadd.f32 %v2157, %v2224
        %2226 = vmatmul.f32.gmra.mxu0 %v1950
        %v2227 = vpop.f32.mrf.mxu0
        %v2228 = vadd.f32 %v2160, %v2227
        %2229 = vdwg.mxu0
        %v2230 = vld [vmem:[%s4] sm:$0xff]
        %v2231 = vld [vmem:[%s4 + $0x8] sm:$0xff]
        %v2232 = vld [vmem:[%s4 + $0x10] sm:$0xff]
        %v2233 = vld [vmem:[%s4 + $0x18] sm:$0xff]
        %v2234 = vld [vmem:[%s4 + $0x20] sm:$0xff]
        %v2235 = vld [vmem:[%s4 + $0x28] sm:$0xff]
        %v2236 = vld [vmem:[%s4 + $0x30] sm:$0xff]
        %v2237 = vld [vmem:[%s4 + $0x38] sm:$0xff]
        %v2238 = vld [vmem:[%s4 + $0x40] sm:$0xff]
        %v2239 = vld [vmem:[%s4 + $0x48] sm:$0xff]
        %v2240 = vld [vmem:[%s4 + $0x50] sm:$0xff]
        %v2241 = vld [vmem:[%s4 + $0x58] sm:$0xff]
        %v2242 = vld [vmem:[%s4 + $0x60] sm:$0xff]
        %v2243 = vld [vmem:[%s4 + $0x68] sm:$0xff]
        %v2244 = vld [vmem:[%s4 + $0x70] sm:$0xff]
        %v2245 = vld [vmem:[%s4 + $0x78] sm:$0xff]
        %v2246 = vld [vmem:[%s4 + $0x80] sm:$0xff]
        %v2247 = vld [vmem:[%s4 + $0x88] sm:$0xff]
        %v2248 = vld [vmem:[%s4 + $0x90] sm:$0xff]
        %v2249 = vld [vmem:[%s4 + $0x98] sm:$0xff]
        %v2250 = vld [vmem:[%s4 + $0xa0] sm:$0xff]
        %v2251 = vld [vmem:[%s4 + $0xa8] sm:$0xff]
        %v2252 = vld [vmem:[%s4 + $0xb0] sm:$0xff]
        %v2253 = vld [vmem:[%s4 + $0xb8] sm:$0xff]
        %v2254 = vld [vmem:[%s4 + $0xc0] sm:$0xff]
        %v2255 = vld [vmem:[%s4 + $0xc8] sm:$0xff]
        %v2256 = vld [vmem:[%s4 + $0xd0] sm:$0xff]
        %v2257 = vld [vmem:[%s4 + $0xd8] sm:$0xff]
        %v2258 = vld [vmem:[%s4 + $0xe0] sm:$0xff]
        %v2259 = vld [vmem:[%s4 + $0xe8] sm:$0xff]
        %v2260 = vld [vmem:[%s4 + $0xf0] sm:$0xff]
        %v2261 = vld [vmem:[%s4 + $0xf8] sm:$0xff]
        %v2262 = vld [vmem:[%s4 + $0x100] sm:$0xff]
        %v2263 = vld [vmem:[%s4 + $0x108] sm:$0xff]
        %v2264 = vld [vmem:[%s4 + $0x110] sm:$0xff]
        %v2265 = vld [vmem:[%s4 + $0x118] sm:$0xff]
        %v2266 = vld [vmem:[%s4 + $0x120] sm:$0xff]
        %v2267 = vld [vmem:[%s4 + $0x128] sm:$0xff]
        %v2268 = vld [vmem:[%s4 + $0x130] sm:$0xff]
        %v2269 = vld [vmem:[%s4 + $0x138] sm:$0xff]
        %v2270 = vld [vmem:[%s4 + $0x140] sm:$0x3]
        %v2271 = vld [vmem:[%s4 + $0x148] sm:$0x3]
        %s2272 = scalar_lea.vmem %s4, 336
        %v2273 = vld [vmem:[%s2272] sm:$0xff]
        %v2274 = vld [vmem:[%s2272 + $0x8] sm:$0xff]
        %v2275 = vld [vmem:[%s2272 + $0x10] sm:$0xff]
        %v2276 = vld [vmem:[%s2272 + $0x18] sm:$0xff]
        %v2277 = vld [vmem:[%s2272 + $0x20] sm:$0xff]
        %v2278 = vld [vmem:[%s2272 + $0x28] sm:$0xff]
        %v2279 = vld [vmem:[%s2272 + $0x30] sm:$0xff]
        %v2280 = vld [vmem:[%s2272 + $0x38] sm:$0xff]
        %v2281 = vld [vmem:[%s2272 + $0x40] sm:$0xff]
        %v2282 = vld [vmem:[%s2272 + $0x48] sm:$0xff]
        %v2283 = vld [vmem:[%s2272 + $0x50] sm:$0xff]
        %v2284 = vld [vmem:[%s2272 + $0x58] sm:$0xff]
        %v2285 = vld [vmem:[%s2272 + $0x60] sm:$0xff]
        %v2286 = vld [vmem:[%s2272 + $0x68] sm:$0xff]
        %v2287 = vld [vmem:[%s2272 + $0x70] sm:$0xff]
        %v2288 = vld [vmem:[%s2272 + $0x78] sm:$0xff]
        %v2289 = vld [vmem:[%s2272 + $0x80] sm:$0xff]
        %v2290 = vld [vmem:[%s2272 + $0x88] sm:$0xff]
        %v2291 = vld [vmem:[%s2272 + $0x90] sm:$0xff]
        %v2292 = vld [vmem:[%s2272 + $0x98] sm:$0xff]
        %v2293 = vld [vmem:[%s2272 + $0xa0] sm:$0xff]
        %v2294 = vld [vmem:[%s2272 + $0xa8] sm:$0xff]
        %v2295 = vld [vmem:[%s2272 + $0xb0] sm:$0xff]
        %v2296 = vld [vmem:[%s2272 + $0xb8] sm:$0xff]
        %v2297 = vld [vmem:[%s2272 + $0xc0] sm:$0xff]
        %v2298 = vld [vmem:[%s2272 + $0xc8] sm:$0xff]
        %v2299 = vld [vmem:[%s2272 + $0xd0] sm:$0xff]
        %v2300 = vld [vmem:[%s2272 + $0xd8] sm:$0xff]
        %v2301 = vld [vmem:[%s2272 + $0xe0] sm:$0xff]
        %v2302 = vld [vmem:[%s2272 + $0xe8] sm:$0xff]
        %v2303 = vld [vmem:[%s2272 + $0xf0] sm:$0xff]
        %v2304 = vld [vmem:[%s2272 + $0xf8] sm:$0xff]
        %v2305 = vld [vmem:[%s2272 + $0x100] sm:$0xff]
        %v2306 = vld [vmem:[%s2272 + $0x108] sm:$0xff]
        %v2307 = vld [vmem:[%s2272 + $0x110] sm:$0xff]
        %v2308 = vld [vmem:[%s2272 + $0x118] sm:$0xff]
        %v2309 = vld [vmem:[%s2272 + $0x120] sm:$0xff]
        %v2310 = vld [vmem:[%s2272 + $0x128] sm:$0xff]
        %v2311 = vld [vmem:[%s2272 + $0x130] sm:$0xff]
        %v2312 = vld [vmem:[%s2272 + $0x138] sm:$0xff]
        %v2313 = vld [vmem:[%s2272 + $0x140] sm:$0x3]
        %v2314 = vld [vmem:[%s2272 + $0x148] sm:$0x3]
        %v2349 = vrot.slane %v2044, 1
        %v2350 = vrot.slane %v2047, 1
        %v2351 = vsel %vm1645, %v2349, %v2350
        %v2352 = vrot.slane %v2180, 1
        %v2353 = vrot.slane %v2183, 1
        %v2354 = vsel %vm1645, %v2352, %v2353
        %v2355 = vrot.slane %v2050, 1
        %v2356 = vsel %vm1645, %v2350, %v2355
        %v2357 = vrot.slane %v2186, 1
        %v2358 = vsel %vm1645, %v2353, %v2357
        %v2359 = vrot.slane %v2053, 1
        %v2360 = vsel %vm1645, %v2355, %v2359
        %v2361 = vrot.slane %v2189, 1
        %v2362 = vsel %vm1645, %v2357, %v2361
        %v2363 = vrot.slane %v2056, 1
        %v2364 = vsel %vm1645, %v2359, %v2363
        %v2365 = vrot.slane %v2192, 1
        %v2366 = vsel %vm1645, %v2361, %v2365
        %v2367 = vrot.slane %v2059, 1
        %v2368 = vsel %vm1645, %v2363, %v2367
        %v2369 = vrot.slane %v2195, 1
        %v2370 = vsel %vm1645, %v2365, %v2369
        %v2371 = vrot.slane %v2062, 1
        %v2372 = vsel %vm1645, %v2367, %v2371
        %v2373 = vrot.slane %v2198, 1
        %v2374 = vsel %vm1645, %v2369, %v2373
        %v2375 = vrot.slane %v2065, 1
        %v2376 = vsel %vm1645, %v2371, %v2375
        %v2377 = vrot.slane %v2201, 1
        %v2378 = vsel %vm1645, %v2373, %v2377
        %v2379 = vrot.slane %v2068, 1
        %v2380 = vsel %vm1645, %v2375, %v2379
        %v2381 = vrot.slane %v2204, 1
        %v2382 = vsel %vm1645, %v2377, %v2381
        %v2383 = vrot.slane %v2071, 1
        %v2384 = vsel %vm1645, %v2379, %v2383
        %v2385 = vrot.slane %v2207, 1
        %v2386 = vsel %vm1645, %v2381, %v2385
        %v2387 = vrot.slane %v2074, 1
        %v2388 = vsel %vm1645, %v2383, %v2387
        %v2389 = vrot.slane %v2210, 1
        %v2390 = vsel %vm1645, %v2385, %v2389
        %v2391 = vrot.slane %v2077, 1
        %v2392 = vsel %vm1645, %v2387, %v2391
        %v2393 = vrot.slane %v2213, 1
        %v2394 = vsel %vm1645, %v2389, %v2393
        %v2395 = vrot.slane %v2080, 1
        %v2396 = vsel %vm1645, %v2391, %v2395
        %v2397 = vrot.slane %v2216, 1
        %v2398 = vsel %vm1645, %v2393, %v2397
        %v2399 = vrot.slane %v2083, 1
        %v2400 = vsel %vm1645, %v2395, %v2399
        %v2401 = vrot.slane %v2219, 1
        %v2402 = vsel %vm1645, %v2397, %v2401
        %v2403 = vrot.slane %v2086, 1
        %v2404 = vsel %vm1645, %v2399, %v2403
        %v2405 = vrot.slane %v2222, 1
        %v2406 = vsel %vm1645, %v2401, %v2405
        %v2407 = vrot.slane %v2089, 1
        %v2408 = vsel %vm1645, %v2403, %v2407
        %v2409 = vrot.slane %v2225, 1
        %v2410 = vsel %vm1645, %v2405, %v2409
        %v2411 = vrot.slane %v2092, 1
        %v2412 = vsel %vm1645, %v2407, %v2411
        %v2413 = vrot.slane %v2228, 1
        %v2414 = vsel %vm1645, %v2409, %v2413
        %vm2431 = vcmask 277504
        %v2432 = vsel %vm2431, %v2354, 0
        %v2434 = vsel %vm2431, %v2358, 0
        %v2436 = vsel %vm2431, %v2362, 0
        %v2438 = vsel %vm2431, %v2366, 0
        %v2440 = vsel %vm2431, %v2370, 0
        %v2442 = vsel %vm2431, %v2374, 0
        %v2444 = vsel %vm2431, %v2378, 0
        %v2446 = vsel %vm2431, %v2382, 0
        %v2448 = vsel %vm2431, %v2386, 0
        %v2450 = vsel %vm2431, %v2390, 0
        %v2452 = vsel %vm2431, %v2394, 0
        %v2454 = vsel %vm2431, %v2398, 0
        %v2456 = vsel %vm2431, %v2402, 0
        %v2458 = vsel %vm2431, %v2406, 0
        %v2460 = vsel %vm2431, %v2410, 0
        %v2462 = vsel %vm2431, %v2414, 0
        %vm2464 = vcmask 1041408
        %v2466 = vsel %vm2464, %v2313, 0
        %v2469 = vsel %vm2464, %v2314, 0
        %2471 = vmatpush.msra.mxu0 %v2303
        %2472 = vmatpush.msra.mxu0 %v2301
        %2473 = vmatpush.msra.mxu0 %v2299
        %2474 = vmatpush.msra.mxu0 %v2297
        %2475 = vmatpush.msra.mxu0 %v2295
        %2476 = vmatpush.msra.mxu0 %v2293
        %2477 = vmatpush.msra.mxu0 %v2291
        %2478 = vmatpush.msra.mxu0 %v2289
        %2479 = vmatpush.msra.mxu0 %v2287
        %2480 = vmatpush.msra.mxu0 %v2285
        %2481 = vmatpush.msra.mxu0 %v2283
        %2482 = vmatpush.msra.mxu0 %v2281
        %2483 = vmatpush.msra.mxu0 %v2279
        %2484 = vmatpush.msra.mxu0 %v2277
        %2485 = vmatpush.msra.mxu0 %v2275
        %2486 = vmatpush.msra.mxu0 %v2273
        %2487 = vmatmul.f32.gmra.mxu0 %v2351
        %v2488 = vpop.f32.mrf.mxu0
        %v2489 = vadd.f32 0.0, %v2488
        %2490 = vmatmul.f32.gmra.mxu0 %v2356
        %v2491 = vpop.f32.mrf.mxu0
        %v2492 = vadd.f32 0.0, %v2491
        %2493 = vmatmul.f32.gmra.mxu0 %v2360
        %v2494 = vpop.f32.mrf.mxu0
        %v2495 = vadd.f32 0.0, %v2494
        %2496 = vmatmul.f32.gmra.mxu0 %v2364
        %v2497 = vpop.f32.mrf.mxu0
        %v2498 = vadd.f32 0.0, %v2497
        %2499 = vmatmul.f32.gmra.mxu0 %v2368
        %v2500 = vpop.f32.mrf.mxu0
        %v2501 = vadd.f32 0.0, %v2500
        %2502 = vmatmul.f32.gmra.mxu0 %v2372
        %v2503 = vpop.f32.mrf.mxu0
        %v2504 = vadd.f32 0.0, %v2503
        %2505 = vmatmul.f32.gmra.mxu0 %v2376
        %v2506 = vpop.f32.mrf.mxu0
        %v2507 = vadd.f32 0.0, %v2506
        %2508 = vmatmul.f32.gmra.mxu0 %v2380
        %v2509 = vpop.f32.mrf.mxu0
        %v2510 = vadd.f32 0.0, %v2509
        %2511 = vmatmul.f32.gmra.mxu0 %v2384
        %v2512 = vpop.f32.mrf.mxu0
        %v2513 = vadd.f32 0.0, %v2512
        %2514 = vmatmul.f32.gmra.mxu0 %v2388
        %v2515 = vpop.f32.mrf.mxu0
        %v2516 = vadd.f32 0.0, %v2515
        %2517 = vmatmul.f32.gmra.mxu0 %v2392
        %v2518 = vpop.f32.mrf.mxu0
        %v2519 = vadd.f32 0.0, %v2518
        %2520 = vmatmul.f32.gmra.mxu0 %v2396
        %v2521 = vpop.f32.mrf.mxu0
        %v2522 = vadd.f32 0.0, %v2521
        %2523 = vmatmul.f32.gmra.mxu0 %v2400
        %v2524 = vpop.f32.mrf.mxu0
        %v2525 = vadd.f32 0.0, %v2524
        %2526 = vmatmul.f32.gmra.mxu0 %v2404
        %v2527 = vpop.f32.mrf.mxu0
        %v2528 = vadd.f32 0.0, %v2527
        %2529 = vmatmul.f32.gmra.mxu0 %v2408
        %v2530 = vpop.f32.mrf.mxu0
        %v2531 = vadd.f32 0.0, %v2530
        %2532 = vmatmul.f32.gmra.mxu0 %v2412
        %v2533 = vpop.f32.mrf.mxu0
        %v2534 = vadd.f32 0.0, %v2533
        %2535 = vdwg.mxu0
        %2536 = vmatpush.msra.mxu0 0.0
        %2537 = vmatpush.msra.mxu0 0.0
        %2538 = vmatpush.msra.mxu0 0.0
        %2539 = vmatpush.msra.mxu0 0.0
        %2540 = vmatpush.msra.mxu0 0.0
        %2541 = vmatpush.msra.mxu0 0.0
        %2542 = vmatpush.msra.mxu0 0.0
        %2543 = vmatpush.msra.mxu0 0.0
        %2544 = vmatpush.msra.mxu0 0.0
        %2545 = vmatpush.msra.mxu0 0.0
        %2546 = vmatpush.msra.mxu0 0.0
        %2547 = vmatpush.msra.mxu0 %v2466
        %2548 = vmatpush.msra.mxu0 %v2311
        %2549 = vmatpush.msra.mxu0 %v2309
        %2550 = vmatpush.msra.mxu0 %v2307
        %2551 = vmatpush.msra.mxu0 %v2305
        %2552 = vmatmul.f32.gmra.mxu0 %v2432
        %v2553 = vpop.f32.mrf.mxu0
        %v2554 = vadd.f32 %v2489, %v2553
        %2555 = vmatmul.f32.gmra.mxu0 %v2434
        %v2556 = vpop.f32.mrf.mxu0
        %v2557 = vadd.f32 %v2492, %v2556
        %2558 = vmatmul.f32.gmra.mxu0 %v2436
        %v2559 = vpop.f32.mrf.mxu0
        %v2560 = vadd.f32 %v2495, %v2559
        %2561 = vmatmul.f32.gmra.mxu0 %v2438
        %v2562 = vpop.f32.mrf.mxu0
        %v2563 = vadd.f32 %v2498, %v2562
        %2564 = vmatmul.f32.gmra.mxu0 %v2440
        %v2565 = vpop.f32.mrf.mxu0
        %v2566 = vadd.f32 %v2501, %v2565
        %2567 = vmatmul.f32.gmra.mxu0 %v2442
        %v2568 = vpop.f32.mrf.mxu0
        %v2569 = vadd.f32 %v2504, %v2568
        %2570 = vmatmul.f32.gmra.mxu0 %v2444
        %v2571 = vpop.f32.mrf.mxu0
        %v2572 = vadd.f32 %v2507, %v2571
        %2573 = vmatmul.f32.gmra.mxu0 %v2446
        %v2574 = vpop.f32.mrf.mxu0
        %v2575 = vadd.f32 %v2510, %v2574
        %2576 = vmatmul.f32.gmra.mxu0 %v2448
        %v2577 = vpop.f32.mrf.mxu0
        %v2578 = vadd.f32 %v2513, %v2577
        %2579 = vmatmul.f32.gmra.mxu0 %v2450
        %v2580 = vpop.f32.mrf.mxu0
        %v2581 = vadd.f32 %v2516, %v2580
        %2582 = vmatmul.f32.gmra.mxu0 %v2452
        %v2583 = vpop.f32.mrf.mxu0
        %v2584 = vadd.f32 %v2519, %v2583
        %2585 = vmatmul.f32.gmra.mxu0 %v2454
        %v2586 = vpop.f32.mrf.mxu0
        %v2587 = vadd.f32 %v2522, %v2586
        %2588 = vmatmul.f32.gmra.mxu0 %v2456
        %v2589 = vpop.f32.mrf.mxu0
        %v2590 = vadd.f32 %v2525, %v2589
        %2591 = vmatmul.f32.gmra.mxu0 %v2458
        %v2592 = vpop.f32.mrf.mxu0
        %v2593 = vadd.f32 %v2528, %v2592
        %2594 = vmatmul.f32.gmra.mxu0 %v2460
        %v2595 = vpop.f32.mrf.mxu0
        %v2596 = vadd.f32 %v2531, %v2595
        %2597 = vmatmul.f32.gmra.mxu0 %v2462
        %v2598 = vpop.f32.mrf.mxu0
        %v2599 = vadd.f32 %v2534, %v2598
        %2600 = vdwg.mxu0
        %2601 = vmatpush.msra.mxu0 %v2304
        %2602 = vmatpush.msra.mxu0 %v2302
        %2603 = vmatpush.msra.mxu0 %v2300
        %2604 = vmatpush.msra.mxu0 %v2298
        %2605 = vmatpush.msra.mxu0 %v2296
        %2606 = vmatpush.msra.mxu0 %v2294
        %2607 = vmatpush.msra.mxu0 %v2292
        %2608 = vmatpush.msra.mxu0 %v2290
        %2609 = vmatpush.msra.mxu0 %v2288
        %2610 = vmatpush.msra.mxu0 %v2286
        %2611 = vmatpush.msra.mxu0 %v2284
        %2612 = vmatpush.msra.mxu0 %v2282
        %2613 = vmatpush.msra.mxu0 %v2280
        %2614 = vmatpush.msra.mxu0 %v2278
        %2615 = vmatpush.msra.mxu0 %v2276
        %2616 = vmatpush.msra.mxu0 %v2274
        %2617 = vmatmul.f32.gmra.mxu0 %v2351
        %v2618 = vpop.f32.mrf.mxu0
        %v2619 = vadd.f32 0.0, %v2618
        %2620 = vmatmul.f32.gmra.mxu0 %v2356
        %v2621 = vpop.f32.mrf.mxu0
        %v2622 = vadd.f32 0.0, %v2621
        %2623 = vmatmul.f32.gmra.mxu0 %v2360
        %v2624 = vpop.f32.mrf.mxu0
        %v2625 = vadd.f32 0.0, %v2624
        %2626 = vmatmul.f32.gmra.mxu0 %v2364
        %v2627 = vpop.f32.mrf.mxu0
        %v2628 = vadd.f32 0.0, %v2627
        %2629 = vmatmul.f32.gmra.mxu0 %v2368
        %v2630 = vpop.f32.mrf.mxu0
        %v2631 = vadd.f32 0.0, %v2630
        %2632 = vmatmul.f32.gmra.mxu0 %v2372
        %v2633 = vpop.f32.mrf.mxu0
        %v2634 = vadd.f32 0.0, %v2633
        %2635 = vmatmul.f32.gmra.mxu0 %v2376
        %v2636 = vpop.f32.mrf.mxu0
        %v2637 = vadd.f32 0.0, %v2636
        %2638 = vmatmul.f32.gmra.mxu0 %v2380
        %v2639 = vpop.f32.mrf.mxu0
        %v2640 = vadd.f32 0.0, %v2639
        %2641 = vmatmul.f32.gmra.mxu0 %v2384
        %v2642 = vpop.f32.mrf.mxu0
        %v2643 = vadd.f32 0.0, %v2642
        %2644 = vmatmul.f32.gmra.mxu0 %v2388
        %v2645 = vpop.f32.mrf.mxu0
        %v2646 = vadd.f32 0.0, %v2645
        %2647 = vmatmul.f32.gmra.mxu0 %v2392
        %v2648 = vpop.f32.mrf.mxu0
        %v2649 = vadd.f32 0.0, %v2648
        %2650 = vmatmul.f32.gmra.mxu0 %v2396
        %v2651 = vpop.f32.mrf.mxu0
        %v2652 = vadd.f32 0.0, %v2651
        %2653 = vmatmul.f32.gmra.mxu0 %v2400
        %v2654 = vpop.f32.mrf.mxu0
        %v2655 = vadd.f32 0.0, %v2654
        %2656 = vmatmul.f32.gmra.mxu0 %v2404
        %v2657 = vpop.f32.mrf.mxu0
        %v2658 = vadd.f32 0.0, %v2657
        %2659 = vmatmul.f32.gmra.mxu0 %v2408
        %v2660 = vpop.f32.mrf.mxu0
        %v2661 = vadd.f32 0.0, %v2660
        %2662 = vmatmul.f32.gmra.mxu0 %v2412
        %v2663 = vpop.f32.mrf.mxu0
        %v2664 = vadd.f32 0.0, %v2663
        %2665 = vdwg.mxu0
        %2666 = vmatpush.msra.mxu0 0.0
        %2667 = vmatpush.msra.mxu0 0.0
        %2668 = vmatpush.msra.mxu0 0.0
        %2669 = vmatpush.msra.mxu0 0.0
        %2670 = vmatpush.msra.mxu0 0.0
        %2671 = vmatpush.msra.mxu0 0.0
        %2672 = vmatpush.msra.mxu0 0.0
        %2673 = vmatpush.msra.mxu0 0.0
        %2674 = vmatpush.msra.mxu0 0.0
        %2675 = vmatpush.msra.mxu0 0.0
        %2676 = vmatpush.msra.mxu0 0.0
        %2677 = vmatpush.msra.mxu0 %v2469
        %2678 = vmatpush.msra.mxu0 %v2312
        %2679 = vmatpush.msra.mxu0 %v2310
        %2680 = vmatpush.msra.mxu0 %v2308
        %2681 = vmatpush.msra.mxu0 %v2306
        %2682 = vmatmul.f32.gmra.mxu0 %v2432
        %v2683 = vpop.f32.mrf.mxu0
        %v2684 = vadd.f32 %v2619, %v2683
        %2685 = vmatmul.f32.gmra.mxu0 %v2434
        %v2686 = vpop.f32.mrf.mxu0
        %v2687 = vadd.f32 %v2622, %v2686
        %2688 = vmatmul.f32.gmra.mxu0 %v2436
        %v2689 = vpop.f32.mrf.mxu0
        %v2690 = vadd.f32 %v2625, %v2689
        %2691 = vmatmul.f32.gmra.mxu0 %v2438
        %v2692 = vpop.f32.mrf.mxu0
        %v2693 = vadd.f32 %v2628, %v2692
        %2694 = vmatmul.f32.gmra.mxu0 %v2440
        %v2695 = vpop.f32.mrf.mxu0
        %v2696 = vadd.f32 %v2631, %v2695
        %2697 = vmatmul.f32.gmra.mxu0 %v2442
        %v2698 = vpop.f32.mrf.mxu0
        %v2699 = vadd.f32 %v2634, %v2698
        %2700 = vmatmul.f32.gmra.mxu0 %v2444
        %v2701 = vpop.f32.mrf.mxu0
        %v2702 = vadd.f32 %v2637, %v2701
        %2703 = vmatmul.f32.gmra.mxu0 %v2446
        %v2704 = vpop.f32.mrf.mxu0
        %v2705 = vadd.f32 %v2640, %v2704
        %2706 = vmatmul.f32.gmra.mxu0 %v2448
        %v2707 = vpop.f32.mrf.mxu0
        %v2708 = vadd.f32 %v2643, %v2707
        %2709 = vmatmul.f32.gmra.mxu0 %v2450
        %v2710 = vpop.f32.mrf.mxu0
        %v2711 = vadd.f32 %v2646, %v2710
        %2712 = vmatmul.f32.gmra.mxu0 %v2452
        %v2713 = vpop.f32.mrf.mxu0
        %v2714 = vadd.f32 %v2649, %v2713
        %2715 = vmatmul.f32.gmra.mxu0 %v2454
        %v2716 = vpop.f32.mrf.mxu0
        %v2717 = vadd.f32 %v2652, %v2716
        %2718 = vmatmul.f32.gmra.mxu0 %v2456
        %v2719 = vpop.f32.mrf.mxu0
        %v2720 = vadd.f32 %v2655, %v2719
        %2721 = vmatmul.f32.gmra.mxu0 %v2458
        %v2722 = vpop.f32.mrf.mxu0
        %v2723 = vadd.f32 %v2658, %v2722
        %2724 = vmatmul.f32.gmra.mxu0 %v2460
        %v2725 = vpop.f32.mrf.mxu0
        %v2726 = vadd.f32 %v2661, %v2725
        %2727 = vmatmul.f32.gmra.mxu0 %v2462
        %v2728 = vpop.f32.mrf.mxu0
        %v2729 = vadd.f32 %v2664, %v2728
        %2730 = vdwg.mxu0
        %v2731 = vsel %vm2431, %v2180, 0
        %v2733 = vsel %vm2431, %v2183, 0
        %v2735 = vsel %vm2431, %v2186, 0
        %v2737 = vsel %vm2431, %v2189, 0
        %v2739 = vsel %vm2431, %v2192, 0
        %v2741 = vsel %vm2431, %v2195, 0
        %v2743 = vsel %vm2431, %v2198, 0
        %v2745 = vsel %vm2431, %v2201, 0
        %v2747 = vsel %vm2431, %v2204, 0
        %v2749 = vsel %vm2431, %v2207, 0
        %v2751 = vsel %vm2431, %v2210, 0
        %v2753 = vsel %vm2431, %v2213, 0
        %v2755 = vsel %vm2431, %v2216, 0
        %v2757 = vsel %vm2431, %v2219, 0
        %v2759 = vsel %vm2431, %v2222, 0
        %v2761 = vsel %vm2431, %v2225, 0
        %v2764 = vsel %vm2464, %v2270, 0
        %v2767 = vsel %vm2464, %v2271, 0
        %2769 = vmatpush.msra.mxu0 %v2260
        %2770 = vmatpush.msra.mxu0 %v2258
        %2771 = vmatpush.msra.mxu0 %v2256
        %2772 = vmatpush.msra.mxu0 %v2254
        %2773 = vmatpush.msra.mxu0 %v2252
        %2774 = vmatpush.msra.mxu0 %v2250
        %2775 = vmatpush.msra.mxu0 %v2248
        %2776 = vmatpush.msra.mxu0 %v2246
        %2777 = vmatpush.msra.mxu0 %v2244
        %2778 = vmatpush.msra.mxu0 %v2242
        %2779 = vmatpush.msra.mxu0 %v2240
        %2780 = vmatpush.msra.mxu0 %v2238
        %2781 = vmatpush.msra.mxu0 %v2236
        %2782 = vmatpush.msra.mxu0 %v2234
        %2783 = vmatpush.msra.mxu0 %v2232
        %2784 = vmatpush.msra.mxu0 %v2230
        %2785 = vmatmul.f32.gmra.mxu0 %v2044
        %v2786 = vpop.f32.mrf.mxu0
        %v2787 = vadd.f32 %v2554, %v2786
        %2788 = vmatmul.f32.gmra.mxu0 %v2047
        %v2789 = vpop.f32.mrf.mxu0
        %v2790 = vadd.f32 %v2557, %v2789
        %2791 = vmatmul.f32.gmra.mxu0 %v2050
        %v2792 = vpop.f32.mrf.mxu0
        %v2793 = vadd.f32 %v2560, %v2792
        %2794 = vmatmul.f32.gmra.mxu0 %v2053
        %v2795 = vpop.f32.mrf.mxu0
        %v2796 = vadd.f32 %v2563, %v2795
        %2797 = vmatmul.f32.gmra.mxu0 %v2056
        %v2798 = vpop.f32.mrf.mxu0
        %v2799 = vadd.f32 %v2566, %v2798
        %2800 = vmatmul.f32.gmra.mxu0 %v2059
        %v2801 = vpop.f32.mrf.mxu0
        %v2802 = vadd.f32 %v2569, %v2801
        %2803 = vmatmul.f32.gmra.mxu0 %v2062
        %v2804 = vpop.f32.mrf.mxu0
        %v2805 = vadd.f32 %v2572, %v2804
        %2806 = vmatmul.f32.gmra.mxu0 %v2065
        %v2807 = vpop.f32.mrf.mxu0
        %v2808 = vadd.f32 %v2575, %v2807
        %2809 = vmatmul.f32.gmra.mxu0 %v2068
        %v2810 = vpop.f32.mrf.mxu0
        %v2811 = vadd.f32 %v2578, %v2810
        %2812 = vmatmul.f32.gmra.mxu0 %v2071
        %v2813 = vpop.f32.mrf.mxu0
        %v2814 = vadd.f32 %v2581, %v2813
        %2815 = vmatmul.f32.gmra.mxu0 %v2074
        %v2816 = vpop.f32.mrf.mxu0
        %v2817 = vadd.f32 %v2584, %v2816
        %2818 = vmatmul.f32.gmra.mxu0 %v2077
        %v2819 = vpop.f32.mrf.mxu0
        %v2820 = vadd.f32 %v2587, %v2819
        %2821 = vmatmul.f32.gmra.mxu0 %v2080
        %v2822 = vpop.f32.mrf.mxu0
        %v2823 = vadd.f32 %v2590, %v2822
        %2824 = vmatmul.f32.gmra.mxu0 %v2083
        %v2825 = vpop.f32.mrf.mxu0
        %v2826 = vadd.f32 %v2593, %v2825
        %2827 = vmatmul.f32.gmra.mxu0 %v2086
        %v2828 = vpop.f32.mrf.mxu0
        %v2829 = vadd.f32 %v2596, %v2828
        %2830 = vmatmul.f32.gmra.mxu0 %v2089
        %v2831 = vpop.f32.mrf.mxu0
        %v2832 = vadd.f32 %v2599, %v2831
        %2833 = vdwg.mxu0
        %2834 = vmatpush.msra.mxu0 0.0
        %2835 = vmatpush.msra.mxu0 0.0
        %2836 = vmatpush.msra.mxu0 0.0
        %2837 = vmatpush.msra.mxu0 0.0
        %2838 = vmatpush.msra.mxu0 0.0
        %2839 = vmatpush.msra.mxu0 0.0
        %2840 = vmatpush.msra.mxu0 0.0
        %2841 = vmatpush.msra.mxu0 0.0
        %2842 = vmatpush.msra.mxu0 0.0
        %2843 = vmatpush.msra.mxu0 0.0
        %2844 = vmatpush.msra.mxu0 0.0
        %2845 = vmatpush.msra.mxu0 %v2764
        %2846 = vmatpush.msra.mxu0 %v2268
        %2847 = vmatpush.msra.mxu0 %v2266
        %2848 = vmatpush.msra.mxu0 %v2264
        %2849 = vmatpush.msra.mxu0 %v2262
        %2850 = vmatmul.f32.gmra.mxu0 %v2731
        %v2851 = vpop.f32.mrf.mxu0
        %v2852 = vadd.f32 %v2787, %v2851
        %2853 = vmatmul.f32.gmra.mxu0 %v2733
        %v2854 = vpop.f32.mrf.mxu0
        %v2855 = vadd.f32 %v2790, %v2854
        %2856 = vmatmul.f32.gmra.mxu0 %v2735
        %v2857 = vpop.f32.mrf.mxu0
        %v2858 = vadd.f32 %v2793, %v2857
        %2859 = vmatmul.f32.gmra.mxu0 %v2737
        %v2860 = vpop.f32.mrf.mxu0
        %v2861 = vadd.f32 %v2796, %v2860
        %2862 = vmatmul.f32.gmra.mxu0 %v2739
        %v2863 = vpop.f32.mrf.mxu0
        %v2864 = vadd.f32 %v2799, %v2863
        %2865 = vmatmul.f32.gmra.mxu0 %v2741
        %v2866 = vpop.f32.mrf.mxu0
        %v2867 = vadd.f32 %v2802, %v2866
        %2868 = vmatmul.f32.gmra.mxu0 %v2743
        %v2869 = vpop.f32.mrf.mxu0
        %v2870 = vadd.f32 %v2805, %v2869
        %2871 = vmatmul.f32.gmra.mxu0 %v2745
        %v2872 = vpop.f32.mrf.mxu0
        %v2873 = vadd.f32 %v2808, %v2872
        %2874 = vmatmul.f32.gmra.mxu0 %v2747
        %v2875 = vpop.f32.mrf.mxu0
        %v2876 = vadd.f32 %v2811, %v2875
        %2877 = vmatmul.f32.gmra.mxu0 %v2749
        %v2878 = vpop.f32.mrf.mxu0
        %v2879 = vadd.f32 %v2814, %v2878
        %2880 = vmatmul.f32.gmra.mxu0 %v2751
        %v2881 = vpop.f32.mrf.mxu0
        %v2882 = vadd.f32 %v2817, %v2881
        %2883 = vmatmul.f32.gmra.mxu0 %v2753
        %v2884 = vpop.f32.mrf.mxu0
        %v2885 = vadd.f32 %v2820, %v2884
        %2886 = vmatmul.f32.gmra.mxu0 %v2755
        %v2887 = vpop.f32.mrf.mxu0
        %v2888 = vadd.f32 %v2823, %v2887
        %2889 = vmatmul.f32.gmra.mxu0 %v2757
        %v2890 = vpop.f32.mrf.mxu0
        %v2891 = vadd.f32 %v2826, %v2890
        %2892 = vmatmul.f32.gmra.mxu0 %v2759
        %v2893 = vpop.f32.mrf.mxu0
        %v2894 = vadd.f32 %v2829, %v2893
        %2895 = vmatmul.f32.gmra.mxu0 %v2761
        %v2896 = vpop.f32.mrf.mxu0
        %v2897 = vadd.f32 %v2832, %v2896
        %2898 = vdwg.mxu0
        %2899 = vmatpush.msra.mxu0 %v2261
        %2900 = vmatpush.msra.mxu0 %v2259
        %2901 = vmatpush.msra.mxu0 %v2257
        %2902 = vmatpush.msra.mxu0 %v2255
        %2903 = vmatpush.msra.mxu0 %v2253
        %2904 = vmatpush.msra.mxu0 %v2251
        %2905 = vmatpush.msra.mxu0 %v2249
        %2906 = vmatpush.msra.mxu0 %v2247
        %2907 = vmatpush.msra.mxu0 %v2245
        %2908 = vmatpush.msra.mxu0 %v2243
        %2909 = vmatpush.msra.mxu0 %v2241
        %2910 = vmatpush.msra.mxu0 %v2239
        %2911 = vmatpush.msra.mxu0 %v2237
        %2912 = vmatpush.msra.mxu0 %v2235
        %2913 = vmatpush.msra.mxu0 %v2233
        %2914 = vmatpush.msra.mxu0 %v2231
        %2915 = vmatmul.f32.gmra.mxu0 %v2044
        %v2916 = vpop.f32.mrf.mxu0
        %v2917 = vadd.f32 %v2684, %v2916
        %2918 = vmatmul.f32.gmra.mxu0 %v2047
        %v2919 = vpop.f32.mrf.mxu0
        %v2920 = vadd.f32 %v2687, %v2919
        %2921 = vmatmul.f32.gmra.mxu0 %v2050
        %v2922 = vpop.f32.mrf.mxu0
        %v2923 = vadd.f32 %v2690, %v2922
        %2924 = vmatmul.f32.gmra.mxu0 %v2053
        %v2925 = vpop.f32.mrf.mxu0
        %v2926 = vadd.f32 %v2693, %v2925
        %2927 = vmatmul.f32.gmra.mxu0 %v2056
        %v2928 = vpop.f32.mrf.mxu0
        %v2929 = vadd.f32 %v2696, %v2928
        %2930 = vmatmul.f32.gmra.mxu0 %v2059
        %v2931 = vpop.f32.mrf.mxu0
        %v2932 = vadd.f32 %v2699, %v2931
        %2933 = vmatmul.f32.gmra.mxu0 %v2062
        %v2934 = vpop.f32.mrf.mxu0
        %v2935 = vadd.f32 %v2702, %v2934
        %2936 = vmatmul.f32.gmra.mxu0 %v2065
        %v2937 = vpop.f32.mrf.mxu0
        %v2938 = vadd.f32 %v2705, %v2937
        %2939 = vmatmul.f32.gmra.mxu0 %v2068
        %v2940 = vpop.f32.mrf.mxu0
        %v2941 = vadd.f32 %v2708, %v2940
        %2942 = vmatmul.f32.gmra.mxu0 %v2071
        %v2943 = vpop.f32.mrf.mxu0
        %v2944 = vadd.f32 %v2711, %v2943
        %2945 = vmatmul.f32.gmra.mxu0 %v2074
        %v2946 = vpop.f32.mrf.mxu0
        %v2947 = vadd.f32 %v2714, %v2946
        %2948 = vmatmul.f32.gmra.mxu0 %v2077
        %v2949 = vpop.f32.mrf.mxu0
        %v2950 = vadd.f32 %v2717, %v2949
        %2951 = vmatmul.f32.gmra.mxu0 %v2080
        %v2952 = vpop.f32.mrf.mxu0
        %v2953 = vadd.f32 %v2720, %v2952
        %2954 = vmatmul.f32.gmra.mxu0 %v2083
        %v2955 = vpop.f32.mrf.mxu0
        %v2956 = vadd.f32 %v2723, %v2955
        %2957 = vmatmul.f32.gmra.mxu0 %v2086
        %v2958 = vpop.f32.mrf.mxu0
        %v2959 = vadd.f32 %v2726, %v2958
        %2960 = vmatmul.f32.gmra.mxu0 %v2089
        %v2961 = vpop.f32.mrf.mxu0
        %v2962 = vadd.f32 %v2729, %v2961
        %2963 = vdwg.mxu0
        %2964 = vmatpush.msra.mxu0 0.0
        %2965 = vmatpush.msra.mxu0 0.0
        %2966 = vmatpush.msra.mxu0 0.0
        %2967 = vmatpush.msra.mxu0 0.0
        %2968 = vmatpush.msra.mxu0 0.0
        %2969 = vmatpush.msra.mxu0 0.0
        %2970 = vmatpush.msra.mxu0 0.0
        %2971 = vmatpush.msra.mxu0 0.0
        %2972 = vmatpush.msra.mxu0 0.0
        %2973 = vmatpush.msra.mxu0 0.0
        %2974 = vmatpush.msra.mxu0 0.0
        %2975 = vmatpush.msra.mxu0 %v2767
        %2976 = vmatpush.msra.mxu0 %v2269
        %2977 = vmatpush.msra.mxu0 %v2267
        %2978 = vmatpush.msra.mxu0 %v2265
        %2979 = vmatpush.msra.mxu0 %v2263
        %2980 = vmatmul.f32.gmra.mxu0 %v2731
        %v2981 = vpop.f32.mrf.mxu0
        %v2982 = vadd.f32 %v2917, %v2981
        %2983 = vmatmul.f32.gmra.mxu0 %v2733
        %v2984 = vpop.f32.mrf.mxu0
        %v2985 = vadd.f32 %v2920, %v2984
        %2986 = vmatmul.f32.gmra.mxu0 %v2735
        %v2987 = vpop.f32.mrf.mxu0
        %v2988 = vadd.f32 %v2923, %v2987
        %2989 = vmatmul.f32.gmra.mxu0 %v2737
        %v2990 = vpop.f32.mrf.mxu0
        %v2991 = vadd.f32 %v2926, %v2990
        %2992 = vmatmul.f32.gmra.mxu0 %v2739
        %v2993 = vpop.f32.mrf.mxu0
        %v2994 = vadd.f32 %v2929, %v2993
        %2995 = vmatmul.f32.gmra.mxu0 %v2741
        %v2996 = vpop.f32.mrf.mxu0
        %v2997 = vadd.f32 %v2932, %v2996
        %2998 = vmatmul.f32.gmra.mxu0 %v2743
        %v2999 = vpop.f32.mrf.mxu0
        %v3000 = vadd.f32 %v2935, %v2999
        %3001 = vmatmul.f32.gmra.mxu0 %v2745
        %v3002 = vpop.f32.mrf.mxu0
        %v3003 = vadd.f32 %v2938, %v3002
        %3004 = vmatmul.f32.gmra.mxu0 %v2747
        %v3005 = vpop.f32.mrf.mxu0
        %v3006 = vadd.f32 %v2941, %v3005
        %3007 = vmatmul.f32.gmra.mxu0 %v2749
        %v3008 = vpop.f32.mrf.mxu0
        %v3009 = vadd.f32 %v2944, %v3008
        %3010 = vmatmul.f32.gmra.mxu0 %v2751
        %v3011 = vpop.f32.mrf.mxu0
        %v3012 = vadd.f32 %v2947, %v3011
        %3013 = vmatmul.f32.gmra.mxu0 %v2753
        %v3014 = vpop.f32.mrf.mxu0
        %v3015 = vadd.f32 %v2950, %v3014
        %3016 = vmatmul.f32.gmra.mxu0 %v2755
        %v3017 = vpop.f32.mrf.mxu0
        %v3018 = vadd.f32 %v2953, %v3017
        %3019 = vmatmul.f32.gmra.mxu0 %v2757
        %v3020 = vpop.f32.mrf.mxu0
        %v3021 = vadd.f32 %v2956, %v3020
        %3022 = vmatmul.f32.gmra.mxu0 %v2759
        %v3023 = vpop.f32.mrf.mxu0
        %v3024 = vadd.f32 %v2959, %v3023
        %3025 = vmatmul.f32.gmra.mxu0 %v2761
        %v3026 = vpop.f32.mrf.mxu0
        %v3027 = vadd.f32 %v2962, %v3026
        %3028 = vdwg.mxu0
        %s3029 = scalar_lea.vmem %s4, 672
        %v3030 = vld [vmem:[%s3029] sm:$0xff]
        %v3031 = vld [vmem:[%s3029 + $0x8] sm:$0xff]
        %v3032 = vld [vmem:[%s3029 + $0x10] sm:$0xff]
        %v3033 = vld [vmem:[%s3029 + $0x18] sm:$0xff]
        %v3034 = vld [vmem:[%s3029 + $0x20] sm:$0xff]
        %v3035 = vld [vmem:[%s3029 + $0x28] sm:$0xff]
        %v3036 = vld [vmem:[%s3029 + $0x30] sm:$0xff]
        %v3037 = vld [vmem:[%s3029 + $0x38] sm:$0xff]
        %v3038 = vld [vmem:[%s3029 + $0x40] sm:$0xff]
        %v3039 = vld [vmem:[%s3029 + $0x48] sm:$0xff]
        %v3040 = vld [vmem:[%s3029 + $0x50] sm:$0xff]
        %v3041 = vld [vmem:[%s3029 + $0x58] sm:$0xff]
        %v3042 = vld [vmem:[%s3029 + $0x60] sm:$0xff]
        %v3043 = vld [vmem:[%s3029 + $0x68] sm:$0xff]
        %v3044 = vld [vmem:[%s3029 + $0x70] sm:$0xff]
        %v3045 = vld [vmem:[%s3029 + $0x78] sm:$0xff]
        %v3046 = vld [vmem:[%s3029 + $0x80] sm:$0xff]
        %v3047 = vld [vmem:[%s3029 + $0x88] sm:$0xff]
        %v3048 = vld [vmem:[%s3029 + $0x90] sm:$0xff]
        %v3049 = vld [vmem:[%s3029 + $0x98] sm:$0xff]
        %v3050 = vld [vmem:[%s3029 + $0xa0] sm:$0xff]
        %v3051 = vld [vmem:[%s3029 + $0xa8] sm:$0xff]
        %v3052 = vld [vmem:[%s3029 + $0xb0] sm:$0xff]
        %v3053 = vld [vmem:[%s3029 + $0xb8] sm:$0xff]
        %v3054 = vld [vmem:[%s3029 + $0xc0] sm:$0xff]
        %v3055 = vld [vmem:[%s3029 + $0xc8] sm:$0xff]
        %v3056 = vld [vmem:[%s3029 + $0xd0] sm:$0xff]
        %v3057 = vld [vmem:[%s3029 + $0xd8] sm:$0xff]
        %v3058 = vld [vmem:[%s3029 + $0xe0] sm:$0xff]
        %v3059 = vld [vmem:[%s3029 + $0xe8] sm:$0xff]
        %v3060 = vld [vmem:[%s3029 + $0xf0] sm:$0xff]
        %v3061 = vld [vmem:[%s3029 + $0xf8] sm:$0xff]
        %v3062 = vld [vmem:[%s3029 + $0x100] sm:$0xff]
        %v3063 = vld [vmem:[%s3029 + $0x108] sm:$0xff]
        %v3064 = vld [vmem:[%s3029 + $0x110] sm:$0xff]
        %v3065 = vld [vmem:[%s3029 + $0x118] sm:$0xff]
        %v3066 = vld [vmem:[%s3029 + $0x120] sm:$0xff]
        %v3067 = vld [vmem:[%s3029 + $0x128] sm:$0xff]
        %v3068 = vld [vmem:[%s3029 + $0x130] sm:$0xff]
        %v3069 = vld [vmem:[%s3029 + $0x138] sm:$0xff]
        %v3070 = vld [vmem:[%s3029 + $0x140] sm:$0x3]
        %v3071 = vld [vmem:[%s3029 + $0x148] sm:$0x3]
        %vm3072 = vcmask 1045504
        %v3073 = vrot.slane %v2044, 2
        %v3074 = vrot.slane %v2047, 2
        %v3075 = vsel %vm3072, %v3073, %v3074
        %v3076 = vrot.slane %v2180, 2
        %v3077 = vrot.slane %v2183, 2
        %v3078 = vsel %vm3072, %v3076, %v3077
        %v3079 = vrot.slane %v2050, 2
        %v3080 = vsel %vm3072, %v3074, %v3079
        %v3081 = vrot.slane %v2186, 2
        %v3082 = vsel %vm3072, %v3077, %v3081
        %v3083 = vrot.slane %v2053, 2
        %v3084 = vsel %vm3072, %v3079, %v3083
        %v3085 = vrot.slane %v2189, 2
        %v3086 = vsel %vm3072, %v3081, %v3085
        %v3087 = vrot.slane %v2056, 2
        %v3088 = vsel %vm3072, %v3083, %v3087
        %v3089 = vrot.slane %v2192, 2
        %v3090 = vsel %vm3072, %v3085, %v3089
        %v3091 = vrot.slane %v2059, 2
        %v3092 = vsel %vm3072, %v3087, %v3091
        %v3093 = vrot.slane %v2195, 2
        %v3094 = vsel %vm3072, %v3089, %v3093
        %v3095 = vrot.slane %v2062, 2
        %v3096 = vsel %vm3072, %v3091, %v3095
        %v3097 = vrot.slane %v2198, 2
        %v3098 = vsel %vm3072, %v3093, %v3097
        %v3099 = vrot.slane %v2065, 2
        %v3100 = vsel %vm3072, %v3095, %v3099
        %v3101 = vrot.slane %v2201, 2
        %v3102 = vsel %vm3072, %v3097, %v3101
        %v3103 = vrot.slane %v2068, 2
        %v3104 = vsel %vm3072, %v3099, %v3103
        %v3105 = vrot.slane %v2204, 2
        %v3106 = vsel %vm3072, %v3101, %v3105
        %v3107 = vrot.slane %v2071, 2
        %v3108 = vsel %vm3072, %v3103, %v3107
        %v3109 = vrot.slane %v2207, 2
        %v3110 = vsel %vm3072, %v3105, %v3109
        %v3111 = vrot.slane %v2074, 2
        %v3112 = vsel %vm3072, %v3107, %v3111
        %v3113 = vrot.slane %v2210, 2
        %v3114 = vsel %vm3072, %v3109, %v3113
        %v3115 = vrot.slane %v2077, 2
        %v3116 = vsel %vm3072, %v3111, %v3115
        %v3117 = vrot.slane %v2213, 2
        %v3118 = vsel %vm3072, %v3113, %v3117
        %v3119 = vrot.slane %v2080, 2
        %v3120 = vsel %vm3072, %v3115, %v3119
        %v3121 = vrot.slane %v2216, 2
        %v3122 = vsel %vm3072, %v3117, %v3121
        %v3123 = vrot.slane %v2083, 2
        %v3124 = vsel %vm3072, %v3119, %v3123
        %v3125 = vrot.slane %v2219, 2
        %v3126 = vsel %vm3072, %v3121, %v3125
        %v3127 = vrot.slane %v2086, 2
        %v3128 = vsel %vm3072, %v3123, %v3127
        %v3129 = vrot.slane %v2222, 2
        %v3130 = vsel %vm3072, %v3125, %v3129
        %v3131 = vrot.slane %v2089, 2
        %v3132 = vsel %vm3072, %v3127, %v3131
        %v3133 = vrot.slane %v2225, 2
        %v3134 = vsel %vm3072, %v3129, %v3133
        %v3135 = vrot.slane %v2092, 2
        %v3136 = vsel %vm3072, %v3131, %v3135
        %v3137 = vrot.slane %v2228, 2
        %v3138 = vsel %vm3072, %v3133, %v3137
        %v3155 = vsel %vm2431, %v3078, 0
        %v3157 = vsel %vm2431, %v3082, 0
        %v3159 = vsel %vm2431, %v3086, 0
        %v3161 = vsel %vm2431, %v3090, 0
        %v3163 = vsel %vm2431, %v3094, 0
        %v3165 = vsel %vm2431, %v3098, 0
        %v3167 = vsel %vm2431, %v3102, 0
        %v3169 = vsel %vm2431, %v3106, 0
        %v3171 = vsel %vm2431, %v3110, 0
        %v3173 = vsel %vm2431, %v3114, 0
        %v3175 = vsel %vm2431, %v3118, 0
        %v3177 = vsel %vm2431, %v3122, 0
        %v3179 = vsel %vm2431, %v3126, 0
        %v3181 = vsel %vm2431, %v3130, 0
        %v3183 = vsel %vm2431, %v3134, 0
        %v3185 = vsel %vm2431, %v3138, 0
        %v3188 = vsel %vm2464, %v3070, 0
        %v3191 = vsel %vm2464, %v3071, 0
        %3193 = vmatpush.msra.mxu0 %v3060
        %3194 = vmatpush.msra.mxu0 %v3058
        %3195 = vmatpush.msra.mxu0 %v3056
        %3196 = vmatpush.msra.mxu0 %v3054
        %3197 = vmatpush.msra.mxu0 %v3052
        %3198 = vmatpush.msra.mxu0 %v3050
        %3199 = vmatpush.msra.mxu0 %v3048
        %3200 = vmatpush.msra.mxu0 %v3046
        %3201 = vmatpush.msra.mxu0 %v3044
        %3202 = vmatpush.msra.mxu0 %v3042
        %3203 = vmatpush.msra.mxu0 %v3040
        %3204 = vmatpush.msra.mxu0 %v3038
        %3205 = vmatpush.msra.mxu0 %v3036
        %3206 = vmatpush.msra.mxu0 %v3034
        %3207 = vmatpush.msra.mxu0 %v3032
        %3208 = vmatpush.msra.mxu0 %v3030
        %3209 = vmatmul.f32.gmra.mxu0 %v3075
        %v3210 = vpop.f32.mrf.mxu0
        %v3211 = vadd.f32 0.0, %v3210
        %3212 = vmatmul.f32.gmra.mxu0 %v3080
        %v3213 = vpop.f32.mrf.mxu0
        %v3214 = vadd.f32 0.0, %v3213
        %3215 = vmatmul.f32.gmra.mxu0 %v3084
        %v3216 = vpop.f32.mrf.mxu0
        %v3217 = vadd.f32 0.0, %v3216
        %3218 = vmatmul.f32.gmra.mxu0 %v3088
        %v3219 = vpop.f32.mrf.mxu0
        %v3220 = vadd.f32 0.0, %v3219
        %3221 = vmatmul.f32.gmra.mxu0 %v3092
        %v3222 = vpop.f32.mrf.mxu0
        %v3223 = vadd.f32 0.0, %v3222
        %3224 = vmatmul.f32.gmra.mxu0 %v3096
        %v3225 = vpop.f32.mrf.mxu0
        %v3226 = vadd.f32 0.0, %v3225
        %3227 = vmatmul.f32.gmra.mxu0 %v3100
        %v3228 = vpop.f32.mrf.mxu0
        %v3229 = vadd.f32 0.0, %v3228
        %3230 = vmatmul.f32.gmra.mxu0 %v3104
        %v3231 = vpop.f32.mrf.mxu0
        %v3232 = vadd.f32 0.0, %v3231
        %3233 = vmatmul.f32.gmra.mxu0 %v3108
        %v3234 = vpop.f32.mrf.mxu0
        %v3235 = vadd.f32 0.0, %v3234
        %3236 = vmatmul.f32.gmra.mxu0 %v3112
        %v3237 = vpop.f32.mrf.mxu0
        %v3238 = vadd.f32 0.0, %v3237
        %3239 = vmatmul.f32.gmra.mxu0 %v3116
        %v3240 = vpop.f32.mrf.mxu0
        %v3241 = vadd.f32 0.0, %v3240
        %3242 = vmatmul.f32.gmra.mxu0 %v3120
        %v3243 = vpop.f32.mrf.mxu0
        %v3244 = vadd.f32 0.0, %v3243
        %3245 = vmatmul.f32.gmra.mxu0 %v3124
        %v3246 = vpop.f32.mrf.mxu0
        %v3247 = vadd.f32 0.0, %v3246
        %3248 = vmatmul.f32.gmra.mxu0 %v3128
        %v3249 = vpop.f32.mrf.mxu0
        %v3250 = vadd.f32 0.0, %v3249
        %3251 = vmatmul.f32.gmra.mxu0 %v3132
        %v3252 = vpop.f32.mrf.mxu0
        %v3253 = vadd.f32 0.0, %v3252
        %3254 = vmatmul.f32.gmra.mxu0 %v3136
        %v3255 = vpop.f32.mrf.mxu0
        %v3256 = vadd.f32 0.0, %v3255
        %3257 = vdwg.mxu0
        %3258 = vmatpush.msra.mxu0 0.0
        %3259 = vmatpush.msra.mxu0 0.0
        %3260 = vmatpush.msra.mxu0 0.0
        %3261 = vmatpush.msra.mxu0 0.0
        %3262 = vmatpush.msra.mxu0 0.0
        %3263 = vmatpush.msra.mxu0 0.0
        %3264 = vmatpush.msra.mxu0 0.0
        %3265 = vmatpush.msra.mxu0 0.0
        %3266 = vmatpush.msra.mxu0 0.0
        %3267 = vmatpush.msra.mxu0 0.0
        %3268 = vmatpush.msra.mxu0 0.0
        %3269 = vmatpush.msra.mxu0 %v3188
        %3270 = vmatpush.msra.mxu0 %v3068
        %3271 = vmatpush.msra.mxu0 %v3066
        %3272 = vmatpush.msra.mxu0 %v3064
        %3273 = vmatpush.msra.mxu0 %v3062
        %3274 = vmatmul.f32.gmra.mxu0 %v3155
        %v3275 = vpop.f32.mrf.mxu0
        %v3276 = vadd.f32 %v3211, %v3275
        %3277 = vmatmul.f32.gmra.mxu0 %v3157
        %v3278 = vpop.f32.mrf.mxu0
        %v3279 = vadd.f32 %v3214, %v3278
        %3280 = vmatmul.f32.gmra.mxu0 %v3159
        %v3281 = vpop.f32.mrf.mxu0
        %v3282 = vadd.f32 %v3217, %v3281
        %3283 = vmatmul.f32.gmra.mxu0 %v3161
        %v3284 = vpop.f32.mrf.mxu0
        %v3285 = vadd.f32 %v3220, %v3284
        %3286 = vmatmul.f32.gmra.mxu0 %v3163
        %v3287 = vpop.f32.mrf.mxu0
        %v3288 = vadd.f32 %v3223, %v3287
        %3289 = vmatmul.f32.gmra.mxu0 %v3165
        %v3290 = vpop.f32.mrf.mxu0
        %v3291 = vadd.f32 %v3226, %v3290
        %3292 = vmatmul.f32.gmra.mxu0 %v3167
        %v3293 = vpop.f32.mrf.mxu0
        %v3294 = vadd.f32 %v3229, %v3293
        %3295 = vmatmul.f32.gmra.mxu0 %v3169
        %v3296 = vpop.f32.mrf.mxu0
        %v3297 = vadd.f32 %v3232, %v3296
        %3298 = vmatmul.f32.gmra.mxu0 %v3171
        %v3299 = vpop.f32.mrf.mxu0
        %v3300 = vadd.f32 %v3235, %v3299
        %3301 = vmatmul.f32.gmra.mxu0 %v3173
        %v3302 = vpop.f32.mrf.mxu0
        %v3303 = vadd.f32 %v3238, %v3302
        %3304 = vmatmul.f32.gmra.mxu0 %v3175
        %v3305 = vpop.f32.mrf.mxu0
        %v3306 = vadd.f32 %v3241, %v3305
        %3307 = vmatmul.f32.gmra.mxu0 %v3177
        %v3308 = vpop.f32.mrf.mxu0
        %v3309 = vadd.f32 %v3244, %v3308
        %3310 = vmatmul.f32.gmra.mxu0 %v3179
        %v3311 = vpop.f32.mrf.mxu0
        %v3312 = vadd.f32 %v3247, %v3311
        %3313 = vmatmul.f32.gmra.mxu0 %v3181
        %v3314 = vpop.f32.mrf.mxu0
        %v3315 = vadd.f32 %v3250, %v3314
        %3316 = vmatmul.f32.gmra.mxu0 %v3183
        %v3317 = vpop.f32.mrf.mxu0
        %v3318 = vadd.f32 %v3253, %v3317
        %3319 = vmatmul.f32.gmra.mxu0 %v3185
        %v3320 = vpop.f32.mrf.mxu0
        %v3321 = vadd.f32 %v3256, %v3320
        %3322 = vdwg.mxu0
        %3323 = vmatpush.msra.mxu0 %v3061
        %3324 = vmatpush.msra.mxu0 %v3059
        %3325 = vmatpush.msra.mxu0 %v3057
        %3326 = vmatpush.msra.mxu0 %v3055
        %3327 = vmatpush.msra.mxu0 %v3053
        %3328 = vmatpush.msra.mxu0 %v3051
        %3329 = vmatpush.msra.mxu0 %v3049
        %3330 = vmatpush.msra.mxu0 %v3047
        %3331 = vmatpush.msra.mxu0 %v3045
        %3332 = vmatpush.msra.mxu0 %v3043
        %3333 = vmatpush.msra.mxu0 %v3041
        %3334 = vmatpush.msra.mxu0 %v3039
        %3335 = vmatpush.msra.mxu0 %v3037
        %3336 = vmatpush.msra.mxu0 %v3035
        %3337 = vmatpush.msra.mxu0 %v3033
        %3338 = vmatpush.msra.mxu0 %v3031
        %3339 = vmatmul.f32.gmra.mxu0 %v3075
        %v3340 = vpop.f32.mrf.mxu0
        %v3341 = vadd.f32 0.0, %v3340
        %3342 = vmatmul.f32.gmra.mxu0 %v3080
        %v3343 = vpop.f32.mrf.mxu0
        %v3344 = vadd.f32 0.0, %v3343
        %3345 = vmatmul.f32.gmra.mxu0 %v3084
        %v3346 = vpop.f32.mrf.mxu0
        %v3347 = vadd.f32 0.0, %v3346
        %3348 = vmatmul.f32.gmra.mxu0 %v3088
        %v3349 = vpop.f32.mrf.mxu0
        %v3350 = vadd.f32 0.0, %v3349
        %3351 = vmatmul.f32.gmra.mxu0 %v3092
        %v3352 = vpop.f32.mrf.mxu0
        %v3353 = vadd.f32 0.0, %v3352
        %3354 = vmatmul.f32.gmra.mxu0 %v3096
        %v3355 = vpop.f32.mrf.mxu0
        %v3356 = vadd.f32 0.0, %v3355
        %3357 = vmatmul.f32.gmra.mxu0 %v3100
        %v3358 = vpop.f32.mrf.mxu0
        %v3359 = vadd.f32 0.0, %v3358
        %3360 = vmatmul.f32.gmra.mxu0 %v3104
        %v3361 = vpop.f32.mrf.mxu0
        %v3362 = vadd.f32 0.0, %v3361
        %3363 = vmatmul.f32.gmra.mxu0 %v3108
        %v3364 = vpop.f32.mrf.mxu0
        %v3365 = vadd.f32 0.0, %v3364
        %3366 = vmatmul.f32.gmra.mxu0 %v3112
        %v3367 = vpop.f32.mrf.mxu0
        %v3368 = vadd.f32 0.0, %v3367
        %3369 = vmatmul.f32.gmra.mxu0 %v3116
        %v3370 = vpop.f32.mrf.mxu0
        %v3371 = vadd.f32 0.0, %v3370
        %3372 = vmatmul.f32.gmra.mxu0 %v3120
        %v3373 = vpop.f32.mrf.mxu0
        %v3374 = vadd.f32 0.0, %v3373
        %3375 = vmatmul.f32.gmra.mxu0 %v3124
        %v3376 = vpop.f32.mrf.mxu0
        %v3377 = vadd.f32 0.0, %v3376
        %3378 = vmatmul.f32.gmra.mxu0 %v3128
        %v3379 = vpop.f32.mrf.mxu0
        %v3380 = vadd.f32 0.0, %v3379
        %3381 = vmatmul.f32.gmra.mxu0 %v3132
        %v3382 = vpop.f32.mrf.mxu0
        %v3383 = vadd.f32 0.0, %v3382
        %3384 = vmatmul.f32.gmra.mxu0 %v3136
        %v3385 = vpop.f32.mrf.mxu0
        %v3386 = vadd.f32 0.0, %v3385
        %3387 = vdwg.mxu0
        %3388 = vmatpush.msra.mxu0 0.0
        %3389 = vmatpush.msra.mxu0 0.0
        %3390 = vmatpush.msra.mxu0 0.0
        %3391 = vmatpush.msra.mxu0 0.0
        %3392 = vmatpush.msra.mxu0 0.0
        %3393 = vmatpush.msra.mxu0 0.0
        %3394 = vmatpush.msra.mxu0 0.0
        %3395 = vmatpush.msra.mxu0 0.0
        %3396 = vmatpush.msra.mxu0 0.0
        %3397 = vmatpush.msra.mxu0 0.0
        %3398 = vmatpush.msra.mxu0 0.0
        %3399 = vmatpush.msra.mxu0 %v3191
        %3400 = vmatpush.msra.mxu0 %v3069
        %3401 = vmatpush.msra.mxu0 %v3067
        %3402 = vmatpush.msra.mxu0 %v3065
        %3403 = vmatpush.msra.mxu0 %v3063
        %3404 = vmatmul.f32.gmra.mxu0 %v3155
        %v3405 = vpop.f32.mrf.mxu0
        %v3406 = vadd.f32 %v3341, %v3405
        %3407 = vmatmul.f32.gmra.mxu0 %v3157
        %v3408 = vpop.f32.mrf.mxu0
        %v3409 = vadd.f32 %v3344, %v3408
        %3410 = vmatmul.f32.gmra.mxu0 %v3159
        %v3411 = vpop.f32.mrf.mxu0
        %v3412 = vadd.f32 %v3347, %v3411
        %3413 = vmatmul.f32.gmra.mxu0 %v3161
        %v3414 = vpop.f32.mrf.mxu0
        %v3415 = vadd.f32 %v3350, %v3414
        %3416 = vmatmul.f32.gmra.mxu0 %v3163
        %v3417 = vpop.f32.mrf.mxu0
        %v3418 = vadd.f32 %v3353, %v3417
        %3419 = vmatmul.f32.gmra.mxu0 %v3165
        %v3420 = vpop.f32.mrf.mxu0
        %v3421 = vadd.f32 %v3356, %v3420
        %3422 = vmatmul.f32.gmra.mxu0 %v3167
        %v3423 = vpop.f32.mrf.mxu0
        %v3424 = vadd.f32 %v3359, %v3423
        %3425 = vmatmul.f32.gmra.mxu0 %v3169
        %v3426 = vpop.f32.mrf.mxu0
        %v3427 = vadd.f32 %v3362, %v3426
        %3428 = vmatmul.f32.gmra.mxu0 %v3171
        %v3429 = vpop.f32.mrf.mxu0
        %v3430 = vadd.f32 %v3365, %v3429
        %3431 = vmatmul.f32.gmra.mxu0 %v3173
        %v3432 = vpop.f32.mrf.mxu0
        %v3433 = vadd.f32 %v3368, %v3432
        %3434 = vmatmul.f32.gmra.mxu0 %v3175
        %v3435 = vpop.f32.mrf.mxu0
        %v3436 = vadd.f32 %v3371, %v3435
        %3437 = vmatmul.f32.gmra.mxu0 %v3177
        %v3438 = vpop.f32.mrf.mxu0
        %v3439 = vadd.f32 %v3374, %v3438
        %3440 = vmatmul.f32.gmra.mxu0 %v3179
        %v3441 = vpop.f32.mrf.mxu0
        %v3442 = vadd.f32 %v3377, %v3441
        %3443 = vmatmul.f32.gmra.mxu0 %v3181
        %v3444 = vpop.f32.mrf.mxu0
        %v3445 = vadd.f32 %v3380, %v3444
        %3446 = vmatmul.f32.gmra.mxu0 %v3183
        %v3447 = vpop.f32.mrf.mxu0
        %v3448 = vadd.f32 %v3383, %v3447
        %3449 = vmatmul.f32.gmra.mxu0 %v3185
        %v3450 = vpop.f32.mrf.mxu0
        %v3451 = vadd.f32 %v3386, %v3450
        %3452 = vdwg.mxu0
        %v3453 = vadd.f32 %v2852, %v3276
        %v3454 = vadd.f32 %v2982, %v3406
        %v3455 = vadd.f32 %v2855, %v3279
        %v3456 = vadd.f32 %v2985, %v3409
        %v3457 = vadd.f32 %v2858, %v3282
        %v3458 = vadd.f32 %v2988, %v3412
        %v3459 = vadd.f32 %v2861, %v3285
        %v3460 = vadd.f32 %v2991, %v3415
        %v3461 = vadd.f32 %v2864, %v3288
        %v3462 = vadd.f32 %v2994, %v3418
        %v3463 = vadd.f32 %v2867, %v3291
        %v3464 = vadd.f32 %v2997, %v3421
        %v3465 = vadd.f32 %v2870, %v3294
        %v3466 = vadd.f32 %v3000, %v3424
        %v3467 = vadd.f32 %v2873, %v3297
        %v3468 = vadd.f32 %v3003, %v3427
        %v3469 = vadd.f32 %v2876, %v3300
        %v3470 = vadd.f32 %v3006, %v3430
        %v3471 = vadd.f32 %v2879, %v3303
        %v3472 = vadd.f32 %v3009, %v3433
        %v3473 = vadd.f32 %v2882, %v3306
        %v3474 = vadd.f32 %v3012, %v3436
        %v3475 = vadd.f32 %v2885, %v3309
        %v3476 = vadd.f32 %v3015, %v3439
        %v3477 = vadd.f32 %v2888, %v3312
        %v3478 = vadd.f32 %v3018, %v3442
        %v3479 = vadd.f32 %v2891, %v3315
        %v3480 = vadd.f32 %v3021, %v3445
        %v3481 = vadd.f32 %v2894, %v3318
        %v3482 = vadd.f32 %v3024, %v3448
        %v3483 = vadd.f32 %v2897, %v3321
        %v3484 = vadd.f32 %v3027, %v3451
        %s3485 = scalar_lea.vmem %s4, 1008
        %v3486 = vld [vmem:[%s3485] sm:$0xff]
        %v3487 = vld [vmem:[%s3485 + $0x8] sm:$0xff]
        %v3488 = vld [vmem:[%s3485 + $0x10] sm:$0xff]
        %v3489 = vld [vmem:[%s3485 + $0x18] sm:$0xff]
        %v3490 = vld [vmem:[%s3485 + $0x20] sm:$0xff]
        %v3491 = vld [vmem:[%s3485 + $0x28] sm:$0xff]
        %v3492 = vld [vmem:[%s3485 + $0x30] sm:$0xff]
        %v3493 = vld [vmem:[%s3485 + $0x38] sm:$0xff]
        %v3494 = vld [vmem:[%s3485 + $0x40] sm:$0xff]
        %v3495 = vld [vmem:[%s3485 + $0x48] sm:$0xff]
        %v3496 = vld [vmem:[%s3485 + $0x50] sm:$0xff]
        %v3497 = vld [vmem:[%s3485 + $0x58] sm:$0xff]
        %v3498 = vld [vmem:[%s3485 + $0x60] sm:$0xff]
        %v3499 = vld [vmem:[%s3485 + $0x68] sm:$0xff]
        %v3500 = vld [vmem:[%s3485 + $0x70] sm:$0xff]
        %v3501 = vld [vmem:[%s3485 + $0x78] sm:$0xff]
        %v3502 = vld [vmem:[%s3485 + $0x80] sm:$0xff]
        %v3503 = vld [vmem:[%s3485 + $0x88] sm:$0xff]
        %v3504 = vld [vmem:[%s3485 + $0x90] sm:$0xff]
        %v3505 = vld [vmem:[%s3485 + $0x98] sm:$0xff]
        %v3506 = vld [vmem:[%s3485 + $0xa0] sm:$0xff]
        %v3507 = vld [vmem:[%s3485 + $0xa8] sm:$0xff]
        %v3508 = vld [vmem:[%s3485 + $0xb0] sm:$0xff]
        %v3509 = vld [vmem:[%s3485 + $0xb8] sm:$0xff]
        %v3510 = vld [vmem:[%s3485 + $0xc0] sm:$0xff]
        %v3511 = vld [vmem:[%s3485 + $0xc8] sm:$0xff]
        %v3512 = vld [vmem:[%s3485 + $0xd0] sm:$0xff]
        %v3513 = vld [vmem:[%s3485 + $0xd8] sm:$0xff]
        %v3514 = vld [vmem:[%s3485 + $0xe0] sm:$0xff]
        %v3515 = vld [vmem:[%s3485 + $0xe8] sm:$0xff]
        %v3516 = vld [vmem:[%s3485 + $0xf0] sm:$0xff]
        %v3517 = vld [vmem:[%s3485 + $0xf8] sm:$0xff]
        %v3518 = vld [vmem:[%s3485 + $0x100] sm:$0xff]
        %v3519 = vld [vmem:[%s3485 + $0x108] sm:$0xff]
        %v3520 = vld [vmem:[%s3485 + $0x110] sm:$0xff]
        %v3521 = vld [vmem:[%s3485 + $0x118] sm:$0xff]
        %v3522 = vld [vmem:[%s3485 + $0x120] sm:$0xff]
        %v3523 = vld [vmem:[%s3485 + $0x128] sm:$0xff]
        %v3524 = vld [vmem:[%s3485 + $0x130] sm:$0xff]
        %v3525 = vld [vmem:[%s3485 + $0x138] sm:$0xff]
        %v3526 = vld [vmem:[%s3485 + $0x140] sm:$0x3]
        %v3527 = vld [vmem:[%s3485 + $0x148] sm:$0x3]
        %vm3528 = vcmask 1044480
        %v3529 = vrot.slane %v2044, 3
        %v3530 = vrot.slane %v2047, 3
        %v3531 = vsel %vm3528, %v3529, %v3530
        %v3532 = vrot.slane %v2180, 3
        %v3533 = vrot.slane %v2183, 3
        %v3534 = vsel %vm3528, %v3532, %v3533
        %v3535 = vrot.slane %v2050, 3
        %v3536 = vsel %vm3528, %v3530, %v3535
        %v3537 = vrot.slane %v2186, 3
        %v3538 = vsel %vm3528, %v3533, %v3537
        %v3539 = vrot.slane %v2053, 3
        %v3540 = vsel %vm3528, %v3535, %v3539
        %v3541 = vrot.slane %v2189, 3
        %v3542 = vsel %vm3528, %v3537, %v3541
        %v3543 = vrot.slane %v2056, 3
        %v3544 = vsel %vm3528, %v3539, %v3543
        %v3545 = vrot.slane %v2192, 3
        %v3546 = vsel %vm3528, %v3541, %v3545
        %v3547 = vrot.slane %v2059, 3
        %v3548 = vsel %vm3528, %v3543, %v3547
        %v3549 = vrot.slane %v2195, 3
        %v3550 = vsel %vm3528, %v3545, %v3549
        %v3551 = vrot.slane %v2062, 3
        %v3552 = vsel %vm3528, %v3547, %v3551
        %v3553 = vrot.slane %v2198, 3
        %v3554 = vsel %vm3528, %v3549, %v3553
        %v3555 = vrot.slane %v2065, 3
        %v3556 = vsel %vm3528, %v3551, %v3555
        %v3557 = vrot.slane %v2201, 3
        %v3558 = vsel %vm3528, %v3553, %v3557
        %v3559 = vrot.slane %v2068, 3
        %v3560 = vsel %vm3528, %v3555, %v3559
        %v3561 = vrot.slane %v2204, 3
        %v3562 = vsel %vm3528, %v3557, %v3561
        %v3563 = vrot.slane %v2071, 3
        %v3564 = vsel %vm3528, %v3559, %v3563
        %v3565 = vrot.slane %v2207, 3
        %v3566 = vsel %vm3528, %v3561, %v3565
        %v3567 = vrot.slane %v2074, 3
        %v3568 = vsel %vm3528, %v3563, %v3567
        %v3569 = vrot.slane %v2210, 3
        %v3570 = vsel %vm3528, %v3565, %v3569
        %v3571 = vrot.slane %v2077, 3
        %v3572 = vsel %vm3528, %v3567, %v3571
        %v3573 = vrot.slane %v2213, 3
        %v3574 = vsel %vm3528, %v3569, %v3573
        %v3575 = vrot.slane %v2080, 3
        %v3576 = vsel %vm3528, %v3571, %v3575
        %v3577 = vrot.slane %v2216, 3
        %v3578 = vsel %vm3528, %v3573, %v3577
        %v3579 = vrot.slane %v2083, 3
        %v3580 = vsel %vm3528, %v3575, %v3579
        %v3581 = vrot.slane %v2219, 3
        %v3582 = vsel %vm3528, %v3577, %v3581
        %v3583 = vrot.slane %v2086, 3
        %v3584 = vsel %vm3528, %v3579, %v3583
        %v3585 = vrot.slane %v2222, 3
        %v3586 = vsel %vm3528, %v3581, %v3585
        %v3587 = vrot.slane %v2089, 3
        %v3588 = vsel %vm3528, %v3583, %v3587
        %v3589 = vrot.slane %v2225, 3
        %v3590 = vsel %vm3528, %v3585, %v3589
        %v3591 = vrot.slane %v2092, 3
        %v3592 = vsel %vm3528, %v3587, %v3591
        %v3593 = vrot.slane %v2228, 3
        %v3594 = vsel %vm3528, %v3589, %v3593
        %v3611 = vsel %vm2431, %v3534, 0
        %v3613 = vsel %vm2431, %v3538, 0
        %v3615 = vsel %vm2431, %v3542, 0
        %v3617 = vsel %vm2431, %v3546, 0
        %v3619 = vsel %vm2431, %v3550, 0
        %v3621 = vsel %vm2431, %v3554, 0
        %v3623 = vsel %vm2431, %v3558, 0
        %v3625 = vsel %vm2431, %v3562, 0
        %v3627 = vsel %vm2431, %v3566, 0
        %v3629 = vsel %vm2431, %v3570, 0
        %v3631 = vsel %vm2431, %v3574, 0
        %v3633 = vsel %vm2431, %v3578, 0
        %v3635 = vsel %vm2431, %v3582, 0
        %v3637 = vsel %vm2431, %v3586, 0
        %v3639 = vsel %vm2431, %v3590, 0
        %v3641 = vsel %vm2431, %v3594, 0
        %v3644 = vsel %vm2464, %v3526, 0
        %v3647 = vsel %vm2464, %v3527, 0
        %3649 = vmatpush.msra.mxu0 %v3516
        %3650 = vmatpush.msra.mxu0 %v3514
        %3651 = vmatpush.msra.mxu0 %v3512
        %3652 = vmatpush.msra.mxu0 %v3510
        %3653 = vmatpush.msra.mxu0 %v3508
        %3654 = vmatpush.msra.mxu0 %v3506
        %3655 = vmatpush.msra.mxu0 %v3504
        %3656 = vmatpush.msra.mxu0 %v3502
        %3657 = vmatpush.msra.mxu0 %v3500
        %3658 = vmatpush.msra.mxu0 %v3498
        %3659 = vmatpush.msra.mxu0 %v3496
        %3660 = vmatpush.msra.mxu0 %v3494
        %3661 = vmatpush.msra.mxu0 %v3492
        %3662 = vmatpush.msra.mxu0 %v3490
        %3663 = vmatpush.msra.mxu0 %v3488
        %3664 = vmatpush.msra.mxu0 %v3486
        %3665 = vmatmul.f32.gmra.mxu0 %v3531
        %v3666 = vpop.f32.mrf.mxu0
        %v3667 = vadd.f32 0.0, %v3666
        %3668 = vmatmul.f32.gmra.mxu0 %v3536
        %v3669 = vpop.f32.mrf.mxu0
        %v3670 = vadd.f32 0.0, %v3669
        %3671 = vmatmul.f32.gmra.mxu0 %v3540
        %v3672 = vpop.f32.mrf.mxu0
        %v3673 = vadd.f32 0.0, %v3672
        %3674 = vmatmul.f32.gmra.mxu0 %v3544
        %v3675 = vpop.f32.mrf.mxu0
        %v3676 = vadd.f32 0.0, %v3675
        %3677 = vmatmul.f32.gmra.mxu0 %v3548
        %v3678 = vpop.f32.mrf.mxu0
        %v3679 = vadd.f32 0.0, %v3678
        %3680 = vmatmul.f32.gmra.mxu0 %v3552
        %v3681 = vpop.f32.mrf.mxu0
        %v3682 = vadd.f32 0.0, %v3681
        %3683 = vmatmul.f32.gmra.mxu0 %v3556
        %v3684 = vpop.f32.mrf.mxu0
        %v3685 = vadd.f32 0.0, %v3684
        %3686 = vmatmul.f32.gmra.mxu0 %v3560
        %v3687 = vpop.f32.mrf.mxu0
        %v3688 = vadd.f32 0.0, %v3687
        %3689 = vmatmul.f32.gmra.mxu0 %v3564
        %v3690 = vpop.f32.mrf.mxu0
        %v3691 = vadd.f32 0.0, %v3690
        %3692 = vmatmul.f32.gmra.mxu0 %v3568
        %v3693 = vpop.f32.mrf.mxu0
        %v3694 = vadd.f32 0.0, %v3693
        %3695 = vmatmul.f32.gmra.mxu0 %v3572
        %v3696 = vpop.f32.mrf.mxu0
        %v3697 = vadd.f32 0.0, %v3696
        %3698 = vmatmul.f32.gmra.mxu0 %v3576
        %v3699 = vpop.f32.mrf.mxu0
        %v3700 = vadd.f32 0.0, %v3699
        %3701 = vmatmul.f32.gmra.mxu0 %v3580
        %v3702 = vpop.f32.mrf.mxu0
        %v3703 = vadd.f32 0.0, %v3702
        %3704 = vmatmul.f32.gmra.mxu0 %v3584
        %v3705 = vpop.f32.mrf.mxu0
        %v3706 = vadd.f32 0.0, %v3705
        %3707 = vmatmul.f32.gmra.mxu0 %v3588
        %v3708 = vpop.f32.mrf.mxu0
        %v3709 = vadd.f32 0.0, %v3708
        %3710 = vmatmul.f32.gmra.mxu0 %v3592
        %v3711 = vpop.f32.mrf.mxu0
        %v3712 = vadd.f32 0.0, %v3711
        %3713 = vdwg.mxu0
        %3714 = vmatpush.msra.mxu0 0.0
        %3715 = vmatpush.msra.mxu0 0.0
        %3716 = vmatpush.msra.mxu0 0.0
        %3717 = vmatpush.msra.mxu0 0.0
        %3718 = vmatpush.msra.mxu0 0.0
        %3719 = vmatpush.msra.mxu0 0.0
        %3720 = vmatpush.msra.mxu0 0.0
        %3721 = vmatpush.msra.mxu0 0.0
        %3722 = vmatpush.msra.mxu0 0.0
        %3723 = vmatpush.msra.mxu0 0.0
        %3724 = vmatpush.msra.mxu0 0.0
        %3725 = vmatpush.msra.mxu0 %v3644
        %3726 = vmatpush.msra.mxu0 %v3524
        %3727 = vmatpush.msra.mxu0 %v3522
        %3728 = vmatpush.msra.mxu0 %v3520
        %3729 = vmatpush.msra.mxu0 %v3518
        %3730 = vmatmul.f32.gmra.mxu0 %v3611
        %v3731 = vpop.f32.mrf.mxu0
        %v3732 = vadd.f32 %v3667, %v3731
        %3733 = vmatmul.f32.gmra.mxu0 %v3613
        %v3734 = vpop.f32.mrf.mxu0
        %v3735 = vadd.f32 %v3670, %v3734
        %3736 = vmatmul.f32.gmra.mxu0 %v3615
        %v3737 = vpop.f32.mrf.mxu0
        %v3738 = vadd.f32 %v3673, %v3737
        %3739 = vmatmul.f32.gmra.mxu0 %v3617
        %v3740 = vpop.f32.mrf.mxu0
        %v3741 = vadd.f32 %v3676, %v3740
        %3742 = vmatmul.f32.gmra.mxu0 %v3619
        %v3743 = vpop.f32.mrf.mxu0
        %v3744 = vadd.f32 %v3679, %v3743
        %3745 = vmatmul.f32.gmra.mxu0 %v3621
        %v3746 = vpop.f32.mrf.mxu0
        %v3747 = vadd.f32 %v3682, %v3746
        %3748 = vmatmul.f32.gmra.mxu0 %v3623
        %v3749 = vpop.f32.mrf.mxu0
        %v3750 = vadd.f32 %v3685, %v3749
        %3751 = vmatmul.f32.gmra.mxu0 %v3625
        %v3752 = vpop.f32.mrf.mxu0
        %v3753 = vadd.f32 %v3688, %v3752
        %3754 = vmatmul.f32.gmra.mxu0 %v3627
        %v3755 = vpop.f32.mrf.mxu0
        %v3756 = vadd.f32 %v3691, %v3755
        %3757 = vmatmul.f32.gmra.mxu0 %v3629
        %v3758 = vpop.f32.mrf.mxu0
        %v3759 = vadd.f32 %v3694, %v3758
        %3760 = vmatmul.f32.gmra.mxu0 %v3631
        %v3761 = vpop.f32.mrf.mxu0
        %v3762 = vadd.f32 %v3697, %v3761
        %3763 = vmatmul.f32.gmra.mxu0 %v3633
        %v3764 = vpop.f32.mrf.mxu0
        %v3765 = vadd.f32 %v3700, %v3764
        %3766 = vmatmul.f32.gmra.mxu0 %v3635
        %v3767 = vpop.f32.mrf.mxu0
        %v3768 = vadd.f32 %v3703, %v3767
        %3769 = vmatmul.f32.gmra.mxu0 %v3637
        %v3770 = vpop.f32.mrf.mxu0
        %v3771 = vadd.f32 %v3706, %v3770
        %3772 = vmatmul.f32.gmra.mxu0 %v3639
        %v3773 = vpop.f32.mrf.mxu0
        %v3774 = vadd.f32 %v3709, %v3773
        %3775 = vmatmul.f32.gmra.mxu0 %v3641
        %v3776 = vpop.f32.mrf.mxu0
        %v3777 = vadd.f32 %v3712, %v3776
        %3778 = vdwg.mxu0
        %3779 = vmatpush.msra.mxu0 %v3517
        %3780 = vmatpush.msra.mxu0 %v3515
        %3781 = vmatpush.msra.mxu0 %v3513
        %3782 = vmatpush.msra.mxu0 %v3511
        %3783 = vmatpush.msra.mxu0 %v3509
        %3784 = vmatpush.msra.mxu0 %v3507
        %3785 = vmatpush.msra.mxu0 %v3505
        %3786 = vmatpush.msra.mxu0 %v3503
        %3787 = vmatpush.msra.mxu0 %v3501
        %3788 = vmatpush.msra.mxu0 %v3499
        %3789 = vmatpush.msra.mxu0 %v3497
        %3790 = vmatpush.msra.mxu0 %v3495
        %3791 = vmatpush.msra.mxu0 %v3493
        %3792 = vmatpush.msra.mxu0 %v3491
        %3793 = vmatpush.msra.mxu0 %v3489
        %3794 = vmatpush.msra.mxu0 %v3487
        %3795 = vmatmul.f32.gmra.mxu0 %v3531
        %v3796 = vpop.f32.mrf.mxu0
        %v3797 = vadd.f32 0.0, %v3796
        %3798 = vmatmul.f32.gmra.mxu0 %v3536
        %v3799 = vpop.f32.mrf.mxu0
        %v3800 = vadd.f32 0.0, %v3799
        %3801 = vmatmul.f32.gmra.mxu0 %v3540
        %v3802 = vpop.f32.mrf.mxu0
        %v3803 = vadd.f32 0.0, %v3802
        %3804 = vmatmul.f32.gmra.mxu0 %v3544
        %v3805 = vpop.f32.mrf.mxu0
        %v3806 = vadd.f32 0.0, %v3805
        %3807 = vmatmul.f32.gmra.mxu0 %v3548
        %v3808 = vpop.f32.mrf.mxu0
        %v3809 = vadd.f32 0.0, %v3808
        %3810 = vmatmul.f32.gmra.mxu0 %v3552
        %v3811 = vpop.f32.mrf.mxu0
        %v3812 = vadd.f32 0.0, %v3811
        %3813 = vmatmul.f32.gmra.mxu0 %v3556
        %v3814 = vpop.f32.mrf.mxu0
        %v3815 = vadd.f32 0.0, %v3814
        %3816 = vmatmul.f32.gmra.mxu0 %v3560
        %v3817 = vpop.f32.mrf.mxu0
        %v3818 = vadd.f32 0.0, %v3817
        %3819 = vmatmul.f32.gmra.mxu0 %v3564
        %v3820 = vpop.f32.mrf.mxu0
        %v3821 = vadd.f32 0.0, %v3820
        %3822 = vmatmul.f32.gmra.mxu0 %v3568
        %v3823 = vpop.f32.mrf.mxu0
        %v3824 = vadd.f32 0.0, %v3823
        %3825 = vmatmul.f32.gmra.mxu0 %v3572
        %v3826 = vpop.f32.mrf.mxu0
        %v3827 = vadd.f32 0.0, %v3826
        %3828 = vmatmul.f32.gmra.mxu0 %v3576
        %v3829 = vpop.f32.mrf.mxu0
        %v3830 = vadd.f32 0.0, %v3829
        %3831 = vmatmul.f32.gmra.mxu0 %v3580
        %v3832 = vpop.f32.mrf.mxu0
        %v3833 = vadd.f32 0.0, %v3832
        %3834 = vmatmul.f32.gmra.mxu0 %v3584
        %v3835 = vpop.f32.mrf.mxu0
        %v3836 = vadd.f32 0.0, %v3835
        %3837 = vmatmul.f32.gmra.mxu0 %v3588
        %v3838 = vpop.f32.mrf.mxu0
        %v3839 = vadd.f32 0.0, %v3838
        %3840 = vmatmul.f32.gmra.mxu0 %v3592
        %v3841 = vpop.f32.mrf.mxu0
        %v3842 = vadd.f32 0.0, %v3841
        %3843 = vdwg.mxu0
        %3844 = vmatpush.msra.mxu0 0.0
        %3845 = vmatpush.msra.mxu0 0.0
        %3846 = vmatpush.msra.mxu0 0.0
        %3847 = vmatpush.msra.mxu0 0.0
        %3848 = vmatpush.msra.mxu0 0.0
        %3849 = vmatpush.msra.mxu0 0.0
        %3850 = vmatpush.msra.mxu0 0.0
        %3851 = vmatpush.msra.mxu0 0.0
        %3852 = vmatpush.msra.mxu0 0.0
        %3853 = vmatpush.msra.mxu0 0.0
        %3854 = vmatpush.msra.mxu0 0.0
        %3855 = vmatpush.msra.mxu0 %v3647
        %3856 = vmatpush.msra.mxu0 %v3525
        %3857 = vmatpush.msra.mxu0 %v3523
        %3858 = vmatpush.msra.mxu0 %v3521
        %3859 = vmatpush.msra.mxu0 %v3519
        %3860 = vmatmul.f32.gmra.mxu0 %v3611
        %v3861 = vpop.f32.mrf.mxu0
        %v3862 = vadd.f32 %v3797, %v3861
        %3863 = vmatmul.f32.gmra.mxu0 %v3613
        %v3864 = vpop.f32.mrf.mxu0
        %v3865 = vadd.f32 %v3800, %v3864
        %3866 = vmatmul.f32.gmra.mxu0 %v3615
        %v3867 = vpop.f32.mrf.mxu0
        %v3868 = vadd.f32 %v3803, %v3867
        %3869 = vmatmul.f32.gmra.mxu0 %v3617
        %v3870 = vpop.f32.mrf.mxu0
        %v3871 = vadd.f32 %v3806, %v3870
        %3872 = vmatmul.f32.gmra.mxu0 %v3619
        %v3873 = vpop.f32.mrf.mxu0
        %v3874 = vadd.f32 %v3809, %v3873
        %3875 = vmatmul.f32.gmra.mxu0 %v3621
        %v3876 = vpop.f32.mrf.mxu0
        %v3877 = vadd.f32 %v3812, %v3876
        %3878 = vmatmul.f32.gmra.mxu0 %v3623
        %v3879 = vpop.f32.mrf.mxu0
        %v3880 = vadd.f32 %v3815, %v3879
        %3881 = vmatmul.f32.gmra.mxu0 %v3625
        %v3882 = vpop.f32.mrf.mxu0
        %v3883 = vadd.f32 %v3818, %v3882
        %3884 = vmatmul.f32.gmra.mxu0 %v3627
        %v3885 = vpop.f32.mrf.mxu0
        %v3886 = vadd.f32 %v3821, %v3885
        %3887 = vmatmul.f32.gmra.mxu0 %v3629
        %v3888 = vpop.f32.mrf.mxu0
        %v3889 = vadd.f32 %v3824, %v3888
        %3890 = vmatmul.f32.gmra.mxu0 %v3631
        %v3891 = vpop.f32.mrf.mxu0
        %v3892 = vadd.f32 %v3827, %v3891
        %3893 = vmatmul.f32.gmra.mxu0 %v3633
        %v3894 = vpop.f32.mrf.mxu0
        %v3895 = vadd.f32 %v3830, %v3894
        %3896 = vmatmul.f32.gmra.mxu0 %v3635
        %v3897 = vpop.f32.mrf.mxu0
        %v3898 = vadd.f32 %v3833, %v3897
        %3899 = vmatmul.f32.gmra.mxu0 %v3637
        %v3900 = vpop.f32.mrf.mxu0
        %v3901 = vadd.f32 %v3836, %v3900
        %3902 = vmatmul.f32.gmra.mxu0 %v3639
        %v3903 = vpop.f32.mrf.mxu0
        %v3904 = vadd.f32 %v3839, %v3903
        %3905 = vmatmul.f32.gmra.mxu0 %v3641
        %v3906 = vpop.f32.mrf.mxu0
        %v3907 = vadd.f32 %v3842, %v3906
        %3908 = vdwg.mxu0
        %v3909 = vadd.f32 %v3453, %v3732
        %v3910 = vadd.f32 %v3454, %v3862
        %v3911 = vadd.f32 %v3455, %v3735
        %v3912 = vadd.f32 %v3456, %v3865
        %v3913 = vadd.f32 %v3457, %v3738
        %v3914 = vadd.f32 %v3458, %v3868
        %v3915 = vadd.f32 %v3459, %v3741
        %v3916 = vadd.f32 %v3460, %v3871
        %v3917 = vadd.f32 %v3461, %v3744
        %v3918 = vadd.f32 %v3462, %v3874
        %v3919 = vadd.f32 %v3463, %v3747
        %v3920 = vadd.f32 %v3464, %v3877
        %v3921 = vadd.f32 %v3465, %v3750
        %v3922 = vadd.f32 %v3466, %v3880
        %v3923 = vadd.f32 %v3467, %v3753
        %v3924 = vadd.f32 %v3468, %v3883
        %v3925 = vadd.f32 %v3469, %v3756
        %v3926 = vadd.f32 %v3470, %v3886
        %v3927 = vadd.f32 %v3471, %v3759
        %v3928 = vadd.f32 %v3472, %v3889
        %v3929 = vadd.f32 %v3473, %v3762
        %v3930 = vadd.f32 %v3474, %v3892
        %v3931 = vadd.f32 %v3475, %v3765
        %v3932 = vadd.f32 %v3476, %v3895
        %v3933 = vadd.f32 %v3477, %v3768
        %v3934 = vadd.f32 %v3478, %v3898
        %v3935 = vadd.f32 %v3479, %v3771
        %v3936 = vadd.f32 %v3480, %v3901
        %v3937 = vadd.f32 %v3481, %v3774
        %v3938 = vadd.f32 %v3482, %v3904
        %v3939 = vadd.f32 %v3483, %v3777
        %v3940 = vadd.f32 %v3484, %v3907
        %s3941 = scalar_lea.vmem %s4, 1344
        %v3942 = vld [vmem:[%s3941] sm:$0xff]
        %v3943 = vld [vmem:[%s3941 + $0x8] sm:$0xff]
        %v3944 = vld [vmem:[%s3941 + $0x10] sm:$0xff]
        %v3945 = vld [vmem:[%s3941 + $0x18] sm:$0xff]
        %v3946 = vld [vmem:[%s3941 + $0x20] sm:$0xff]
        %v3947 = vld [vmem:[%s3941 + $0x28] sm:$0xff]
        %v3948 = vld [vmem:[%s3941 + $0x30] sm:$0xff]
        %v3949 = vld [vmem:[%s3941 + $0x38] sm:$0xff]
        %v3950 = vld [vmem:[%s3941 + $0x40] sm:$0xff]
        %v3951 = vld [vmem:[%s3941 + $0x48] sm:$0xff]
        %v3952 = vld [vmem:[%s3941 + $0x50] sm:$0xff]
        %v3953 = vld [vmem:[%s3941 + $0x58] sm:$0xff]
        %v3954 = vld [vmem:[%s3941 + $0x60] sm:$0xff]
        %v3955 = vld [vmem:[%s3941 + $0x68] sm:$0xff]
        %v3956 = vld [vmem:[%s3941 + $0x70] sm:$0xff]
        %v3957 = vld [vmem:[%s3941 + $0x78] sm:$0xff]
        %v3958 = vld [vmem:[%s3941 + $0x80] sm:$0xff]
        %v3959 = vld [vmem:[%s3941 + $0x88] sm:$0xff]
        %v3960 = vld [vmem:[%s3941 + $0x90] sm:$0xff]
        %v3961 = vld [vmem:[%s3941 + $0x98] sm:$0xff]
        %v3962 = vld [vmem:[%s3941 + $0xa0] sm:$0xff]
        %v3963 = vld [vmem:[%s3941 + $0xa8] sm:$0xff]
        %v3964 = vld [vmem:[%s3941 + $0xb0] sm:$0xff]
        %v3965 = vld [vmem:[%s3941 + $0xb8] sm:$0xff]
        %v3966 = vld [vmem:[%s3941 + $0xc0] sm:$0xff]
        %v3967 = vld [vmem:[%s3941 + $0xc8] sm:$0xff]
        %v3968 = vld [vmem:[%s3941 + $0xd0] sm:$0xff]
        %v3969 = vld [vmem:[%s3941 + $0xd8] sm:$0xff]
        %v3970 = vld [vmem:[%s3941 + $0xe0] sm:$0xff]
        %v3971 = vld [vmem:[%s3941 + $0xe8] sm:$0xff]
        %v3972 = vld [vmem:[%s3941 + $0xf0] sm:$0xff]
        %v3973 = vld [vmem:[%s3941 + $0xf8] sm:$0xff]
        %v3974 = vld [vmem:[%s3941 + $0x100] sm:$0xff]
        %v3975 = vld [vmem:[%s3941 + $0x108] sm:$0xff]
        %v3976 = vld [vmem:[%s3941 + $0x110] sm:$0xff]
        %v3977 = vld [vmem:[%s3941 + $0x118] sm:$0xff]
        %v3978 = vld [vmem:[%s3941 + $0x120] sm:$0xff]
        %v3979 = vld [vmem:[%s3941 + $0x128] sm:$0xff]
        %v3980 = vld [vmem:[%s3941 + $0x130] sm:$0xff]
        %v3981 = vld [vmem:[%s3941 + $0x138] sm:$0xff]
        %v3982 = vld [vmem:[%s3941 + $0x140] sm:$0x3]
        %v3983 = vld [vmem:[%s3941 + $0x148] sm:$0x3]
        %vm3984 = vcmask 1043456
        %v3985 = vrot.slane %v2044, 4
        %v3986 = vrot.slane %v2047, 4
        %v3987 = vsel %vm3984, %v3985, %v3986
        %v3988 = vrot.slane %v2180, 4
        %v3989 = vrot.slane %v2183, 4
        %v3990 = vsel %vm3984, %v3988, %v3989
        %v3991 = vrot.slane %v2050, 4
        %v3992 = vsel %vm3984, %v3986, %v3991
        %v3993 = vrot.slane %v2186, 4
        %v3994 = vsel %vm3984, %v3989, %v3993
        %v3995 = vrot.slane %v2053, 4
        %v3996 = vsel %vm3984, %v3991, %v3995
        %v3997 = vrot.slane %v2189, 4
        %v3998 = vsel %vm3984, %v3993, %v3997
        %v3999 = vrot.slane %v2056, 4
        %v4000 = vsel %vm3984, %v3995, %v3999
        %v4001 = vrot.slane %v2192, 4
        %v4002 = vsel %vm3984, %v3997, %v4001
        %v4003 = vrot.slane %v2059, 4
        %v4004 = vsel %vm3984, %v3999, %v4003
        %v4005 = vrot.slane %v2195, 4
        %v4006 = vsel %vm3984, %v4001, %v4005
        %v4007 = vrot.slane %v2062, 4
        %v4008 = vsel %vm3984, %v4003, %v4007
        %v4009 = vrot.slane %v2198, 4
        %v4010 = vsel %vm3984, %v4005, %v4009
        %v4011 = vrot.slane %v2065, 4
        %v4012 = vsel %vm3984, %v4007, %v4011
        %v4013 = vrot.slane %v2201, 4
        %v4014 = vsel %vm3984, %v4009, %v4013
        %v4015 = vrot.slane %v2068, 4
        %v4016 = vsel %vm3984, %v4011, %v4015
        %v4017 = vrot.slane %v2204, 4
        %v4018 = vsel %vm3984, %v4013, %v4017
        %v4019 = vrot.slane %v2071, 4
        %v4020 = vsel %vm3984, %v4015, %v4019
        %v4021 = vrot.slane %v2207, 4
        %v4022 = vsel %vm3984, %v4017, %v4021
        %v4023 = vrot.slane %v2074, 4
        %v4024 = vsel %vm3984, %v4019, %v4023
        %v4025 = vrot.slane %v2210, 4
        %v4026 = vsel %vm3984, %v4021, %v4025
        %v4027 = vrot.slane %v2077, 4
        %v4028 = vsel %vm3984, %v4023, %v4027
        %v4029 = vrot.slane %v2213, 4
        %v4030 = vsel %vm3984, %v4025, %v4029
        %v4031 = vrot.slane %v2080, 4
        %v4032 = vsel %vm3984, %v4027, %v4031
        %v4033 = vrot.slane %v2216, 4
        %v4034 = vsel %vm3984, %v4029, %v4033
        %v4035 = vrot.slane %v2083, 4
        %v4036 = vsel %vm3984, %v4031, %v4035
        %v4037 = vrot.slane %v2219, 4
        %v4038 = vsel %vm3984, %v4033, %v4037
        %v4039 = vrot.slane %v2086, 4
        %v4040 = vsel %vm3984, %v4035, %v4039
        %v4041 = vrot.slane %v2222, 4
        %v4042 = vsel %vm3984, %v4037, %v4041
        %v4043 = vrot.slane %v2089, 4
        %v4044 = vsel %vm3984, %v4039, %v4043
        %v4045 = vrot.slane %v2225, 4
        %v4046 = vsel %vm3984, %v4041, %v4045
        %v4047 = vrot.slane %v2092, 4
        %v4048 = vsel %vm3984, %v4043, %v4047
        %v4049 = vrot.slane %v2228, 4
        %v4050 = vsel %vm3984, %v4045, %v4049
        %v4067 = vsel %vm2431, %v3990, 0
        %v4069 = vsel %vm2431, %v3994, 0
        %v4071 = vsel %vm2431, %v3998, 0
        %v4073 = vsel %vm2431, %v4002, 0
        %v4075 = vsel %vm2431, %v4006, 0
        %v4077 = vsel %vm2431, %v4010, 0
        %v4079 = vsel %vm2431, %v4014, 0
        %v4081 = vsel %vm2431, %v4018, 0
        %v4083 = vsel %vm2431, %v4022, 0
        %v4085 = vsel %vm2431, %v4026, 0
        %v4087 = vsel %vm2431, %v4030, 0
        %v4089 = vsel %vm2431, %v4034, 0
        %v4091 = vsel %vm2431, %v4038, 0
        %v4093 = vsel %vm2431, %v4042, 0
        %v4095 = vsel %vm2431, %v4046, 0
        %v4097 = vsel %vm2431, %v4050, 0
        %v4100 = vsel %vm2464, %v3982, 0
        %v4103 = vsel %vm2464, %v3983, 0
        %4105 = vmatpush.msra.mxu0 %v3972
        %4106 = vmatpush.msra.mxu0 %v3970
        %4107 = vmatpush.msra.mxu0 %v3968
        %4108 = vmatpush.msra.mxu0 %v3966
        %4109 = vmatpush.msra.mxu0 %v3964
        %4110 = vmatpush.msra.mxu0 %v3962
        %4111 = vmatpush.msra.mxu0 %v3960
        %4112 = vmatpush.msra.mxu0 %v3958
        %4113 = vmatpush.msra.mxu0 %v3956
        %4114 = vmatpush.msra.mxu0 %v3954
        %4115 = vmatpush.msra.mxu0 %v3952
        %4116 = vmatpush.msra.mxu0 %v3950
        %4117 = vmatpush.msra.mxu0 %v3948
        %4118 = vmatpush.msra.mxu0 %v3946
        %4119 = vmatpush.msra.mxu0 %v3944
        %4120 = vmatpush.msra.mxu0 %v3942
        %4121 = vmatmul.f32.gmra.mxu0 %v3987
        %v4122 = vpop.f32.mrf.mxu0
        %v4123 = vadd.f32 0.0, %v4122
        %4124 = vmatmul.f32.gmra.mxu0 %v3992
        %v4125 = vpop.f32.mrf.mxu0
        %v4126 = vadd.f32 0.0, %v4125
        %4127 = vmatmul.f32.gmra.mxu0 %v3996
        %v4128 = vpop.f32.mrf.mxu0
        %v4129 = vadd.f32 0.0, %v4128
        %4130 = vmatmul.f32.gmra.mxu0 %v4000
        %v4131 = vpop.f32.mrf.mxu0
        %v4132 = vadd.f32 0.0, %v4131
        %4133 = vmatmul.f32.gmra.mxu0 %v4004
        %v4134 = vpop.f32.mrf.mxu0
        %v4135 = vadd.f32 0.0, %v4134
        %4136 = vmatmul.f32.gmra.mxu0 %v4008
        %v4137 = vpop.f32.mrf.mxu0
        %v4138 = vadd.f32 0.0, %v4137
        %4139 = vmatmul.f32.gmra.mxu0 %v4012
        %v4140 = vpop.f32.mrf.mxu0
        %v4141 = vadd.f32 0.0, %v4140
        %4142 = vmatmul.f32.gmra.mxu0 %v4016
        %v4143 = vpop.f32.mrf.mxu0
        %v4144 = vadd.f32 0.0, %v4143
        %4145 = vmatmul.f32.gmra.mxu0 %v4020
        %v4146 = vpop.f32.mrf.mxu0
        %v4147 = vadd.f32 0.0, %v4146
        %4148 = vmatmul.f32.gmra.mxu0 %v4024
        %v4149 = vpop.f32.mrf.mxu0
        %v4150 = vadd.f32 0.0, %v4149
        %4151 = vmatmul.f32.gmra.mxu0 %v4028
        %v4152 = vpop.f32.mrf.mxu0
        %v4153 = vadd.f32 0.0, %v4152
        %4154 = vmatmul.f32.gmra.mxu0 %v4032
        %v4155 = vpop.f32.mrf.mxu0
        %v4156 = vadd.f32 0.0, %v4155
        %4157 = vmatmul.f32.gmra.mxu0 %v4036
        %v4158 = vpop.f32.mrf.mxu0
        %v4159 = vadd.f32 0.0, %v4158
        %4160 = vmatmul.f32.gmra.mxu0 %v4040
        %v4161 = vpop.f32.mrf.mxu0
        %v4162 = vadd.f32 0.0, %v4161
        %4163 = vmatmul.f32.gmra.mxu0 %v4044
        %v4164 = vpop.f32.mrf.mxu0
        %v4165 = vadd.f32 0.0, %v4164
        %4166 = vmatmul.f32.gmra.mxu0 %v4048
        %v4167 = vpop.f32.mrf.mxu0
        %v4168 = vadd.f32 0.0, %v4167
        %4169 = vdwg.mxu0
        %4170 = vmatpush.msra.mxu0 0.0
        %4171 = vmatpush.msra.mxu0 0.0
        %4172 = vmatpush.msra.mxu0 0.0
        %4173 = vmatpush.msra.mxu0 0.0
        %4174 = vmatpush.msra.mxu0 0.0
        %4175 = vmatpush.msra.mxu0 0.0
        %4176 = vmatpush.msra.mxu0 0.0
        %4177 = vmatpush.msra.mxu0 0.0
        %4178 = vmatpush.msra.mxu0 0.0
        %4179 = vmatpush.msra.mxu0 0.0
        %4180 = vmatpush.msra.mxu0 0.0
        %4181 = vmatpush.msra.mxu0 %v4100
        %4182 = vmatpush.msra.mxu0 %v3980
        %4183 = vmatpush.msra.mxu0 %v3978
        %4184 = vmatpush.msra.mxu0 %v3976
        %4185 = vmatpush.msra.mxu0 %v3974
        %4186 = vmatmul.f32.gmra.mxu0 %v4067
        %v4187 = vpop.f32.mrf.mxu0
        %v4188 = vadd.f32 %v4123, %v4187
        %4189 = vmatmul.f32.gmra.mxu0 %v4069
        %v4190 = vpop.f32.mrf.mxu0
        %v4191 = vadd.f32 %v4126, %v4190
        %4192 = vmatmul.f32.gmra.mxu0 %v4071
        %v4193 = vpop.f32.mrf.mxu0
        %v4194 = vadd.f32 %v4129, %v4193
        %4195 = vmatmul.f32.gmra.mxu0 %v4073
        %v4196 = vpop.f32.mrf.mxu0
        %v4197 = vadd.f32 %v4132, %v4196
        %4198 = vmatmul.f32.gmra.mxu0 %v4075
        %v4199 = vpop.f32.mrf.mxu0
        %v4200 = vadd.f32 %v4135, %v4199
        %4201 = vmatmul.f32.gmra.mxu0 %v4077
        %v4202 = vpop.f32.mrf.mxu0
        %v4203 = vadd.f32 %v4138, %v4202
        %4204 = vmatmul.f32.gmra.mxu0 %v4079
        %v4205 = vpop.f32.mrf.mxu0
        %v4206 = vadd.f32 %v4141, %v4205
        %4207 = vmatmul.f32.gmra.mxu0 %v4081
        %v4208 = vpop.f32.mrf.mxu0
        %v4209 = vadd.f32 %v4144, %v4208
        %4210 = vmatmul.f32.gmra.mxu0 %v4083
        %v4211 = vpop.f32.mrf.mxu0
        %v4212 = vadd.f32 %v4147, %v4211
        %4213 = vmatmul.f32.gmra.mxu0 %v4085
        %v4214 = vpop.f32.mrf.mxu0
        %v4215 = vadd.f32 %v4150, %v4214
        %4216 = vmatmul.f32.gmra.mxu0 %v4087
        %v4217 = vpop.f32.mrf.mxu0
        %v4218 = vadd.f32 %v4153, %v4217
        %4219 = vmatmul.f32.gmra.mxu0 %v4089
        %v4220 = vpop.f32.mrf.mxu0
        %v4221 = vadd.f32 %v4156, %v4220
        %4222 = vmatmul.f32.gmra.mxu0 %v4091
        %v4223 = vpop.f32.mrf.mxu0
        %v4224 = vadd.f32 %v4159, %v4223
        %4225 = vmatmul.f32.gmra.mxu0 %v4093
        %v4226 = vpop.f32.mrf.mxu0
        %v4227 = vadd.f32 %v4162, %v4226
        %4228 = vmatmul.f32.gmra.mxu0 %v4095
        %v4229 = vpop.f32.mrf.mxu0
        %v4230 = vadd.f32 %v4165, %v4229
        %4231 = vmatmul.f32.gmra.mxu0 %v4097
        %v4232 = vpop.f32.mrf.mxu0
        %v4233 = vadd.f32 %v4168, %v4232
        %4234 = vdwg.mxu0
        %4235 = vmatpush.msra.mxu0 %v3973
        %4236 = vmatpush.msra.mxu0 %v3971
        %4237 = vmatpush.msra.mxu0 %v3969
        %4238 = vmatpush.msra.mxu0 %v3967
        %4239 = vmatpush.msra.mxu0 %v3965
        %4240 = vmatpush.msra.mxu0 %v3963
        %4241 = vmatpush.msra.mxu0 %v3961
        %4242 = vmatpush.msra.mxu0 %v3959
        %4243 = vmatpush.msra.mxu0 %v3957
        %4244 = vmatpush.msra.mxu0 %v3955
        %4245 = vmatpush.msra.mxu0 %v3953
        %4246 = vmatpush.msra.mxu0 %v3951
        %4247 = vmatpush.msra.mxu0 %v3949
        %4248 = vmatpush.msra.mxu0 %v3947
        %4249 = vmatpush.msra.mxu0 %v3945
        %4250 = vmatpush.msra.mxu0 %v3943
        %4251 = vmatmul.f32.gmra.mxu0 %v3987
        %v4252 = vpop.f32.mrf.mxu0
        %v4253 = vadd.f32 0.0, %v4252
        %4254 = vmatmul.f32.gmra.mxu0 %v3992
        %v4255 = vpop.f32.mrf.mxu0
        %v4256 = vadd.f32 0.0, %v4255
        %4257 = vmatmul.f32.gmra.mxu0 %v3996
        %v4258 = vpop.f32.mrf.mxu0
        %v4259 = vadd.f32 0.0, %v4258
        %4260 = vmatmul.f32.gmra.mxu0 %v4000
        %v4261 = vpop.f32.mrf.mxu0
        %v4262 = vadd.f32 0.0, %v4261
        %4263 = vmatmul.f32.gmra.mxu0 %v4004
        %v4264 = vpop.f32.mrf.mxu0
        %v4265 = vadd.f32 0.0, %v4264
        %4266 = vmatmul.f32.gmra.mxu0 %v4008
        %v4267 = vpop.f32.mrf.mxu0
        %v4268 = vadd.f32 0.0, %v4267
        %4269 = vmatmul.f32.gmra.mxu0 %v4012
        %v4270 = vpop.f32.mrf.mxu0
        %v4271 = vadd.f32 0.0, %v4270
        %4272 = vmatmul.f32.gmra.mxu0 %v4016
        %v4273 = vpop.f32.mrf.mxu0
        %v4274 = vadd.f32 0.0, %v4273
        %4275 = vmatmul.f32.gmra.mxu0 %v4020
        %v4276 = vpop.f32.mrf.mxu0
        %v4277 = vadd.f32 0.0, %v4276
        %4278 = vmatmul.f32.gmra.mxu0 %v4024
        %v4279 = vpop.f32.mrf.mxu0
        %v4280 = vadd.f32 0.0, %v4279
        %4281 = vmatmul.f32.gmra.mxu0 %v4028
        %v4282 = vpop.f32.mrf.mxu0
        %v4283 = vadd.f32 0.0, %v4282
        %4284 = vmatmul.f32.gmra.mxu0 %v4032
        %v4285 = vpop.f32.mrf.mxu0
        %v4286 = vadd.f32 0.0, %v4285
        %4287 = vmatmul.f32.gmra.mxu0 %v4036
        %v4288 = vpop.f32.mrf.mxu0
        %v4289 = vadd.f32 0.0, %v4288
        %4290 = vmatmul.f32.gmra.mxu0 %v4040
        %v4291 = vpop.f32.mrf.mxu0
        %v4292 = vadd.f32 0.0, %v4291
        %4293 = vmatmul.f32.gmra.mxu0 %v4044
        %v4294 = vpop.f32.mrf.mxu0
        %v4295 = vadd.f32 0.0, %v4294
        %4296 = vmatmul.f32.gmra.mxu0 %v4048
        %v4297 = vpop.f32.mrf.mxu0
        %v4298 = vadd.f32 0.0, %v4297
        %4299 = vdwg.mxu0
        %4300 = vmatpush.msra.mxu0 0.0
        %4301 = vmatpush.msra.mxu0 0.0
        %4302 = vmatpush.msra.mxu0 0.0
        %4303 = vmatpush.msra.mxu0 0.0
        %4304 = vmatpush.msra.mxu0 0.0
        %4305 = vmatpush.msra.mxu0 0.0
        %4306 = vmatpush.msra.mxu0 0.0
        %4307 = vmatpush.msra.mxu0 0.0
        %4308 = vmatpush.msra.mxu0 0.0
        %4309 = vmatpush.msra.mxu0 0.0
        %4310 = vmatpush.msra.mxu0 0.0
        %4311 = vmatpush.msra.mxu0 %v4103
        %4312 = vmatpush.msra.mxu0 %v3981
        %4313 = vmatpush.msra.mxu0 %v3979
        %4314 = vmatpush.msra.mxu0 %v3977
        %4315 = vmatpush.msra.mxu0 %v3975
        %4316 = vmatmul.f32.gmra.mxu0 %v4067
        %v4317 = vpop.f32.mrf.mxu0
        %v4318 = vadd.f32 %v4253, %v4317
        %4319 = vmatmul.f32.gmra.mxu0 %v4069
        %v4320 = vpop.f32.mrf.mxu0
        %v4321 = vadd.f32 %v4256, %v4320
        %4322 = vmatmul.f32.gmra.mxu0 %v4071
        %v4323 = vpop.f32.mrf.mxu0
        %v4324 = vadd.f32 %v4259, %v4323
        %4325 = vmatmul.f32.gmra.mxu0 %v4073
        %v4326 = vpop.f32.mrf.mxu0
        %v4327 = vadd.f32 %v4262, %v4326
        %4328 = vmatmul.f32.gmra.mxu0 %v4075
        %v4329 = vpop.f32.mrf.mxu0
        %v4330 = vadd.f32 %v4265, %v4329
        %4331 = vmatmul.f32.gmra.mxu0 %v4077
        %v4332 = vpop.f32.mrf.mxu0
        %v4333 = vadd.f32 %v4268, %v4332
        %4334 = vmatmul.f32.gmra.mxu0 %v4079
        %v4335 = vpop.f32.mrf.mxu0
        %v4336 = vadd.f32 %v4271, %v4335
        %4337 = vmatmul.f32.gmra.mxu0 %v4081
        %v4338 = vpop.f32.mrf.mxu0
        %v4339 = vadd.f32 %v4274, %v4338
        %4340 = vmatmul.f32.gmra.mxu0 %v4083
        %v4341 = vpop.f32.mrf.mxu0
        %v4342 = vadd.f32 %v4277, %v4341
        %4343 = vmatmul.f32.gmra.mxu0 %v4085
        %v4344 = vpop.f32.mrf.mxu0
        %v4345 = vadd.f32 %v4280, %v4344
        %4346 = vmatmul.f32.gmra.mxu0 %v4087
        %v4347 = vpop.f32.mrf.mxu0
        %v4348 = vadd.f32 %v4283, %v4347
        %4349 = vmatmul.f32.gmra.mxu0 %v4089
        %v4350 = vpop.f32.mrf.mxu0
        %v4351 = vadd.f32 %v4286, %v4350
        %4352 = vmatmul.f32.gmra.mxu0 %v4091
        %v4353 = vpop.f32.mrf.mxu0
        %v4354 = vadd.f32 %v4289, %v4353
        %4355 = vmatmul.f32.gmra.mxu0 %v4093
        %v4356 = vpop.f32.mrf.mxu0
        %v4357 = vadd.f32 %v4292, %v4356
        %4358 = vmatmul.f32.gmra.mxu0 %v4095
        %v4359 = vpop.f32.mrf.mxu0
        %v4360 = vadd.f32 %v4295, %v4359
        %4361 = vmatmul.f32.gmra.mxu0 %v4097
        %v4362 = vpop.f32.mrf.mxu0
        %v4363 = vadd.f32 %v4298, %v4362
        %4364 = vdwg.mxu0
        %v4365 = vadd.f32 %v3909, %v4188
        %v4366 = vadd.f32 %v3910, %v4318
        %v4367 = vadd.f32 %v3911, %v4191
        %v4368 = vadd.f32 %v3912, %v4321
        %v4369 = vadd.f32 %v3913, %v4194
        %v4370 = vadd.f32 %v3914, %v4324
        %v4371 = vadd.f32 %v3915, %v4197
        %v4372 = vadd.f32 %v3916, %v4327
        %v4373 = vadd.f32 %v3917, %v4200
        %v4374 = vadd.f32 %v3918, %v4330
        %v4375 = vadd.f32 %v3919, %v4203
        %v4376 = vadd.f32 %v3920, %v4333
        %v4377 = vadd.f32 %v3921, %v4206
        %v4378 = vadd.f32 %v3922, %v4336
        %v4379 = vadd.f32 %v3923, %v4209
        %v4380 = vadd.f32 %v3924, %v4339
        %v4381 = vadd.f32 %v3925, %v4212
        %v4382 = vadd.f32 %v3926, %v4342
        %v4383 = vadd.f32 %v3927, %v4215
        %v4384 = vadd.f32 %v3928, %v4345
        %v4385 = vadd.f32 %v3929, %v4218
        %v4386 = vadd.f32 %v3930, %v4348
        %v4387 = vadd.f32 %v3931, %v4221
        %v4388 = vadd.f32 %v3932, %v4351
        %v4389 = vadd.f32 %v3933, %v4224
        %v4390 = vadd.f32 %v3934, %v4354
        %v4391 = vadd.f32 %v3935, %v4227
        %v4392 = vadd.f32 %v3936, %v4357
        %v4393 = vadd.f32 %v3937, %v4230
        %v4394 = vadd.f32 %v3938, %v4360
        %v4395 = vadd.f32 %v3939, %v4233
        %v4396 = vadd.f32 %v3940, %v4363
        %v4397 = vld [vmem:[%s5] sm:$0x3]
        %v4399 = vperm.slane %v4397, 0
        %v4400 = vperm.slane %v4397, 1
        %v4403 = vadd.f32 %v4365, %v4399
        %v4404 = vadd.f32 %v4366, %v4400
        %v4405 = vadd.f32 %v4367, %v4399
        %v4406 = vadd.f32 %v4368, %v4400
        %v4407 = vadd.f32 %v4369, %v4399
        %v4408 = vadd.f32 %v4370, %v4400
        %v4409 = vadd.f32 %v4371, %v4399
        %v4410 = vadd.f32 %v4372, %v4400
        %v4411 = vadd.f32 %v4373, %v4399
        %v4412 = vadd.f32 %v4374, %v4400
        %v4413 = vadd.f32 %v4375, %v4399
        %v4414 = vadd.f32 %v4376, %v4400
        %v4415 = vadd.f32 %v4377, %v4399
        %v4416 = vadd.f32 %v4378, %v4400
        %v4417 = vadd.f32 %v4379, %v4399
        %v4418 = vadd.f32 %v4380, %v4400
        %v4419 = vadd.f32 %v4381, %v4399
        %v4420 = vadd.f32 %v4382, %v4400
        %v4421 = vadd.f32 %v4383, %v4399
        %v4422 = vadd.f32 %v4384, %v4400
        %v4423 = vadd.f32 %v4385, %v4399
        %v4424 = vadd.f32 %v4386, %v4400
        %v4425 = vadd.f32 %v4387, %v4399
        %v4426 = vadd.f32 %v4388, %v4400
        %v4427 = vadd.f32 %v4389, %v4399
        %v4428 = vadd.f32 %v4390, %v4400
        %v4429 = vadd.f32 %v4391, %v4399
        %v4430 = vadd.f32 %v4392, %v4400
        %v4431 = vadd.f32 %v4393, %v4399
        %v4432 = vadd.f32 %v4394, %v4400
        %v4433 = vadd.f32 %v4395, %v4399
        %v4434 = vadd.f32 %v4396, %v4400
        %v4435 = vmax.f32 %v4403, 0.0
        %v4436 = vmax.f32 %v4404, 0.0
        %v4437 = vmax.f32 %v4405, 0.0
        %v4438 = vmax.f32 %v4406, 0.0
        %v4439 = vmax.f32 %v4407, 0.0
        %v4440 = vmax.f32 %v4408, 0.0
        %v4441 = vmax.f32 %v4409, 0.0
        %v4442 = vmax.f32 %v4410, 0.0
        %v4443 = vmax.f32 %v4411, 0.0
        %v4444 = vmax.f32 %v4412, 0.0
        %v4445 = vmax.f32 %v4413, 0.0
        %v4446 = vmax.f32 %v4414, 0.0
        %v4447 = vmax.f32 %v4415, 0.0
        %v4448 = vmax.f32 %v4416, 0.0
        %v4449 = vmax.f32 %v4417, 0.0
        %v4450 = vmax.f32 %v4418, 0.0
        %v4451 = vmax.f32 %v4419, 0.0
        %v4452 = vmax.f32 %v4420, 0.0
        %v4453 = vmax.f32 %v4421, 0.0
        %v4454 = vmax.f32 %v4422, 0.0
        %v4455 = vmax.f32 %v4423, 0.0
        %v4456 = vmax.f32 %v4424, 0.0
        %v4457 = vmax.f32 %v4425, 0.0
        %v4458 = vmax.f32 %v4426, 0.0
        %v4459 = vmax.f32 %v4427, 0.0
        %v4460 = vmax.f32 %v4428, 0.0
        %v4461 = vmax.f32 %v4429, 0.0
        %v4462 = vmax.f32 %v4430, 0.0
        %v4463 = vmax.f32 %v4431, 0.0
        %v4464 = vmax.f32 %v4432, 0.0
        %v4465 = vmax.f32 %v4433, 0.0
        %v4466 = vmax.f32 %v4434, 0.0
        %v4467 = vld [vmem:[%s6] sm:$0xff]
        %v4468 = vld [vmem:[%s6 + $0x8] sm:$0xff]
        %v4469 = vld [vmem:[%s6 + $0x10] sm:$0xff]
        %v4470 = vld [vmem:[%s6 + $0x18] sm:$0xff]
        %v4471 = vld [vmem:[%s6 + $0x20] sm:$0xff]
        %v4472 = vld [vmem:[%s6 + $0x28] sm:$0xff]
        %v4473 = vld [vmem:[%s6 + $0x30] sm:$0xff]
        %v4474 = vld [vmem:[%s6 + $0x38] sm:$0xff]
        %v4475 = vld [vmem:[%s6 + $0x40] sm:$0xff]
        %4508 = vrot.lane.b32.xlu0 %v4435, 112
        %v4509 = vpop.permute.xlu0 %4508
        %4510 = vrot.lane.b32.xlu0 %v4436, 112
        %v4511 = vpop.permute.xlu0 %4510
        %4512 = vrot.lane.b32.xlu0 %v4437, 112
        %v4513 = vpop.permute.xlu0 %4512
        %4514 = vrot.lane.b32.xlu0 %v4438, 112
        %v4515 = vpop.permute.xlu0 %4514
        %4516 = vrot.lane.b32.xlu0 %v4439, 112
        %v4517 = vpop.permute.xlu0 %4516
        %4518 = vrot.lane.b32.xlu0 %v4440, 112
        %v4519 = vpop.permute.xlu0 %4518
        %4520 = vrot.lane.b32.xlu0 %v4441, 112
        %v4521 = vpop.permute.xlu0 %4520
        %4522 = vrot.lane.b32.xlu0 %v4442, 112
        %v4523 = vpop.permute.xlu0 %4522
        %4524 = vrot.lane.b32.xlu0 %v4443, 112
        %v4525 = vpop.permute.xlu0 %4524
        %4526 = vrot.lane.b32.xlu0 %v4444, 112
        %v4527 = vpop.permute.xlu0 %4526
        %4528 = vrot.lane.b32.xlu0 %v4445, 112
        %v4529 = vpop.permute.xlu0 %4528
        %4530 = vrot.lane.b32.xlu0 %v4446, 112
        %v4531 = vpop.permute.xlu0 %4530
        %4532 = vrot.lane.b32.xlu0 %v4447, 112
        %v4533 = vpop.permute.xlu0 %4532
        %4534 = vrot.lane.b32.xlu0 %v4448, 112
        %v4535 = vpop.permute.xlu0 %4534
        %4536 = vrot.lane.b32.xlu0 %v4449, 112
        %v4537 = vpop.permute.xlu0 %4536
        %4538 = vrot.lane.b32.xlu0 %v4450, 112
        %v4539 = vpop.permute.xlu0 %4538
        %4540 = vrot.lane.b32.xlu0 %v4451, 112
        %v4541 = vpop.permute.xlu0 %4540
        %4542 = vrot.lane.b32.xlu0 %v4452, 112
        %v4543 = vpop.permute.xlu0 %4542
        %4544 = vrot.lane.b32.xlu0 %v4453, 112
        %v4545 = vpop.permute.xlu0 %4544
        %4546 = vrot.lane.b32.xlu0 %v4454, 112
        %v4547 = vpop.permute.xlu0 %4546
        %4548 = vrot.lane.b32.xlu0 %v4455, 112
        %v4549 = vpop.permute.xlu0 %4548
        %4550 = vrot.lane.b32.xlu0 %v4456, 112
        %v4551 = vpop.permute.xlu0 %4550
        %4552 = vrot.lane.b32.xlu0 %v4457, 112
        %v4553 = vpop.permute.xlu0 %4552
        %4554 = vrot.lane.b32.xlu0 %v4458, 112
        %v4555 = vpop.permute.xlu0 %4554
        %4556 = vrot.lane.b32.xlu0 %v4459, 112
        %v4557 = vpop.permute.xlu0 %4556
        %4558 = vrot.lane.b32.xlu0 %v4460, 112
        %v4559 = vpop.permute.xlu0 %4558
        %4560 = vrot.lane.b32.xlu0 %v4461, 112
        %v4561 = vpop.permute.xlu0 %4560
        %4562 = vrot.lane.b32.xlu0 %v4462, 112
        %v4563 = vpop.permute.xlu0 %4562
        %4564 = vrot.lane.b32.xlu0 %v4463, 112
        %v4565 = vpop.permute.xlu0 %4564
        %4566 = vrot.lane.b32.xlu0 %v4464, 112
        %v4567 = vpop.permute.xlu0 %4566
        %4568 = vrot.lane.b32.xlu0 %v4465, 112
        %v4569 = vpop.permute.xlu0 %4568
        %4570 = vrot.lane.b32.xlu0 %v4466, 112
        %v4571 = vpop.permute.xlu0 %4570
        %vm4572 = vcmask 916480
        %v4573 = vsel %vm4572, %v4509, %v4511
        %v4574 = vsel %vm4572, %v4513, %v4515
        %v4575 = vsel %vm4572, %v4517, %v4519
        %v4576 = vsel %vm4572, %v4521, %v4523
        %v4577 = vsel %vm4572, %v4525, %v4527
        %v4578 = vsel %vm4572, %v4529, %v4531
        %v4579 = vsel %vm4572, %v4533, %v4535
        %v4580 = vsel %vm4572, %v4537, %v4539
        %v4581 = vsel %vm4572, %v4541, %v4543
        %v4582 = vsel %vm4572, %v4545, %v4547
        %v4583 = vsel %vm4572, %v4549, %v4551
        %v4584 = vsel %vm4572, %v4553, %v4555
        %v4585 = vsel %vm4572, %v4557, %v4559
        %v4586 = vsel %vm4572, %v4561, %v4563
        %v4587 = vsel %vm4572, %v4565, %v4567
        %v4588 = vsel %vm4572, %v4569, %v4571
        %v4621 = vmax.f32 %v4435, %v4573
        %v4622 = vmax.f32 %v4436, %v4511
        %v4623 = vmax.f32 %v4437, %v4574
        %v4624 = vmax.f32 %v4438, %v4515
        %v4625 = vmax.f32 %v4439, %v4575
        %v4626 = vmax.f32 %v4440, %v4519
        %v4627 = vmax.f32 %v4441, %v4576
        %v4628 = vmax.f32 %v4442, %v4523
        %v4629 = vmax.f32 %v4443, %v4577
        %v4630 = vmax.f32 %v4444, %v4527
        %v4631 = vmax.f32 %v4445, %v4578
        %v4632 = vmax.f32 %v4446, %v4531
        %v4633 = vmax.f32 %v4447, %v4579
        %v4634 = vmax.f32 %v4448, %v4535
        %v4635 = vmax.f32 %v4449, %v4580
        %v4636 = vmax.f32 %v4450, %v4539
        %v4637 = vmax.f32 %v4451, %v4581
        %v4638 = vmax.f32 %v4452, %v4543
        %v4639 = vmax.f32 %v4453, %v4582
        %v4640 = vmax.f32 %v4454, %v4547
        %v4641 = vmax.f32 %v4455, %v4583
        %v4642 = vmax.f32 %v4456, %v4551
        %v4643 = vmax.f32 %v4457, %v4584
        %v4644 = vmax.f32 %v4458, %v4555
        %v4645 = vmax.f32 %v4459, %v4585
        %v4646 = vmax.f32 %v4460, %v4559
        %v4647 = vmax.f32 %v4461, %v4586
        %v4648 = vmax.f32 %v4462, %v4563
        %v4649 = vmax.f32 %v4463, %v4587
        %v4650 = vmax.f32 %v4464, %v4567
        %v4651 = vmax.f32 %v4465, %v4588
        %v4652 = vmax.f32 %v4466, %v4571
        %v4685 = vrot.slane %v4621, 1
        %v4686 = vrot.slane %v4623, 1
        %v4687 = vsel %vm1645, %v4685, %v4686
        %v4688 = vrot.slane %v4622, 1
        %v4689 = vrot.slane %v4624, 1
        %v4690 = vsel %vm1645, %v4688, %v4689
        %v4691 = vrot.slane %v4625, 1
        %v4692 = vsel %vm1645, %v4686, %v4691
        %v4693 = vrot.slane %v4626, 1
        %v4694 = vsel %vm1645, %v4689, %v4693
        %v4695 = vrot.slane %v4627, 1
        %v4696 = vsel %vm1645, %v4691, %v4695
        %v4697 = vrot.slane %v4628, 1
        %v4698 = vsel %vm1645, %v4693, %v4697
        %v4699 = vrot.slane %v4629, 1
        %v4700 = vsel %vm1645, %v4695, %v4699
        %v4701 = vrot.slane %v4630, 1
        %v4702 = vsel %vm1645, %v4697, %v4701
        %v4703 = vrot.slane %v4631, 1
        %v4704 = vsel %vm1645, %v4699, %v4703
        %v4705 = vrot.slane %v4632, 1
        %v4706 = vsel %vm1645, %v4701, %v4705
        %v4707 = vrot.slane %v4633, 1
        %v4708 = vsel %vm1645, %v4703, %v4707
        %v4709 = vrot.slane %v4634, 1
        %v4710 = vsel %vm1645, %v4705, %v4709
        %v4711 = vrot.slane %v4635, 1
        %v4712 = vsel %vm1645, %v4707, %v4711
        %v4713 = vrot.slane %v4636, 1
        %v4714 = vsel %vm1645, %v4709, %v4713
        %v4715 = vrot.slane %v4637, 1
        %v4716 = vsel %vm1645, %v4711, %v4715
        %v4717 = vrot.slane %v4638, 1
        %v4718 = vsel %vm1645, %v4713, %v4717
        %v4719 = vrot.slane %v4639, 1
        %v4720 = vsel %vm1645, %v4715, %v4719
        %v4721 = vrot.slane %v4640, 1
        %v4722 = vsel %vm1645, %v4717, %v4721
        %v4723 = vrot.slane %v4641, 1
        %v4724 = vsel %vm1645, %v4719, %v4723
        %v4725 = vrot.slane %v4642, 1
        %v4726 = vsel %vm1645, %v4721, %v4725
        %v4727 = vrot.slane %v4643, 1
        %v4728 = vsel %vm1645, %v4723, %v4727
        %v4729 = vrot.slane %v4644, 1
        %v4730 = vsel %vm1645, %v4725, %v4729
        %v4731 = vrot.slane %v4645, 1
        %v4732 = vsel %vm1645, %v4727, %v4731
        %v4733 = vrot.slane %v4646, 1
        %v4734 = vsel %vm1645, %v4729, %v4733
        %v4735 = vrot.slane %v4647, 1
        %v4736 = vsel %vm1645, %v4731, %v4735
        %v4737 = vrot.slane %v4648, 1
        %v4738 = vsel %vm1645, %v4733, %v4737
        %v4739 = vrot.slane %v4649, 1
        %v4740 = vsel %vm1645, %v4735, %v4739
        %v4741 = vrot.slane %v4650, 1
        %v4742 = vsel %vm1645, %v4737, %v4741
        %v4743 = vrot.slane %v4651, 1
        %v4744 = vsel %vm1645, %v4739, %v4743
        %v4745 = vrot.slane %v4652, 1
        %v4746 = vsel %vm1645, %v4741, %v4745
        %v4779 = vmax.f32 %v4621, %v4687
        %v4780 = vmax.f32 %v4622, %v4690
        %v4781 = vmax.f32 %v4623, %v4692
        %v4782 = vmax.f32 %v4624, %v4694
        %v4783 = vmax.f32 %v4625, %v4696
        %v4784 = vmax.f32 %v4626, %v4698
        %v4785 = vmax.f32 %v4627, %v4700
        %v4786 = vmax.f32 %v4628, %v4702
        %v4787 = vmax.f32 %v4629, %v4704
        %v4788 = vmax.f32 %v4630, %v4706
        %v4789 = vmax.f32 %v4631, %v4708
        %v4790 = vmax.f32 %v4632, %v4710
        %v4791 = vmax.f32 %v4633, %v4712
        %v4792 = vmax.f32 %v4634, %v4714
        %v4793 = vmax.f32 %v4635, %v4716
        %v4794 = vmax.f32 %v4636, %v4718
        %v4795 = vmax.f32 %v4637, %v4720
        %v4796 = vmax.f32 %v4638, %v4722
        %v4797 = vmax.f32 %v4639, %v4724
        %v4798 = vmax.f32 %v4640, %v4726
        %v4799 = vmax.f32 %v4641, %v4728
        %v4800 = vmax.f32 %v4642, %v4730
        %v4801 = vmax.f32 %v4643, %v4732
        %v4802 = vmax.f32 %v4644, %v4734
        %v4803 = vmax.f32 %v4645, %v4736
        %v4804 = vmax.f32 %v4646, %v4738
        %v4805 = vmax.f32 %v4647, %v4740
        %v4806 = vmax.f32 %v4648, %v4742
        %v4807 = vmax.f32 %v4649, %v4744
        %v4808 = vmax.f32 %v4650, %v4746
        %v4809 = vmax.f32 %v4651, %v4743
        %v4810 = vmax.f32 %v4652, %v4745
        %v4812 = vsel %vm1900, %v4467, 0
        %v4815 = vsel %vm1900, %v4468, 0
        %v4818 = vsel %vm1900, %v4469, 0
        %v4821 = vsel %vm1900, %v4470, 0
        %v4824 = vsel %vm1900, %v4471, 0
        %v4827 = vsel %vm1900, %v4472, 0
        %v4830 = vsel %vm1900, %v4473, 0
        %v4833 = vsel %vm1900, %v4474, 0
        %v4836 = vsel %vm1900, %v4475, 0
        %v4839 = vsel %vm1645, %v4809, 0
        %v4842 = vsel %vm1645, %v4810, 0
        %4844 = vmatpush.msra.mxu0 %v4839
        %4845 = vmatpush.msra.mxu0 %v4807
        %4846 = vmatpush.msra.mxu0 %v4805
        %4847 = vmatpush.msra.mxu0 %v4803
        %4848 = vmatpush.msra.mxu0 %v4801
        %4849 = vmatpush.msra.mxu0 %v4799
        %4850 = vmatpush.msra.mxu0 %v4797
        %4851 = vmatpush.msra.mxu0 %v4795
        %4852 = vmatpush.msra.mxu0 %v4793
        %4853 = vmatpush.msra.mxu0 %v4791
        %4854 = vmatpush.msra.mxu0 %v4789
        %4855 = vmatpush.msra.mxu0 %v4787
        %4856 = vmatpush.msra.mxu0 %v4785
        %4857 = vmatpush.msra.mxu0 %v4783
        %4858 = vmatpush.msra.mxu0 %v4781
        %4859 = vmatpush.msra.mxu0 %v4779
        %4860 = vmatmul.f32.gmra.mxu0 %v4812
        %v4861 = vpop.f32.mrf.mxu0
        %v4862 = vadd.f32 0.0, %v4861
        %4863 = vmatmul.f32.gmra.mxu0 %v4815
        %v4864 = vpop.f32.mrf.mxu0
        %v4865 = vadd.f32 0.0, %v4864
        %4866 = vmatmul.f32.gmra.mxu0 %v4818
        %v4867 = vpop.f32.mrf.mxu0
        %v4868 = vadd.f32 0.0, %v4867
        %4869 = vmatmul.f32.gmra.mxu0 %v4821
        %v4870 = vpop.f32.mrf.mxu0
        %v4871 = vadd.f32 0.0, %v4870
        %4872 = vmatmul.f32.gmra.mxu0 %v4824
        %v4873 = vpop.f32.mrf.mxu0
        %v4874 = vadd.f32 0.0, %v4873
        %4875 = vmatmul.f32.gmra.mxu0 %v4827
        %v4876 = vpop.f32.mrf.mxu0
        %v4877 = vadd.f32 0.0, %v4876
        %4878 = vmatmul.f32.gmra.mxu0 %v4830
        %v4879 = vpop.f32.mrf.mxu0
        %v4880 = vadd.f32 0.0, %v4879
        %4881 = vmatmul.f32.gmra.mxu0 %v4833
        %v4882 = vpop.f32.mrf.mxu0
        %v4883 = vadd.f32 0.0, %v4882
        %4884 = vmatmul.f32.gmra.mxu0 %v4836
        %v4885 = vpop.f32.mrf.mxu0
        %v4886 = vadd.f32 0.0, %v4885
        %4887 = vdwg.mxu0
        %4888 = vmatpush.msra.mxu0 %v4842
        %4889 = vmatpush.msra.mxu0 %v4808
        %4890 = vmatpush.msra.mxu0 %v4806
        %4891 = vmatpush.msra.mxu0 %v4804
        %4892 = vmatpush.msra.mxu0 %v4802
        %4893 = vmatpush.msra.mxu0 %v4800
        %4894 = vmatpush.msra.mxu0 %v4798
        %4895 = vmatpush.msra.mxu0 %v4796
        %4896 = vmatpush.msra.mxu0 %v4794
        %4897 = vmatpush.msra.mxu0 %v4792
        %4898 = vmatpush.msra.mxu0 %v4790
        %4899 = vmatpush.msra.mxu0 %v4788
        %4900 = vmatpush.msra.mxu0 %v4786
        %4901 = vmatpush.msra.mxu0 %v4784
        %4902 = vmatpush.msra.mxu0 %v4782
        %4903 = vmatpush.msra.mxu0 %v4780
        %4904 = vmatmul.f32.gmra.mxu0 %v4812
        %v4905 = vpop.f32.mrf.mxu0
        %v4906 = vadd.f32 0.0, %v4905
        %4907 = vmatmul.f32.gmra.mxu0 %v4815
        %v4908 = vpop.f32.mrf.mxu0
        %v4909 = vadd.f32 0.0, %v4908
        %4910 = vmatmul.f32.gmra.mxu0 %v4818
        %v4911 = vpop.f32.mrf.mxu0
        %v4912 = vadd.f32 0.0, %v4911
        %4913 = vmatmul.f32.gmra.mxu0 %v4821
        %v4914 = vpop.f32.mrf.mxu0
        %v4915 = vadd.f32 0.0, %v4914
        %4916 = vmatmul.f32.gmra.mxu0 %v4824
        %v4917 = vpop.f32.mrf.mxu0
        %v4918 = vadd.f32 0.0, %v4917
        %4919 = vmatmul.f32.gmra.mxu0 %v4827
        %v4920 = vpop.f32.mrf.mxu0
        %v4921 = vadd.f32 0.0, %v4920
        %4922 = vmatmul.f32.gmra.mxu0 %v4830
        %v4923 = vpop.f32.mrf.mxu0
        %v4924 = vadd.f32 0.0, %v4923
        %4925 = vmatmul.f32.gmra.mxu0 %v4833
        %v4926 = vpop.f32.mrf.mxu0
        %v4927 = vadd.f32 0.0, %v4926
        %4928 = vmatmul.f32.gmra.mxu0 %v4836
        %v4929 = vpop.f32.mrf.mxu0
        %v4930 = vadd.f32 0.0, %v4929
        %4931 = vdwg.mxu0
        %v4932 = vld [vmem:[%s7] sm:$0xff]
        %v4933 = vld [vmem:[%s7 + $0x8] sm:$0xff]
        %v4934 = vld [vmem:[%s7 + $0x10] sm:$0xff]
        %v4935 = vld [vmem:[%s7 + $0x18] sm:$0xff]
        %v4936 = vld [vmem:[%s7 + $0x20] sm:$0xff]
        %v4937 = vld [vmem:[%s7 + $0x28] sm:$0xff]
        %v4938 = vld [vmem:[%s7 + $0x30] sm:$0xff]
        %v4939 = vld [vmem:[%s7 + $0x38] sm:$0xff]
        %v4940 = vld [vmem:[%s7 + $0x40] sm:$0xff]
        %v4941 = vld [vmem:[%s7 + $0x48] sm:$0xff]
        %v4942 = vld [vmem:[%s7 + $0x50] sm:$0xff]
        %v4943 = vld [vmem:[%s7 + $0x58] sm:$0xff]
        %v4944 = vld [vmem:[%s7 + $0x60] sm:$0xff]
        %v4945 = vld [vmem:[%s7 + $0x68] sm:$0xff]
        %v4946 = vld [vmem:[%s7 + $0x70] sm:$0xff]
        %v4947 = vld [vmem:[%s7 + $0x78] sm:$0xff]
        %v4948 = vld [vmem:[%s7 + $0x80] sm:$0xff]
        %v4949 = vld [vmem:[%s7 + $0x88] sm:$0xff]
        %s4950 = scalar_lea.vmem %s7, 144
        %v4951 = vld [vmem:[%s4950] sm:$0xff]
        %v4952 = vld [vmem:[%s4950 + $0x8] sm:$0xff]
        %v4953 = vld [vmem:[%s4950 + $0x10] sm:$0xff]
        %v4954 = vld [vmem:[%s4950 + $0x18] sm:$0xff]
        %v4955 = vld [vmem:[%s4950 + $0x20] sm:$0xff]
        %v4956 = vld [vmem:[%s4950 + $0x28] sm:$0xff]
        %v4957 = vld [vmem:[%s4950 + $0x30] sm:$0xff]
        %v4958 = vld [vmem:[%s4950 + $0x38] sm:$0xff]
        %v4959 = vld [vmem:[%s4950 + $0x40] sm:$0xff]
        %v4960 = vld [vmem:[%s4950 + $0x48] sm:$0xff]
        %v4961 = vld [vmem:[%s4950 + $0x50] sm:$0xff]
        %v4962 = vld [vmem:[%s4950 + $0x58] sm:$0xff]
        %v4963 = vld [vmem:[%s4950 + $0x60] sm:$0xff]
        %v4964 = vld [vmem:[%s4950 + $0x68] sm:$0xff]
        %v4965 = vld [vmem:[%s4950 + $0x70] sm:$0xff]
        %v4966 = vld [vmem:[%s4950 + $0x78] sm:$0xff]
        %v4967 = vld [vmem:[%s4950 + $0x80] sm:$0xff]
        %v4968 = vld [vmem:[%s4950 + $0x88] sm:$0xff]
        %v4987 = vrot.slane %v4862, 1
        %v4988 = vrot.slane %v4865, 1
        %v4989 = vsel %vm1645, %v4987, %v4988
        %v4990 = vrot.slane %v4906, 1
        %v4991 = vrot.slane %v4909, 1
        %v4992 = vsel %vm1645, %v4990, %v4991
        %v4993 = vrot.slane %v4868, 1
        %v4994 = vsel %vm1645, %v4988, %v4993
        %v4995 = vrot.slane %v4912, 1
        %v4996 = vsel %vm1645, %v4991, %v4995
        %v4997 = vrot.slane %v4871, 1
        %v4998 = vsel %vm1645, %v4993, %v4997
        %v4999 = vrot.slane %v4915, 1
        %v5000 = vsel %vm1645, %v4995, %v4999
        %v5001 = vrot.slane %v4874, 1
        %v5002 = vsel %vm1645, %v4997, %v5001
        %v5003 = vrot.slane %v4918, 1
        %v5004 = vsel %vm1645, %v4999, %v5003
        %v5005 = vrot.slane %v4877, 1
        %v5006 = vsel %vm1645, %v5001, %v5005
        %v5007 = vrot.slane %v4921, 1
        %v5008 = vsel %vm1645, %v5003, %v5007
        %v5009 = vrot.slane %v4880, 1
        %v5010 = vsel %vm1645, %v5005, %v5009
        %v5011 = vrot.slane %v4924, 1
        %v5012 = vsel %vm1645, %v5007, %v5011
        %v5013 = vrot.slane %v4883, 1
        %v5014 = vsel %vm1645, %v5009, %v5013
        %v5015 = vrot.slane %v4927, 1
        %v5016 = vsel %vm1645, %v5011, %v5015
        %v5017 = vrot.slane %v4886, 1
        %v5018 = vsel %vm1645, %v5013, %v5017
        %v5019 = vrot.slane %v4930, 1
        %v5020 = vsel %vm1645, %v5015, %v5019
        %vm5029 = vcmask 130048
        %v5030 = vsel %vm5029, %v4992, 0
        %v5032 = vsel %vm5029, %v4996, 0
        %v5034 = vsel %vm5029, %v5000, 0
        %v5036 = vsel %vm5029, %v5004, 0
        %v5038 = vsel %vm5029, %v5008, 0
        %v5040 = vsel %vm5029, %v5012, 0
        %v5042 = vsel %vm5029, %v5016, 0
        %v5044 = vsel %vm5029, %v5020, 0
        %5046 = vmatpush.msra.mxu0 %v4966
        %5047 = vmatpush.msra.mxu0 %v4965
        %5048 = vmatpush.msra.mxu0 %v4964
        %5049 = vmatpush.msra.mxu0 %v4963
        %5050 = vmatpush.msra.mxu0 %v4962
        %5051 = vmatpush.msra.mxu0 %v4961
        %5052 = vmatpush.msra.mxu0 %v4960
        %5053 = vmatpush.msra.mxu0 %v4959
        %5054 = vmatpush.msra.mxu0 %v4958
        %5055 = vmatpush.msra.mxu0 %v4957
        %5056 = vmatpush.msra.mxu0 %v4956
        %5057 = vmatpush.msra.mxu0 %v4955
        %5058 = vmatpush.msra.mxu0 %v4954
        %5059 = vmatpush.msra.mxu0 %v4953
        %5060 = vmatpush.msra.mxu0 %v4952
        %5061 = vmatpush.msra.mxu0 %v4951
        %5062 = vmatmul.f32.gmra.mxu0 %v4989
        %v5063 = vpop.f32.mrf.mxu0
        %v5064 = vadd.f32 0.0, %v5063
        %5065 = vmatmul.f32.gmra.mxu0 %v4994
        %v5066 = vpop.f32.mrf.mxu0
        %v5067 = vadd.f32 0.0, %v5066
        %5068 = vmatmul.f32.gmra.mxu0 %v4998
        %v5069 = vpop.f32.mrf.mxu0
        %v5070 = vadd.f32 0.0, %v5069
        %5071 = vmatmul.f32.gmra.mxu0 %v5002
        %v5072 = vpop.f32.mrf.mxu0
        %v5073 = vadd.f32 0.0, %v5072
        %5074 = vmatmul.f32.gmra.mxu0 %v5006
        %v5075 = vpop.f32.mrf.mxu0
        %v5076 = vadd.f32 0.0, %v5075
        %5077 = vmatmul.f32.gmra.mxu0 %v5010
        %v5078 = vpop.f32.mrf.mxu0
        %v5079 = vadd.f32 0.0, %v5078
        %5080 = vmatmul.f32.gmra.mxu0 %v5014
        %v5081 = vpop.f32.mrf.mxu0
        %v5082 = vadd.f32 0.0, %v5081
        %5083 = vmatmul.f32.gmra.mxu0 %v5018
        %v5084 = vpop.f32.mrf.mxu0
        %v5085 = vadd.f32 0.0, %v5084
        %5086 = vdwg.mxu0
        %5087 = vmatpush.msra.mxu0 0.0
        %5088 = vmatpush.msra.mxu0 0.0
        %5089 = vmatpush.msra.mxu0 0.0
        %5090 = vmatpush.msra.mxu0 0.0
        %5091 = vmatpush.msra.mxu0 0.0
        %5092 = vmatpush.msra.mxu0 0.0
        %5093 = vmatpush.msra.mxu0 0.0
        %5094 = vmatpush.msra.mxu0 0.0
        %5095 = vmatpush.msra.mxu0 0.0
        %5096 = vmatpush.msra.mxu0 0.0
        %5097 = vmatpush.msra.mxu0 0.0
        %5098 = vmatpush.msra.mxu0 0.0
        %5099 = vmatpush.msra.mxu0 0.0
        %5100 = vmatpush.msra.mxu0 0.0
        %5101 = vmatpush.msra.mxu0 %v4968
        %5102 = vmatpush.msra.mxu0 %v4967
        %5103 = vmatmul.f32.gmra.mxu0 %v5030
        %v5104 = vpop.f32.mrf.mxu0
        %v5105 = vadd.f32 %v5064, %v5104
        %5106 = vmatmul.f32.gmra.mxu0 %v5032
        %v5107 = vpop.f32.mrf.mxu0
        %v5108 = vadd.f32 %v5067, %v5107
        %5109 = vmatmul.f32.gmra.mxu0 %v5034
        %v5110 = vpop.f32.mrf.mxu0
        %v5111 = vadd.f32 %v5070, %v5110
        %5112 = vmatmul.f32.gmra.mxu0 %v5036
        %v5113 = vpop.f32.mrf.mxu0
        %v5114 = vadd.f32 %v5073, %v5113
        %5115 = vmatmul.f32.gmra.mxu0 %v5038
        %v5116 = vpop.f32.mrf.mxu0
        %v5117 = vadd.f32 %v5076, %v5116
        %5118 = vmatmul.f32.gmra.mxu0 %v5040
        %v5119 = vpop.f32.mrf.mxu0
        %v5120 = vadd.f32 %v5079, %v5119
        %5121 = vmatmul.f32.gmra.mxu0 %v5042
        %v5122 = vpop.f32.mrf.mxu0
        %v5123 = vadd.f32 %v5082, %v5122
        %5124 = vmatmul.f32.gmra.mxu0 %v5044
        %v5125 = vpop.f32.mrf.mxu0
        %v5126 = vadd.f32 %v5085, %v5125
        %5127 = vdwg.mxu0
        %v5128 = vsel %vm5029, %v4906, 0
        %v5130 = vsel %vm5029, %v4909, 0
        %v5132 = vsel %vm5029, %v4912, 0
        %v5134 = vsel %vm5029, %v4915, 0
        %v5136 = vsel %vm5029, %v4918, 0
        %v5138 = vsel %vm5029, %v4921, 0
        %v5140 = vsel %vm5029, %v4924, 0
        %v5142 = vsel %vm5029, %v4927, 0
        %5144 = vmatpush.msra.mxu0 %v4947
        %5145 = vmatpush.msra.mxu0 %v4946
        %5146 = vmatpush.msra.mxu0 %v4945
        %5147 = vmatpush.msra.mxu0 %v4944
        %5148 = vmatpush.msra.mxu0 %v4943
        %5149 = vmatpush.msra.mxu0 %v4942
        %5150 = vmatpush.msra.mxu0 %v4941
        %5151 = vmatpush.msra.mxu0 %v4940
        %5152 = vmatpush.msra.mxu0 %v4939
        %5153 = vmatpush.msra.mxu0 %v4938
        %5154 = vmatpush.msra.mxu0 %v4937
        %5155 = vmatpush.msra.mxu0 %v4936
        %5156 = vmatpush.msra.mxu0 %v4935
        %5157 = vmatpush.msra.mxu0 %v4934
        %5158 = vmatpush.msra.mxu0 %v4933
        %5159 = vmatpush.msra.mxu0 %v4932
        %5160 = vmatmul.f32.gmra.mxu0 %v4862
        %v5161 = vpop.f32.mrf.mxu0
        %v5162 = vadd.f32 %v5105, %v5161
        %5163 = vmatmul.f32.gmra.mxu0 %v4865
        %v5164 = vpop.f32.mrf.mxu0
        %v5165 = vadd.f32 %v5108, %v5164
        %5166 = vmatmul.f32.gmra.mxu0 %v4868
        %v5167 = vpop.f32.mrf.mxu0
        %v5168 = vadd.f32 %v5111, %v5167
        %5169 = vmatmul.f32.gmra.mxu0 %v4871
        %v5170 = vpop.f32.mrf.mxu0
        %v5171 = vadd.f32 %v5114, %v5170
        %5172 = vmatmul.f32.gmra.mxu0 %v4874
        %v5173 = vpop.f32.mrf.mxu0
        %v5174 = vadd.f32 %v5117, %v5173
        %5175 = vmatmul.f32.gmra.mxu0 %v4877
        %v5176 = vpop.f32.mrf.mxu0
        %v5177 = vadd.f32 %v5120, %v5176
        %5178 = vmatmul.f32.gmra.mxu0 %v4880
        %v5179 = vpop.f32.mrf.mxu0
        %v5180 = vadd.f32 %v5123, %v5179
        %5181 = vmatmul.f32.gmra.mxu0 %v4883
        %v5182 = vpop.f32.mrf.mxu0
        %v5183 = vadd.f32 %v5126, %v5182
        %5184 = vdwg.mxu0
        %5185 = vmatpush.msra.mxu0 0.0
        %5186 = vmatpush.msra.mxu0 0.0
        %5187 = vmatpush.msra.mxu0 0.0
        %5188 = vmatpush.msra.mxu0 0.0
        %5189 = vmatpush.msra.mxu0 0.0
        %5190 = vmatpush.msra.mxu0 0.0
        %5191 = vmatpush.msra.mxu0 0.0
        %5192 = vmatpush.msra.mxu0 0.0
        %5193 = vmatpush.msra.mxu0 0.0
        %5194 = vmatpush.msra.mxu0 0.0
        %5195 = vmatpush.msra.mxu0 0.0
        %5196 = vmatpush.msra.mxu0 0.0
        %5197 = vmatpush.msra.mxu0 0.0
        %5198 = vmatpush.msra.mxu0 0.0
        %5199 = vmatpush.msra.mxu0 %v4949
        %5200 = vmatpush.msra.mxu0 %v4948
        %5201 = vmatmul.f32.gmra.mxu0 %v5128
        %v5202 = vpop.f32.mrf.mxu0
        %v5203 = vadd.f32 %v5162, %v5202
        %5204 = vmatmul.f32.gmra.mxu0 %v5130
        %v5205 = vpop.f32.mrf.mxu0
        %v5206 = vadd.f32 %v5165, %v5205
        %5207 = vmatmul.f32.gmra.mxu0 %v5132
        %v5208 = vpop.f32.mrf.mxu0
        %v5209 = vadd.f32 %v5168, %v5208
        %5210 = vmatmul.f32.gmra.mxu0 %v5134
        %v5211 = vpop.f32.mrf.mxu0
        %v5212 = vadd.f32 %v5171, %v5211
        %5213 = vmatmul.f32.gmra.mxu0 %v5136
        %v5214 = vpop.f32.mrf.mxu0
        %v5215 = vadd.f32 %v5174, %v5214
        %5216 = vmatmul.f32.gmra.mxu0 %v5138
        %v5217 = vpop.f32.mrf.mxu0
        %v5218 = vadd.f32 %v5177, %v5217
        %5219 = vmatmul.f32.gmra.mxu0 %v5140
        %v5220 = vpop.f32.mrf.mxu0
        %v5221 = vadd.f32 %v5180, %v5220
        %5222 = vmatmul.f32.gmra.mxu0 %v5142
        %v5223 = vpop.f32.mrf.mxu0
        %v5224 = vadd.f32 %v5183, %v5223
        %5225 = vdwg.mxu0
        %s5226 = scalar_lea.vmem %s7, 288
        %v5227 = vld [vmem:[%s5226] sm:$0xff]
        %v5228 = vld [vmem:[%s5226 + $0x8] sm:$0xff]
        %v5229 = vld [vmem:[%s5226 + $0x10] sm:$0xff]
        %v5230 = vld [vmem:[%s5226 + $0x18] sm:$0xff]
        %v5231 = vld [vmem:[%s5226 + $0x20] sm:$0xff]
        %v5232 = vld [vmem:[%s5226 + $0x28] sm:$0xff]
        %v5233 = vld [vmem:[%s5226 + $0x30] sm:$0xff]
        %v5234 = vld [vmem:[%s5226 + $0x38] sm:$0xff]
        %v5235 = vld [vmem:[%s5226 + $0x40] sm:$0xff]
        %v5236 = vld [vmem:[%s5226 + $0x48] sm:$0xff]
        %v5237 = vld [vmem:[%s5226 + $0x50] sm:$0xff]
        %v5238 = vld [vmem:[%s5226 + $0x58] sm:$0xff]
        %v5239 = vld [vmem:[%s5226 + $0x60] sm:$0xff]
        %v5240 = vld [vmem:[%s5226 + $0x68] sm:$0xff]
        %v5241 = vld [vmem:[%s5226 + $0x70] sm:$0xff]
        %v5242 = vld [vmem:[%s5226 + $0x78] sm:$0xff]
        %v5243 = vld [vmem:[%s5226 + $0x80] sm:$0xff]
        %v5244 = vld [vmem:[%s5226 + $0x88] sm:$0xff]
        %v5245 = vrot.slane %v4862, 2
        %v5246 = vrot.slane %v4865, 2
        %v5247 = vsel %vm3072, %v5245, %v5246
        %v5248 = vrot.slane %v4906, 2
        %v5249 = vrot.slane %v4909, 2
        %v5250 = vsel %vm3072, %v5248, %v5249
        %v5251 = vrot.slane %v4868, 2
        %v5252 = vsel %vm3072, %v5246, %v5251
        %v5253 = vrot.slane %v4912, 2
        %v5254 = vsel %vm3072, %v5249, %v5253
        %v5255 = vrot.slane %v4871, 2
        %v5256 = vsel %vm3072, %v5251, %v5255
        %v5257 = vrot.slane %v4915, 2
        %v5258 = vsel %vm3072, %v5253, %v5257
        %v5259 = vrot.slane %v4874, 2
        %v5260 = vsel %vm3072, %v5255, %v5259
        %v5261 = vrot.slane %v4918, 2
        %v5262 = vsel %vm3072, %v5257, %v5261
        %v5263 = vrot.slane %v4877, 2
        %v5264 = vsel %vm3072, %v5259, %v5263
        %v5265 = vrot.slane %v4921, 2
        %v5266 = vsel %vm3072, %v5261, %v5265
        %v5267 = vrot.slane %v4880, 2
        %v5268 = vsel %vm3072, %v5263, %v5267
        %v5269 = vrot.slane %v4924, 2
        %v5270 = vsel %vm3072, %v5265, %v5269
        %v5271 = vrot.slane %v4883, 2
        %v5272 = vsel %vm3072, %v5267, %v5271
        %v5273 = vrot.slane %v4927, 2
        %v5274 = vsel %vm3072, %v5269, %v5273
        %v5275 = vrot.slane %v4886, 2
        %v5276 = vsel %vm3072, %v5271, %v5275
        %v5277 = vrot.slane %v4930, 2
        %v5278 = vsel %vm3072, %v5273, %v5277
        %v5287 = vsel %vm5029, %v5250, 0
        %v5289 = vsel %vm5029, %v5254, 0
        %v5291 = vsel %vm5029, %v5258, 0
        %v5293 = vsel %vm5029, %v5262, 0
        %v5295 = vsel %vm5029, %v5266, 0
        %v5297 = vsel %vm5029, %v5270, 0
        %v5299 = vsel %vm5029, %v5274, 0
        %v5301 = vsel %vm5029, %v5278, 0
        %5303 = vmatpush.msra.mxu0 %v5242
        %5304 = vmatpush.msra.mxu0 %v5241
        %5305 = vmatpush.msra.mxu0 %v5240
        %5306 = vmatpush.msra.mxu0 %v5239
        %5307 = vmatpush.msra.mxu0 %v5238
        %5308 = vmatpush.msra.mxu0 %v5237
        %5309 = vmatpush.msra.mxu0 %v5236
        %5310 = vmatpush.msra.mxu0 %v5235
        %5311 = vmatpush.msra.mxu0 %v5234
        %5312 = vmatpush.msra.mxu0 %v5233
        %5313 = vmatpush.msra.mxu0 %v5232
        %5314 = vmatpush.msra.mxu0 %v5231
        %5315 = vmatpush.msra.mxu0 %v5230
        %5316 = vmatpush.msra.mxu0 %v5229
        %5317 = vmatpush.msra.mxu0 %v5228
        %5318 = vmatpush.msra.mxu0 %v5227
        %5319 = vmatmul.f32.gmra.mxu0 %v5247
        %v5320 = vpop.f32.mrf.mxu0
        %v5321 = vadd.f32 0.0, %v5320
        %5322 = vmatmul.f32.gmra.mxu0 %v5252
        %v5323 = vpop.f32.mrf.mxu0
        %v5324 = vadd.f32 0.0, %v5323
        %5325 = vmatmul.f32.gmra.mxu0 %v5256
        %v5326 = vpop.f32.mrf.mxu0
        %v5327 = vadd.f32 0.0, %v5326
        %5328 = vmatmul.f32.gmra.mxu0 %v5260
        %v5329 = vpop.f32.mrf.mxu0
        %v5330 = vadd.f32 0.0, %v5329
        %5331 = vmatmul.f32.gmra.mxu0 %v5264
        %v5332 = vpop.f32.mrf.mxu0
        %v5333 = vadd.f32 0.0, %v5332
        %5334 = vmatmul.f32.gmra.mxu0 %v5268
        %v5335 = vpop.f32.mrf.mxu0
        %v5336 = vadd.f32 0.0, %v5335
        %5337 = vmatmul.f32.gmra.mxu0 %v5272
        %v5338 = vpop.f32.mrf.mxu0
        %v5339 = vadd.f32 0.0, %v5338
        %5340 = vmatmul.f32.gmra.mxu0 %v5276
        %v5341 = vpop.f32.mrf.mxu0
        %v5342 = vadd.f32 0.0, %v5341
        %5343 = vdwg.mxu0
        %5344 = vmatpush.msra.mxu0 0.0
        %5345 = vmatpush.msra.mxu0 0.0
        %5346 = vmatpush.msra.mxu0 0.0
        %5347 = vmatpush.msra.mxu0 0.0
        %5348 = vmatpush.msra.mxu0 0.0
        %5349 = vmatpush.msra.mxu0 0.0
        %5350 = vmatpush.msra.mxu0 0.0
        %5351 = vmatpush.msra.mxu0 0.0
        %5352 = vmatpush.msra.mxu0 0.0
        %5353 = vmatpush.msra.mxu0 0.0
        %5354 = vmatpush.msra.mxu0 0.0
        %5355 = vmatpush.msra.mxu0 0.0
        %5356 = vmatpush.msra.mxu0 0.0
        %5357 = vmatpush.msra.mxu0 0.0
        %5358 = vmatpush.msra.mxu0 %v5244
        %5359 = vmatpush.msra.mxu0 %v5243
        %5360 = vmatmul.f32.gmra.mxu0 %v5287
        %v5361 = vpop.f32.mrf.mxu0
        %v5362 = vadd.f32 %v5321, %v5361
        %5363 = vmatmul.f32.gmra.mxu0 %v5289
        %v5364 = vpop.f32.mrf.mxu0
        %v5365 = vadd.f32 %v5324, %v5364
        %5366 = vmatmul.f32.gmra.mxu0 %v5291
        %v5367 = vpop.f32.mrf.mxu0
        %v5368 = vadd.f32 %v5327, %v5367
        %5369 = vmatmul.f32.gmra.mxu0 %v5293
        %v5370 = vpop.f32.mrf.mxu0
        %v5371 = vadd.f32 %v5330, %v5370
        %5372 = vmatmul.f32.gmra.mxu0 %v5295
        %v5373 = vpop.f32.mrf.mxu0
        %v5374 = vadd.f32 %v5333, %v5373
        %5375 = vmatmul.f32.gmra.mxu0 %v5297
        %v5376 = vpop.f32.mrf.mxu0
        %v5377 = vadd.f32 %v5336, %v5376
        %5378 = vmatmul.f32.gmra.mxu0 %v5299
        %v5379 = vpop.f32.mrf.mxu0
        %v5380 = vadd.f32 %v5339, %v5379
        %5381 = vmatmul.f32.gmra.mxu0 %v5301
        %v5382 = vpop.f32.mrf.mxu0
        %v5383 = vadd.f32 %v5342, %v5382
        %5384 = vdwg.mxu0
        %v5385 = vadd.f32 %v5203, %v5362
        %v5386 = vadd.f32 %v5206, %v5365
        %v5387 = vadd.f32 %v5209, %v5368
        %v5388 = vadd.f32 %v5212, %v5371
        %v5389 = vadd.f32 %v5215, %v5374
        %v5390 = vadd.f32 %v5218, %v5377
        %v5391 = vadd.f32 %v5221, %v5380
        %v5392 = vadd.f32 %v5224, %v5383
        %s5393 = scalar_lea.vmem %s7, 432
        %v5394 = vld [vmem:[%s5393] sm:$0xff]
        %v5395 = vld [vmem:[%s5393 + $0x8] sm:$0xff]
        %v5396 = vld [vmem:[%s5393 + $0x10] sm:$0xff]
        %v5397 = vld [vmem:[%s5393 + $0x18] sm:$0xff]
        %v5398 = vld [vmem:[%s5393 + $0x20] sm:$0xff]
        %v5399 = vld [vmem:[%s5393 + $0x28] sm:$0xff]
        %v5400 = vld [vmem:[%s5393 + $0x30] sm:$0xff]
        %v5401 = vld [vmem:[%s5393 + $0x38] sm:$0xff]
        %v5402 = vld [vmem:[%s5393 + $0x40] sm:$0xff]
        %v5403 = vld [vmem:[%s5393 + $0x48] sm:$0xff]
        %v5404 = vld [vmem:[%s5393 + $0x50] sm:$0xff]
        %v5405 = vld [vmem:[%s5393 + $0x58] sm:$0xff]
        %v5406 = vld [vmem:[%s5393 + $0x60] sm:$0xff]
        %v5407 = vld [vmem:[%s5393 + $0x68] sm:$0xff]
        %v5408 = vld [vmem:[%s5393 + $0x70] sm:$0xff]
        %v5409 = vld [vmem:[%s5393 + $0x78] sm:$0xff]
        %v5410 = vld [vmem:[%s5393 + $0x80] sm:$0xff]
        %v5411 = vld [vmem:[%s5393 + $0x88] sm:$0xff]
        %v5412 = vrot.slane %v4862, 3
        %v5413 = vrot.slane %v4865, 3
        %v5414 = vsel %vm3528, %v5412, %v5413
        %v5415 = vrot.slane %v4906, 3
        %v5416 = vrot.slane %v4909, 3
        %v5417 = vsel %vm3528, %v5415, %v5416
        %v5418 = vrot.slane %v4868, 3
        %v5419 = vsel %vm3528, %v5413, %v5418
        %v5420 = vrot.slane %v4912, 3
        %v5421 = vsel %vm3528, %v5416, %v5420
        %v5422 = vrot.slane %v4871, 3
        %v5423 = vsel %vm3528, %v5418, %v5422
        %v5424 = vrot.slane %v4915, 3
        %v5425 = vsel %vm3528, %v5420, %v5424
        %v5426 = vrot.slane %v4874, 3
        %v5427 = vsel %vm3528, %v5422, %v5426
        %v5428 = vrot.slane %v4918, 3
        %v5429 = vsel %vm3528, %v5424, %v5428
        %v5430 = vrot.slane %v4877, 3
        %v5431 = vsel %vm3528, %v5426, %v5430
        %v5432 = vrot.slane %v4921, 3
        %v5433 = vsel %vm3528, %v5428, %v5432
        %v5434 = vrot.slane %v4880, 3
        %v5435 = vsel %vm3528, %v5430, %v5434
        %v5436 = vrot.slane %v4924, 3
        %v5437 = vsel %vm3528, %v5432, %v5436
        %v5438 = vrot.slane %v4883, 3
        %v5439 = vsel %vm3528, %v5434, %v5438
        %v5440 = vrot.slane %v4927, 3
        %v5441 = vsel %vm3528, %v5436, %v5440
        %v5442 = vrot.slane %v4886, 3
        %v5443 = vsel %vm3528, %v5438, %v5442
        %v5444 = vrot.slane %v4930, 3
        %v5445 = vsel %vm3528, %v5440, %v5444
        %v5454 = vsel %vm5029, %v5417, 0
        %v5456 = vsel %vm5029, %v5421, 0
        %v5458 = vsel %vm5029, %v5425, 0
        %v5460 = vsel %vm5029, %v5429, 0
        %v5462 = vsel %vm5029, %v5433, 0
        %v5464 = vsel %vm5029, %v5437, 0
        %v5466 = vsel %vm5029, %v5441, 0
        %v5468 = vsel %vm5029, %v5445, 0
        %5470 = vmatpush.msra.mxu0 %v5409
        %5471 = vmatpush.msra.mxu0 %v5408
        %5472 = vmatpush.msra.mxu0 %v5407
        %5473 = vmatpush.msra.mxu0 %v5406
        %5474 = vmatpush.msra.mxu0 %v5405
        %5475 = vmatpush.msra.mxu0 %v5404
        %5476 = vmatpush.msra.mxu0 %v5403
        %5477 = vmatpush.msra.mxu0 %v5402
        %5478 = vmatpush.msra.mxu0 %v5401
        %5479 = vmatpush.msra.mxu0 %v5400
        %5480 = vmatpush.msra.mxu0 %v5399
        %5481 = vmatpush.msra.mxu0 %v5398
        %5482 = vmatpush.msra.mxu0 %v5397
        %5483 = vmatpush.msra.mxu0 %v5396
        %5484 = vmatpush.msra.mxu0 %v5395
        %5485 = vmatpush.msra.mxu0 %v5394
        %5486 = vmatmul.f32.gmra.mxu0 %v5414
        %v5487 = vpop.f32.mrf.mxu0
        %v5488 = vadd.f32 0.0, %v5487
        %5489 = vmatmul.f32.gmra.mxu0 %v5419
        %v5490 = vpop.f32.mrf.mxu0
        %v5491 = vadd.f32 0.0, %v5490
        %5492 = vmatmul.f32.gmra.mxu0 %v5423
        %v5493 = vpop.f32.mrf.mxu0
        %v5494 = vadd.f32 0.0, %v5493
        %5495 = vmatmul.f32.gmra.mxu0 %v5427
        %v5496 = vpop.f32.mrf.mxu0
        %v5497 = vadd.f32 0.0, %v5496
        %5498 = vmatmul.f32.gmra.mxu0 %v5431
        %v5499 = vpop.f32.mrf.mxu0
        %v5500 = vadd.f32 0.0, %v5499
        %5501 = vmatmul.f32.gmra.mxu0 %v5435
        %v5502 = vpop.f32.mrf.mxu0
        %v5503 = vadd.f32 0.0, %v5502
        %5504 = vmatmul.f32.gmra.mxu0 %v5439
        %v5505 = vpop.f32.mrf.mxu0
        %v5506 = vadd.f32 0.0, %v5505
        %5507 = vmatmul.f32.gmra.mxu0 %v5443
        %v5508 = vpop.f32.mrf.mxu0
        %v5509 = vadd.f32 0.0, %v5508
        %5510 = vdwg.mxu0
        %5511 = vmatpush.msra.mxu0 0.0
        %5512 = vmatpush.msra.mxu0 0.0
        %5513 = vmatpush.msra.mxu0 0.0
        %5514 = vmatpush.msra.mxu0 0.0
        %5515 = vmatpush.msra.mxu0 0.0
        %5516 = vmatpush.msra.mxu0 0.0
        %5517 = vmatpush.msra.mxu0 0.0
        %5518 = vmatpush.msra.mxu0 0.0
        %5519 = vmatpush.msra.mxu0 0.0
        %5520 = vmatpush.msra.mxu0 0.0
        %5521 = vmatpush.msra.mxu0 0.0
        %5522 = vmatpush.msra.mxu0 0.0
        %5523 = vmatpush.msra.mxu0 0.0
        %5524 = vmatpush.msra.mxu0 0.0
        %5525 = vmatpush.msra.mxu0 %v5411
        %5526 = vmatpush.msra.mxu0 %v5410
        %5527 = vmatmul.f32.gmra.mxu0 %v5454
        %v5528 = vpop.f32.mrf.mxu0
        %v5529 = vadd.f32 %v5488, %v5528
        %5530 = vmatmul.f32.gmra.mxu0 %v5456
        %v5531 = vpop.f32.mrf.mxu0
        %v5532 = vadd.f32 %v5491, %v5531
        %5533 = vmatmul.f32.gmra.mxu0 %v5458
        %v5534 = vpop.f32.mrf.mxu0
        %v5535 = vadd.f32 %v5494, %v5534
        %5536 = vmatmul.f32.gmra.mxu0 %v5460
        %v5537 = vpop.f32.mrf.mxu0
        %v5538 = vadd.f32 %v5497, %v5537
        %5539 = vmatmul.f32.gmra.mxu0 %v5462
        %v5540 = vpop.f32.mrf.mxu0
        %v5541 = vadd.f32 %v5500, %v5540
        %5542 = vmatmul.f32.gmra.mxu0 %v5464
        %v5543 = vpop.f32.mrf.mxu0
        %v5544 = vadd.f32 %v5503, %v5543
        %5545 = vmatmul.f32.gmra.mxu0 %v5466
        %v5546 = vpop.f32.mrf.mxu0
        %v5547 = vadd.f32 %v5506, %v5546
        %5548 = vmatmul.f32.gmra.mxu0 %v5468
        %v5549 = vpop.f32.mrf.mxu0
        %v5550 = vadd.f32 %v5509, %v5549
        %5551 = vdwg.mxu0
        %v5552 = vadd.f32 %v5385, %v5529
        %v5553 = vadd.f32 %v5386, %v5532
        %v5554 = vadd.f32 %v5387, %v5535
        %v5555 = vadd.f32 %v5388, %v5538
        %v5556 = vadd.f32 %v5389, %v5541
        %v5557 = vadd.f32 %v5390, %v5544
        %v5558 = vadd.f32 %v5391, %v5547
        %v5559 = vadd.f32 %v5392, %v5550
        %s5560 = scalar_lea.vmem %s7, 576
        %v5561 = vld [vmem:[%s5560] sm:$0xff]
        %v5562 = vld [vmem:[%s5560 + $0x8] sm:$0xff]
        %v5563 = vld [vmem:[%s5560 + $0x10] sm:$0xff]
        %v5564 = vld [vmem:[%s5560 + $0x18] sm:$0xff]
        %v5565 = vld [vmem:[%s5560 + $0x20] sm:$0xff]
        %v5566 = vld [vmem:[%s5560 + $0x28] sm:$0xff]
        %v5567 = vld [vmem:[%s5560 + $0x30] sm:$0xff]
        %v5568 = vld [vmem:[%s5560 + $0x38] sm:$0xff]
        %v5569 = vld [vmem:[%s5560 + $0x40] sm:$0xff]
        %v5570 = vld [vmem:[%s5560 + $0x48] sm:$0xff]
        %v5571 = vld [vmem:[%s5560 + $0x50] sm:$0xff]
        %v5572 = vld [vmem:[%s5560 + $0x58] sm:$0xff]
        %v5573 = vld [vmem:[%s5560 + $0x60] sm:$0xff]
        %v5574 = vld [vmem:[%s5560 + $0x68] sm:$0xff]
        %v5575 = vld [vmem:[%s5560 + $0x70] sm:$0xff]
        %v5576 = vld [vmem:[%s5560 + $0x78] sm:$0xff]
        %v5577 = vld [vmem:[%s5560 + $0x80] sm:$0xff]
        %v5578 = vld [vmem:[%s5560 + $0x88] sm:$0xff]
        %v5579 = vrot.slane %v4862, 4
        %v5580 = vrot.slane %v4865, 4
        %v5581 = vsel %vm3984, %v5579, %v5580
        %v5582 = vrot.slane %v4906, 4
        %v5583 = vrot.slane %v4909, 4
        %v5584 = vsel %vm3984, %v5582, %v5583
        %v5585 = vrot.slane %v4868, 4
        %v5586 = vsel %vm3984, %v5580, %v5585
        %v5587 = vrot.slane %v4912, 4
        %v5588 = vsel %vm3984, %v5583, %v5587
        %v5589 = vrot.slane %v4871, 4
        %v5590 = vsel %vm3984, %v5585, %v5589
        %v5591 = vrot.slane %v4915, 4
        %v5592 = vsel %vm3984, %v5587, %v5591
        %v5593 = vrot.slane %v4874, 4
        %v5594 = vsel %vm3984, %v5589, %v5593
        %v5595 = vrot.slane %v4918, 4
        %v5596 = vsel %vm3984, %v5591, %v5595
        %v5597 = vrot.slane %v4877, 4
        %v5598 = vsel %vm3984, %v5593, %v5597
        %v5599 = vrot.slane %v4921, 4
        %v5600 = vsel %vm3984, %v5595, %v5599
        %v5601 = vrot.slane %v4880, 4
        %v5602 = vsel %vm3984, %v5597, %v5601
        %v5603 = vrot.slane %v4924, 4
        %v5604 = vsel %vm3984, %v5599, %v5603
        %v5605 = vrot.slane %v4883, 4
        %v5606 = vsel %vm3984, %v5601, %v5605
        %v5607 = vrot.slane %v4927, 4
        %v5608 = vsel %vm3984, %v5603, %v5607
        %v5609 = vrot.slane %v4886, 4
        %v5610 = vsel %vm3984, %v5605, %v5609
        %v5611 = vrot.slane %v4930, 4
        %v5612 = vsel %vm3984, %v5607, %v5611
        %v5621 = vsel %vm5029, %v5584, 0
        %v5623 = vsel %vm5029, %v5588, 0
        %v5625 = vsel %vm5029, %v5592, 0
        %v5627 = vsel %vm5029, %v5596, 0
        %v5629 = vsel %vm5029, %v5600, 0
        %v5631 = vsel %vm5029, %v5604, 0
        %v5633 = vsel %vm5029, %v5608, 0
        %v5635 = vsel %vm5029, %v5612, 0
        %5637 = vmatpush.msra.mxu0 %v5576
        %5638 = vmatpush.msra.mxu0 %v5575
        %5639 = vmatpush.msra.mxu0 %v5574
        %5640 = vmatpush.msra.mxu0 %v5573
        %5641 = vmatpush.msra.mxu0 %v5572
        %5642 = vmatpush.msra.mxu0 %v5571
        %5643 = vmatpush.msra.mxu0 %v5570
        %5644 = vmatpush.msra.mxu0 %v5569
        %5645 = vmatpush.msra.mxu0 %v5568
        %5646 = vmatpush.msra.mxu0 %v5567
        %5647 = vmatpush.msra.mxu0 %v5566
        %5648 = vmatpush.msra.mxu0 %v5565
        %5649 = vmatpush.msra.mxu0 %v5564
        %5650 = vmatpush.msra.mxu0 %v5563
        %5651 = vmatpush.msra.mxu0 %v5562
        %5652 = vmatpush.msra.mxu0 %v5561
        %5653 = vmatmul.f32.gmra.mxu0 %v5581
        %v5654 = vpop.f32.mrf.mxu0
        %v5655 = vadd.f32 0.0, %v5654
        %5656 = vmatmul.f32.gmra.mxu0 %v5586
        %v5657 = vpop.f32.mrf.mxu0
        %v5658 = vadd.f32 0.0, %v5657
        %5659 = vmatmul.f32.gmra.mxu0 %v5590
        %v5660 = vpop.f32.mrf.mxu0
        %v5661 = vadd.f32 0.0, %v5660
        %5662 = vmatmul.f32.gmra.mxu0 %v5594
        %v5663 = vpop.f32.mrf.mxu0
        %v5664 = vadd.f32 0.0, %v5663
        %5665 = vmatmul.f32.gmra.mxu0 %v5598
        %v5666 = vpop.f32.mrf.mxu0
        %v5667 = vadd.f32 0.0, %v5666
        %5668 = vmatmul.f32.gmra.mxu0 %v5602
        %v5669 = vpop.f32.mrf.mxu0
        %v5670 = vadd.f32 0.0, %v5669
        %5671 = vmatmul.f32.gmra.mxu0 %v5606
        %v5672 = vpop.f32.mrf.mxu0
        %v5673 = vadd.f32 0.0, %v5672
        %5674 = vmatmul.f32.gmra.mxu0 %v5610
        %v5675 = vpop.f32.mrf.mxu0
        %v5676 = vadd.f32 0.0, %v5675
        %5677 = vdwg.mxu0
        %5678 = vmatpush.msra.mxu0 0.0
        %5679 = vmatpush.msra.mxu0 0.0
        %5680 = vmatpush.msra.mxu0 0.0
        %5681 = vmatpush.msra.mxu0 0.0
        %5682 = vmatpush.msra.mxu0 0.0
        %5683 = vmatpush.msra.mxu0 0.0
        %5684 = vmatpush.msra.mxu0 0.0
        %5685 = vmatpush.msra.mxu0 0.0
        %5686 = vmatpush.msra.mxu0 0.0
        %5687 = vmatpush.msra.mxu0 0.0
        %5688 = vmatpush.msra.mxu0 0.0
        %5689 = vmatpush.msra.mxu0 0.0
        %5690 = vmatpush.msra.mxu0 0.0
        %5691 = vmatpush.msra.mxu0 0.0
        %5692 = vmatpush.msra.mxu0 %v5578
        %5693 = vmatpush.msra.mxu0 %v5577
        %5694 = vmatmul.f32.gmra.mxu0 %v5621
        %v5695 = vpop.f32.mrf.mxu0
        %v5696 = vadd.f32 %v5655, %v5695
        %5697 = vmatmul.f32.gmra.mxu0 %v5623
        %v5698 = vpop.f32.mrf.mxu0
        %v5699 = vadd.f32 %v5658, %v5698
        %5700 = vmatmul.f32.gmra.mxu0 %v5625
        %v5701 = vpop.f32.mrf.mxu0
        %v5702 = vadd.f32 %v5661, %v5701
        %5703 = vmatmul.f32.gmra.mxu0 %v5627
        %v5704 = vpop.f32.mrf.mxu0
        %v5705 = vadd.f32 %v5664, %v5704
        %5706 = vmatmul.f32.gmra.mxu0 %v5629
        %v5707 = vpop.f32.mrf.mxu0
        %v5708 = vadd.f32 %v5667, %v5707
        %5709 = vmatmul.f32.gmra.mxu0 %v5631
        %v5710 = vpop.f32.mrf.mxu0
        %v5711 = vadd.f32 %v5670, %v5710
        %5712 = vmatmul.f32.gmra.mxu0 %v5633
        %v5713 = vpop.f32.mrf.mxu0
        %v5714 = vadd.f32 %v5673, %v5713
        %5715 = vmatmul.f32.gmra.mxu0 %v5635
        %v5716 = vpop.f32.mrf.mxu0
        %v5717 = vadd.f32 %v5676, %v5716
        %5718 = vdwg.mxu0
        %v5719 = vadd.f32 %v5552, %v5696
        %v5720 = vadd.f32 %v5553, %v5699
        %v5721 = vadd.f32 %v5554, %v5702
        %v5722 = vadd.f32 %v5555, %v5705
        %v5723 = vadd.f32 %v5556, %v5708
        %v5724 = vadd.f32 %v5557, %v5711
        %v5725 = vadd.f32 %v5558, %v5714
        %v5726 = vadd.f32 %v5559, %v5717
        %v5727 = vld [vmem:[%s8] sm:$0x1]
        %v5729 = vperm.slane %v5727, 0
        %v5731 = vadd.f32 %v5719, %v5729
        %v5732 = vadd.f32 %v5720, %v5729
        %v5733 = vadd.f32 %v5721, %v5729
        %v5734 = vadd.f32 %v5722, %v5729
        %v5735 = vadd.f32 %v5723, %v5729
        %v5736 = vadd.f32 %v5724, %v5729
        %v5737 = vadd.f32 %v5725, %v5729
        %v5738 = vadd.f32 %v5726, %v5729
        %v5739 = vmax.f32 %v5731, 0.0
        %v5740 = vmax.f32 %v5732, 0.0
        %v5741 = vmax.f32 %v5733, 0.0
        %v5742 = vmax.f32 %v5734, 0.0
        %v5743 = vmax.f32 %v5735, 0.0
        %v5744 = vmax.f32 %v5736, 0.0
        %v5745 = vmax.f32 %v5737, 0.0
        %v5746 = vmax.f32 %v5738, 0.0
        %v5747 = vld [vmem:[%s9] sm:$0xff]
        %v5748 = vld [vmem:[%s9 + $0x8] sm:$0xff]
        %v5749 = vld [vmem:[%s9 + $0x10] sm:$0xff]
        %v5750 = vld [vmem:[%s9 + $0x18] sm:$0xff]
        %v5751 = vld [vmem:[%s9 + $0x20] sm:$0xff]
        %v5752 = vld [vmem:[%s9 + $0x28] sm:$0xff]
        %v5753 = vld [vmem:[%s9 + $0x30] sm:$0xff]
        %v5754 = vld [vmem:[%s9 + $0x38] sm:$0xff]
        %v5755 = vld [vmem:[%s9 + $0x40] sm:$0xff]
        %v5756 = vld [vmem:[%s9 + $0x48] sm:$0xff]
        %v5757 = vld [vmem:[%s9 + $0x50] sm:$0xff]
        %v5758 = vld [vmem:[%s9 + $0x58] sm:$0xff]
        %v5759 = vld [vmem:[%s9 + $0x60] sm:$0xff]
        %v5760 = vld [vmem:[%s9 + $0x68] sm:$0xff]
        %v5761 = vld [vmem:[%s9 + $0x70] sm:$0xff]
        %v5762 = vld [vmem:[%s10] sm:$0x1]
        %v5764 = vperm.slane %v5762, 0
        %vm5766 = vcmask 982016
        %v5768 = vsel %vm5766, %v5739, 0
        %v5771 = vsel %vm5766, %v5740, 0
        %v5774 = vsel %vm5766, %v5741, 0
        %v5777 = vsel %vm5766, %v5742, 0
        %v5780 = vsel %vm5766, %v5743, 0
        %v5783 = vsel %vm5766, %v5744, 0
        %v5786 = vsel %vm5766, %v5745, 0
        %v5789 = vsel %vm5766, %v5746, 0
        %5791 = vmatpush.msra.mxu0 0.0
        %5792 = vmatpush.msra.mxu0 %v5761
        %5793 = vmatpush.msra.mxu0 %v5760
        %5794 = vmatpush.msra.mxu0 %v5759
        %5795 = vmatpush.msra.mxu0 %v5758
        %5796 = vmatpush.msra.mxu0 %v5757
        %5797 = vmatpush.msra.mxu0 %v5756
        %5798 = vmatpush.msra.mxu0 %v5755
        %5799 = vmatpush.msra.mxu0 %v5754
        %5800 = vmatpush.msra.mxu0 %v5753
        %5801 = vmatpush.msra.mxu0 %v5752
        %5802 = vmatpush.msra.mxu0 %v5751
        %5803 = vmatpush.msra.mxu0 %v5750
        %5804 = vmatpush.msra.mxu0 %v5749
        %5805 = vmatpush.msra.mxu0 %v5748
        %5806 = vmatpush.msra.mxu0 %v5747
        %5807 = vmatmul.f32.gmra.mxu0 %v5768
        %v5808 = vpop.f32.mrf.mxu0
        %v5809 = vadd.f32 %v5764, %v5808
        %5810 = vmatmul.f32.gmra.mxu0 %v5771
        %v5811 = vpop.f32.mrf.mxu0
        %v5812 = vadd.f32 %v5764, %v5811
        %5813 = vmatmul.f32.gmra.mxu0 %v5774
        %v5814 = vpop.f32.mrf.mxu0
        %v5815 = vadd.f32 %v5764, %v5814
        %5816 = vmatmul.f32.gmra.mxu0 %v5777
        %v5817 = vpop.f32.mrf.mxu0
        %v5818 = vadd.f32 %v5764, %v5817
        %5819 = vmatmul.f32.gmra.mxu0 %v5780
        %v5820 = vpop.f32.mrf.mxu0
        %v5821 = vadd.f32 %v5764, %v5820
        %5822 = vmatmul.f32.gmra.mxu0 %v5783
        %v5823 = vpop.f32.mrf.mxu0
        %v5824 = vadd.f32 %v5764, %v5823
        %5825 = vmatmul.f32.gmra.mxu0 %v5786
        %v5826 = vpop.f32.mrf.mxu0
        %v5827 = vadd.f32 %v5764, %v5826
        %5828 = vmatmul.f32.gmra.mxu0 %v5789
        %v5829 = vpop.f32.mrf.mxu0
        %v5830 = vadd.f32 %v5764, %v5829
        %5831 = vdwg.mxu0
        %v5832 = vmax.f32 %v5809, 0.0
        %v5833 = vmax.f32 %v5812, 0.0
        %v5834 = vmax.f32 %v5815, 0.0
        %v5835 = vmax.f32 %v5818, 0.0
        %v5836 = vmax.f32 %v5821, 0.0
        %v5837 = vmax.f32 %v5824, 0.0
        %v5838 = vmax.f32 %v5827, 0.0
        %v5839 = vmax.f32 %v5830, 0.0
        %v5840 = vld [vmem:[%s11] sm:$0xff]
        %v5841 = vld [vmem:[%s11 + $0x8] sm:$0xff]
        %v5842 = vld [vmem:[%s11 + $0x10] sm:$0xff]
        %v5843 = vld [vmem:[%s11 + $0x18] sm:$0xff]
        %v5844 = vld [vmem:[%s11 + $0x20] sm:$0xff]
        %v5845 = vld [vmem:[%s11 + $0x28] sm:$0xff]
        %v5846 = vld [vmem:[%s11 + $0x30] sm:$0xff]
        %v5847 = vld [vmem:[%s11 + $0x38] sm:$0xff]
        %v5848 = vld [vmem:[%s11 + $0x40] sm:$0xff]
        %v5849 = vld [vmem:[%s11 + $0x48] sm:$0xff]
        %v5850 = vld [vmem:[%s11 + $0x50] sm:$0xf]
        %v5851 = vld [vmem:[%s12] sm:$0x1]
        %v5853 = vperm.slane %v5851, 0
        %vm5855 = vcmask 687104
        %v5857 = vsel %vm5855, %v5832, 0
        %v5860 = vsel %vm5855, %v5833, 0
        %v5863 = vsel %vm5855, %v5834, 0
        %v5866 = vsel %vm5855, %v5835, 0
        %v5869 = vsel %vm5855, %v5836, 0
        %v5872 = vsel %vm5855, %v5837, 0
        %v5875 = vsel %vm5855, %v5838, 0
        %v5878 = vsel %vm5855, %v5839, 0
        %v5881 = vsel %vm3984, %v5850, 0
        %5883 = vmatpush.msra.mxu0 0.0
        %5884 = vmatpush.msra.mxu0 0.0
        %5885 = vmatpush.msra.mxu0 0.0
        %5886 = vmatpush.msra.mxu0 0.0
        %5887 = vmatpush.msra.mxu0 0.0
        %5888 = vmatpush.msra.mxu0 %v5881
        %5889 = vmatpush.msra.mxu0 %v5849
        %5890 = vmatpush.msra.mxu0 %v5848
        %5891 = vmatpush.msra.mxu0 %v5847
        %5892 = vmatpush.msra.mxu0 %v5846
        %5893 = vmatpush.msra.mxu0 %v5845
        %5894 = vmatpush.msra.mxu0 %v5844
        %5895 = vmatpush.msra.mxu0 %v5843
        %5896 = vmatpush.msra.mxu0 %v5842
        %5897 = vmatpush.msra.mxu0 %v5841
        %5898 = vmatpush.msra.mxu0 %v5840
        %5899 = vmatmul.f32.gmra.mxu0 %v5857
        %v5900 = vpop.f32.mrf.mxu0
        %v5901 = vadd.f32 %v5853, %v5900
        %5902 = vmatmul.f32.gmra.mxu0 %v5860
        %v5903 = vpop.f32.mrf.mxu0
        %v5904 = vadd.f32 %v5853, %v5903
        %5905 = vmatmul.f32.gmra.mxu0 %v5863
        %v5906 = vpop.f32.mrf.mxu0
        %v5907 = vadd.f32 %v5853, %v5906
        %5908 = vmatmul.f32.gmra.mxu0 %v5866
        %v5909 = vpop.f32.mrf.mxu0
        %v5910 = vadd.f32 %v5853, %v5909
        %5911 = vmatmul.f32.gmra.mxu0 %v5869
        %v5912 = vpop.f32.mrf.mxu0
        %v5913 = vadd.f32 %v5853, %v5912
        %5914 = vmatmul.f32.gmra.mxu0 %v5872
        %v5915 = vpop.f32.mrf.mxu0
        %v5916 = vadd.f32 %v5853, %v5915
        %5917 = vmatmul.f32.gmra.mxu0 %v5875
        %v5918 = vpop.f32.mrf.mxu0
        %v5919 = vadd.f32 %v5853, %v5918
        %5920 = vmatmul.f32.gmra.mxu0 %v5878
        %v5921 = vpop.f32.mrf.mxu0
        %v5922 = vadd.f32 %v5853, %v5921
        %5923 = vdwg.mxu0
        %v5924 = vld [vmem:[%s13] sm:$0xff]
        %vm5925 = vcmask 523264
        %v5927 = vsel %vm5925, %v5924, 0
        %5929 = vmatpush.msra.mxu0 0.0
        %5930 = vmatpush.msra.mxu0 0.0
        %5931 = vmatpush.msra.mxu0 0.0
        %5932 = vmatpush.msra.mxu0 0.0
        %5933 = vmatpush.msra.mxu0 0.0
        %5934 = vmatpush.msra.mxu0 0.0
        %5935 = vmatpush.msra.mxu0 0.0
        %5936 = vmatpush.msra.mxu0 0.0
        %5937 = vmatpush.msra.mxu0 %v5922
        %5938 = vmatpush.msra.mxu0 %v5919
        %5939 = vmatpush.msra.mxu0 %v5916
        %5940 = vmatpush.msra.mxu0 %v5913
        %5941 = vmatpush.msra.mxu0 %v5910
        %5942 = vmatpush.msra.mxu0 %v5907
        %5943 = vmatpush.msra.mxu0 %v5904
        %5944 = vmatpush.msra.mxu0 %v5901
        %5945 = vmatmul.f32.gmra.mxu0 %v5927
        %v5946 = vpop.f32.mrf.mxu0
        %v5947 = vadd.f32 0.0, %v5946
        %5948 = vdwg.mxu0
        %vm5949 = vcmask 80896
        %5950 = vst.msk [vmem:[%s463] sm:$0xff] %vm5949, %v5947
        %s5951 = sand.u32 %s335, 1
        %s5952 = scalar_lea.sflag [#allocation3], %s5951
        %s5953 = sand.u32 %s335, 1
        %s5954 = smul.addr %s5953, 8
        %s5955 = scalar_lea.vmem [#allocation2], %s5954
        // Predicated region
        $region77: #{_lambda_.1} parent=75 // pred_check
          %p5956 = pneg %p345
        $region78: #{_lambda_.1} parent=75 // pred_check_branch
          %5958 = sbr.rel (%p5956) target = $region80
        $region79: #{_lambda_.1} parent=75 // pred_region
          %5960 = vsyncadd %s5952, 0
          %s5961 = smul.addr %s28, 8
          %s5962 = scalar_lea.hbm %s14, %s5961
          %s5964 = sshll.u32 %s5955, 4
          %s5965 = int_to_ptr.vmem [resolvable:$true] %s5964
          %s5966 = sshll.u32 %s5962, 4
          %s5967 = int_to_ptr.hbm [resolvable:$true] %s5966
          %5969 = dma.vmem_to_hbm [thread:$0]  %s5965, 128, %s5967, %s5952
        $region80: #{_lambda_.1} parent=75 // pred_fallthru
          _
      $region76: #{_lambda_.1} parent=5 // pred_fallthru
        _
      %p5970 = scmp.le.s32.totalorder 2, %s23
      // Predicated region
      $region81: #{_lambda_.1} parent=5 // pred_check
        %p5971 = pneg %p5970
      $region82: #{_lambda_.1} parent=5 // pred_check_branch
        %5973 = sbr.rel (%p5971) target = $region84
      $region83: #{_lambda_.1} parent=5 // pred_region
        %s5974 = ssub.s32 %s23, 2
        // Predicated region
        $region85: #{_lambda_.1} parent=83 // pred_check
          %p5975 = pneg %p351
        $region86: #{_lambda_.1} parent=83 // pred_check_branch
          %5977 = sbr.rel (%p5975) target = $region88
        $region87: #{_lambda_.1} parent=83 // pred_region
          %s5978 = sand.u32 %s336, 1
          %s5979 = scalar_lea.sflag [#allocation3], %s5978
          %s5980 = sand.u32 %s336, 1
          %s5981 = smul.addr %s5980, 8
          %s5982 = scalar_lea.vmem [#allocation2], %s5981
          %5984 = dma.done %s5979, 128
        $region88: #{_lambda_.1} parent=83 // pred_fallthru
          _
      $region84: #{_lambda_.1} parent=5 // pred_fallthru
        _
    $region6: #{_lambda_.1} parent=1 // loop_footer
      %s27 = sadd.s32 1, %s23
    $region7: #{_lambda_.1} parent=1 // loop_footer_branch
      %22 = sbr.rel target = $region3
    $region8: #{_lambda_.1} parent=1 // loop_exit
      _
    %5985 = vsyncpa [#allocation3], 1
    %s5986 = scalar_lea.sflag [#allocation3], 1
    %5987 = vsyncpa %s5986, 1

</llo_original>
